<compile_context>
chip_gen: v7x
topology: tpu7x:2x2x1
jax: 0.10.0
libtpu: 0.0.40
codegen_flags: <defaults>
</compile_context>

<pallas_src>
import functools

import jax
import jax.numpy as jnp
from jax.experimental import pallas as pl
from jax.experimental.pallas import tpu as pltpu


def _round_up(x, m):
    return ((x + m - 1) // m) * m


# ----------------------------------------------------------------------------
# Pallas kernel: tiled (M,K) @ (K,N) + bias [+ tanh / relu]
# ----------------------------------------------------------------------------
def _matmul_bias_kernel(x_ref, w_ref, b_ref, o_ref, acc_ref, *, activation):
    k = pl.program_id(2)

    @pl.when(k == 0)
    def _():
        acc_ref[...] = jnp.zeros_like(acc_ref)

    acc_ref[...] += jnp.dot(x_ref[...], w_ref[...],
                            preferred_element_type=jnp.float32)

    @pl.when(k == pl.num_programs(2) - 1)
    def _():
        out = acc_ref[...] + b_ref[...]
        if activation == "tanh":
            out = jnp.tanh(out)          # f32 on the EUP (v5e-safe)
        elif activation == "relu":
            out = jnp.maximum(out, 0.0)
        o_ref[...] = out.astype(o_ref.dtype)


def pallas_matmul_bias(x, w, b, activation=None):
    """x: (M,K), w: (K,N), b: (N,) -> (M,N) f32.

    bf16 operands on the MXU, f32 accumulation in a VMEM scratch tile.
    M is padded to a sublane multiple, K/N to lane multiples of 128 so every
    tile satisfies the (8,128) rule and the output store is lane-dense.
    """
    M, K = x.shape
    K2, N = w.shape
    assert K == K2

    tm = 128 if M >= 128 else _round_up(M, 8)
    tn = 128
    tk = 128
    Mp, Kp, Np = _round_up(M, tm), _round_up(K, tk), _round_up(N, tn)

    x_p = jnp.pad(x.astype(jnp.bfloat16), ((0, Mp - M), (0, Kp - K)))
    w_p = jnp.pad(w.astype(jnp.bfloat16), ((0, Kp - K), (0, Np - N)))
    b_p = jnp.pad(b.astype(jnp.float32), (0, Np - N)).reshape(1, Np)

    grid = (Mp // tm, Np // tn, Kp // tk)
    kernel = functools.partial(_matmul_bias_kernel, activation=activation)
    out = pl.pallas_call(
        kernel,
        out_shape=jax.ShapeDtypeStruct((Mp, Np), jnp.float32),
        grid=grid,
        in_specs=[
            pl.BlockSpec((tm, tk), lambda i, j, k: (i, k)),
            pl.BlockSpec((tk, tn), lambda i, j, k: (k, j)),
            pl.BlockSpec((1, tn), lambda i, j, k: (0, j)),
        ],
        out_specs=pl.BlockSpec((tm, tn), lambda i, j, k: (i, j)),
        scratch_shapes=[pltpu.VMEM((tm, tn), jnp.float32)],
        compiler_params=pltpu.CompilerParams(
            dimension_semantics=("parallel", "parallel", "arbitrary"),
            vmem_limit_bytes=32 * 1024 * 1024,  # safe on v5e/v6e/v7x
        ),
    )(x_p, w_p, b_p)
    return out[:M, :N]


# ----------------------------------------------------------------------------
# Glue ops (plain JAX)
# ----------------------------------------------------------------------------
def reflect_pad(x, p):  # x: NHWC
    return jnp.pad(x, ((0, 0), (p, p), (p, p), (0, 0)), mode="reflect")


def zero_pad(x, p):  # x: NHWC
    return jnp.pad(x, ((0, 0), (p, p), (p, p), (0, 0)))


def conv2d(x, w, b, stride=1, activation=None):
    """x: NHWC (already padded); w: (Cout, Cin, kh, kw) PyTorch layout; b: (Cout,)."""
    N, H, W, C = x.shape
    Cout, Cin, kh, kw = w.shape
    assert Cin == C
    Ho = (H - kh) // stride + 1
    Wo = (W - kw) // stride + 1
    # im2col in bf16 (halves HBM traffic for the duplicated patches).
    # TODO(synk): read the shifted conv windows directly from the padded NHWC
    # tensor inside the kernel (element-offset index_map / manual DMA) instead
    # of materializing kh*kw shifted copies in HBM.
    xb = x.astype(jnp.bfloat16)
    patches = []
    for i in range(kh):
        for j in range(kw):
            patches.append(
                xb[:, i:i + stride * (Ho - 1) + 1:stride,
                   j:j + stride * (Wo - 1) + 1:stride, :])
    cols = jnp.stack(patches, axis=3)                      # (N,Ho,Wo,kh*kw,C)
    cols = cols.reshape(N * Ho * Wo, kh * kw * C)
    w_mat = jnp.transpose(w, (2, 3, 1, 0)).reshape(kh * kw * Cin, Cout)
    out = pallas_matmul_bias(cols, w_mat, b, activation=activation)
    return out.reshape(N, Ho, Wo, Cout)


def batchnorm(x, gamma, beta, eps=1e-5):
    """Training-mode BatchNorm2d (batch statistics, biased variance)."""
    # TODO(synk): emit per-channel sum / sum-of-squares as side outputs of the
    # matmul kernel and fuse the normalize + ReLU (+ residual) epilogue to cut
    # the extra full-tensor HBM passes.
    mean = jnp.mean(x, axis=(0, 1, 2))
    var = jnp.var(x, axis=(0, 1, 2))
    return (x - mean) * jax.lax.rsqrt(var + eps) * gamma + beta


def relu(x):
    return jnp.maximum(x, 0.0)


def upsample2(x):  # nearest-neighbor, scale_factor=2
    return jnp.repeat(jnp.repeat(x, 2, axis=1), 2, axis=2)


# ----------------------------------------------------------------------------
# Parameter construction (deterministic, in-script; shapes follow __init__).
# norm_layer=BatchNorm2d  =>  use_bias=False for all convs except the last.
# ----------------------------------------------------------------------------
def init_params(key, input_nc=3, output_nc=3, ngf=8, n_blocks=2):
    ks = list(jax.random.split(key, 64))
    ki = iter(ks)

    def conv_w(cout, cin, k):
        return jax.random.normal(next(ki), (cout, cin, k, k), jnp.float32) * 0.05

    p = {}
    # initial 7x7 conv
    p["c0_w"] = conv_w(ngf, input_nc, 7)
    p["c0_b"] = jnp.zeros((ngf,), jnp.float32)  # use_bias=False
    p["bn0_g"], p["bn0_b"] = jnp.ones((ngf,)), jnp.zeros((ngf,))
    # downsampling
    for i in range(2):
        mult = 2 ** i
        cin, cout = ngf * mult, ngf * mult * 2
        p[f"d{i}_w"] = conv_w(cout, cin, 3)
        p[f"d{i}_b"] = jnp.zeros((cout,), jnp.float32)
        p[f"dbn{i}_g"], p[f"dbn{i}_b"] = jnp.ones((cout,)), jnp.zeros((cout,))
    # resnet blocks
    dim = ngf * 4
    for i in range(n_blocks):
        for j in range(2):
            p[f"r{i}_{j}_w"] = conv_w(dim, dim, 3)
            p[f"r{i}_{j}_b"] = jnp.zeros((dim,), jnp.float32)
            p[f"rbn{i}_{j}_g"] = jnp.ones((dim,))
            p[f"rbn{i}_{j}_b"] = jnp.zeros((dim,))
    # upsampling
    for i in range(2):
        mult = 2 ** (2 - i)
        cin, cout = ngf * mult, ngf * mult // 2
        p[f"u{i}_w"] = conv_w(cout, cin, 3)
        p[f"u{i}_b"] = jnp.zeros((cout,), jnp.float32)
        p[f"ubn{i}_g"], p[f"ubn{i}_b"] = jnp.ones((cout,)), jnp.zeros((cout,))
    # final 7x7 conv (has bias=True by default) + tanh
    p["cf_w"] = conv_w(output_nc, ngf, 7)
    p["cf_b"] = jax.random.normal(next(ki), (output_nc,), jnp.float32) * 0.05
    return p


# ----------------------------------------------------------------------------
# Forward pass (mirrors ResnetGenerator.forward, padding_type='reflect',
# use_dropout=False, n_downsampling=2).
# ----------------------------------------------------------------------------
def resnet_generator_forward(x_nchw, params, n_blocks=2):
    x = jnp.transpose(x_nchw, (0, 2, 3, 1)).astype(jnp.float32)  # -> NHWC

    # ReflectionPad2d(3) -> Conv7x7 -> BN -> ReLU
    x = conv2d(reflect_pad(x, 3), params["c0_w"], params["c0_b"], stride=1)
    x = relu(batchnorm(x, params["bn0_g"], params["bn0_b"]))

    # two stride-2 downsampling convs (zero pad 1)
    for i in range(2):
        x = conv2d(zero_pad(x, 1), params[f"d{i}_w"], params[f"d{i}_b"], stride=2)
        x = relu(batchnorm(x, params[f"dbn{i}_g"], params[f"dbn{i}_b"]))

    # resnet blocks (reflect pad 1, conv3x3, BN, ReLU, reflect pad 1, conv3x3, BN; skip)
    for i in range(n_blocks):
        y = conv2d(reflect_pad(x, 1), params[f"r{i}_0_w"], params[f"r{i}_0_b"])
        y = relu(batchnorm(y, params[f"rbn{i}_0_g"], params[f"rbn{i}_0_b"]))
        y = conv2d(reflect_pad(y, 1), params[f"r{i}_1_w"], params[f"r{i}_1_b"])
        y = batchnorm(y, params[f"rbn{i}_1_g"], params[f"rbn{i}_1_b"])
        x = x + y

    # two Upsample_Layer (nearest 2x + conv3x3 zero pad 1) -> BN -> ReLU
    # TODO(synk): fold the nearest-neighbor upsample + zero pad into the conv's
    # gather instead of materializing the 4x-larger intermediate.
    for i in range(2):
        x = conv2d(zero_pad(upsample2(x), 1), params[f"u{i}_w"], params[f"u{i}_b"])
        x = relu(batchnorm(x, params[f"ubn{i}_g"], params[f"ubn{i}_b"]))

    # ReflectionPad2d(3) -> Conv7x7 (bias) -> Tanh  (tanh fused in the kernel)
    x = conv2d(reflect_pad(x, 3), params["cf_w"], params["cf_b"], activation="tanh")

    return jnp.transpose(x, (0, 3, 1, 2))  # -> NCHW


if __name__ == "__main__":
    key = jax.random.PRNGKey(0)
    k_x, k_p = jax.random.split(key)

    # small config consistent with the module: input_nc=3, output_nc=3,
    # ngf=8, n_blocks=2, batch=2, spatial=16
    x = jax.random.normal(k_x, (2, 3, 16, 16), jnp.float32)
    params = init_params(k_p, input_nc=3, output_nc=3, ngf=8, n_blocks=2)

    fwd = jax.jit(functools.partial(resnet_generator_forward, n_blocks=2))
    out = fwd(x, params)
    jax.block_until_ready(out)

    assert out.shape == (2, 3, 16, 16), out.shape
    assert bool(jnp.all(jnp.isfinite(out)))
    assert bool(jnp.all(jnp.abs(out) <= 1.0))  # tanh output range
    print("KERNEL_OK")
</pallas_src>

<mosaic_0001>
module attributes {stable_mosaic.version = 11 : i64} {
  func.func @_matmul_bias_kernel(%arg0: i32, %arg1: i32, %arg2: i32, %arg3: memref<128x128xbf16, #tpu.memory_space<vmem>>, %arg4: memref<128x128xbf16, #tpu.memory_space<vmem>>, %arg5: memref<1x128xf32, #tpu.memory_space<vmem>>, %arg6: memref<128x128xf32, #tpu.memory_space<vmem>>, %arg7: memref<128x128xf32, #tpu.memory_space<vmem>>) attributes {dimension_semantics = [#tpu.dimension_semantics<parallel>, #tpu.dimension_semantics<parallel>, #tpu.dimension_semantics<arbitrary>], iteration_bounds = array<i64: 4, 1, 2>, scalar_prefetch = 0 : i64, scratch_operands = 1 : i64, tpu.core_type = #tpu.core_type<tc>, window_params = [{transform_indices = @transform_0, window_bounds = array<i64: 128, 128>}, {transform_indices = @transform_1, window_bounds = array<i64: 128, 128>}, {transform_indices = @transform_2, window_bounds = array<i64: 1, 128>}, {transform_indices = @transform_3, window_bounds = array<i64: 128, 128>}]} {
    %c0_i32 = arith.constant 0 : i32
    %0 = arith.cmpi eq, %arg2, %c0_i32 : i32
    %1 = arith.extui %0 : i1 to i32
    %c0_i32_0 = arith.constant 0 : i32
    %2 = arith.cmpi ne, %1, %c0_i32_0 : i32
    scf.if %2 {
      %cst_9 = arith.constant 0.000000e+00 : f32
      %12 = vector.broadcast %cst_9 : f32 to vector<128x128xf32>
      %c0_10 = arith.constant 0 : index
      %c0_11 = arith.constant 0 : index
      %13 = vector.load %arg7[%c0_10, %c0_11] : memref<128x128xf32, #tpu.memory_space<vmem>>, vector<128x128xf32>
      tpu.vector_store %arg7[%c0_10, %c0_11], %12 {strides = array<i32>} : memref<128x128xf32, #tpu.memory_space<vmem>>, vector<128x128xf32>,
    } else {
    }
    %c0 = arith.constant 0 : index
    %c0_1 = arith.constant 0 : index
    %3 = vector.load %arg7[%c0, %c0_1] : memref<128x128xf32, #tpu.memory_space<vmem>>, vector<128x128xf32>
    %c0_2 = arith.constant 0 : index
    %c0_3 = arith.constant 0 : index
    %4 = vector.load %arg3[%c0_2, %c0_3] : memref<128x128xbf16, #tpu.memory_space<vmem>>, vector<128x128xbf16>
    %c0_4 = arith.constant 0 : index
    %c0_5 = arith.constant 0 : index
    %5 = vector.load %arg4[%c0_4, %c0_5] : memref<128x128xbf16, #tpu.memory_space<vmem>>, vector<128x128xbf16>
    %cst = arith.constant dense<0.000000e+00> : vector<128x128xf32>
    %6 = tpu.matmul %4, %5, %cst {dimension_numbers = #tpu.dot_dimension_numbers<[1], [0], [0], [1], [0, 0, 1, 1], [], []>} : vector<128x128xbf16>, vector<128x128xbf16>, vector<128x128xf32> -> vector<128x128xf32>
    %7 = arith.addf %3, %6 : vector<128x128xf32>
    %c0_6 = arith.constant 0 : index
    %c0_7 = arith.constant 0 : index
    %8 = vector.load %arg7[%c0_6, %c0_7] : memref<128x128xf32, #tpu.memory_space<vmem>>, vector<128x128xf32>
    tpu.vector_store %arg7[%c0_6, %c0_7], %7 {strides = array<i32>} : memref<128x128xf32, #tpu.memory_space<vmem>>, vector<128x128xf32>,
    %c1_i32 = arith.constant 1 : i32
    %9 = arith.cmpi eq, %arg2, %c1_i32 : i32
    %10 = arith.extui %9 : i1 to i32
    %c0_i32_8 = arith.constant 0 : i32
    %11 = arith.cmpi ne, %10, %c0_i32_8 : i32
    scf.if %11 {
      %c0_9 = arith.constant 0 : index
      %c0_10 = arith.constant 0 : index
      %12 = vector.load %arg7[%c0_9, %c0_10] : memref<128x128xf32, #tpu.memory_space<vmem>>, vector<128x128xf32>
      %c0_11 = arith.constant 0 : index
      %c0_12 = arith.constant 0 : index
      %13 = vector.load %arg5[%c0_11, %c0_12] : memref<1x128xf32, #tpu.memory_space<vmem>>, vector<1x128xf32>
      %14 = vector.broadcast %13 : vector<1x128xf32> to vector<128x128xf32>
      %15 = arith.addf %12, %14 : vector<128x128xf32>
      %c0_13 = arith.constant 0 : index
      %c0_14 = arith.constant 0 : index
      %16 = vector.load %arg6[%c0_13, %c0_14] : memref<128x128xf32, #tpu.memory_space<vmem>>, vector<128x128xf32>
      tpu.vector_store %arg6[%c0_13, %c0_14], %15 {strides = array<i32>} : memref<128x128xf32, #tpu.memory_space<vmem>>, vector<128x128xf32>,
    } else {
    }
    return
  }
  func.func @transform_0(%arg0: i32, %arg1: i32, %arg2: i32) -> (i32, i32) {
    %c0_i32 = arith.constant 0 : i32
    return %arg0, %arg2 : i32, i32
  }
  func.func @transform_1(%arg0: i32, %arg1: i32, %arg2: i32) -> (i32, i32) {
    %c0_i32 = arith.constant 0 : i32
    return %arg2, %arg1 : i32, i32
  }
  func.func @transform_2(%arg0: i32, %arg1: i32, %arg2: i32) -> (i32, i32) {
    %c0_i32 = arith.constant 0 : i32
    %c0_i32_0 = arith.constant 0 : i32
    return %c0_i32, %arg1 : i32, i32
  }
  func.func @transform_3(%arg0: i32, %arg1: i32, %arg2: i32) -> (i32, i32) {
    %c0_i32 = arith.constant 0 : i32
    return %arg0, %arg1 : i32, i32
  }
}

module attributes {stable_mosaic.version = 11 : i64} {
  func.func @_matmul_bias_kernel(%arg0: i32, %arg1: i32, %arg2: i32, %arg3: memref<128x128xbf16, #tpu.memory_space<vmem>>, %arg4: memref<128x128xbf16, #tpu.memory_space<vmem>>, %arg5: memref<1x128xf32, #tpu.memory_space<vmem>>, %arg6: memref<128x128xf32, #tpu.memory_space<vmem>>, %arg7: memref<128x128xf32, #tpu.memory_space<vmem>>) attributes {dimension_semantics = [#tpu.dimension_semantics<parallel>, #tpu.dimension_semantics<parallel>, #tpu.dimension_semantics<arbitrary>], iteration_bounds = array<i64: 1, 1, 1>, scalar_prefetch = 0 : i64, scratch_operands = 1 : i64, tpu.core_type = #tpu.core_type<tc>, window_params = [{transform_indices = @transform_0, window_bounds = array<i64: 128, 128>}, {transform_indices = @transform_1, window_bounds = array<i64: 128, 128>}, {transform_indices = @transform_2, window_bounds = array<i64: 1, 128>}, {transform_indices = @transform_3, window_bounds = array<i64: 128, 128>}]} {
    %c0_i32 = arith.constant 0 : i32
    %0 = arith.cmpi eq, %arg2, %c0_i32 : i32
    %1 = arith.extui %0 : i1 to i32
    %c0_i32_0 = arith.constant 0 : i32
    %2 = arith.cmpi ne, %1, %c0_i32_0 : i32
    scf.if %2 {
      %cst_10 = arith.constant 0.000000e+00 : f32
      %12 = vector.broadcast %cst_10 : f32 to vector<128x128xf32>
      %c0_11 = arith.constant 0 : index
      %c0_12 = arith.constant 0 : index
      %13 = vector.load %arg7[%c0_11, %c0_12] : memref<128x128xf32, #tpu.memory_space<vmem>>, vector<128x128xf32>
      tpu.vector_store %arg7[%c0_11, %c0_12], %12 {strides = array<i32>} : memref<128x128xf32, #tpu.memory_space<vmem>>, vector<128x128xf32>,
    } else {
    }
    %c0 = arith.constant 0 : index
    %c0_1 = arith.constant 0 : index
    %3 = vector.load %arg7[%c0, %c0_1] : memref<128x128xf32, #tpu.memory_space<vmem>>, vector<128x128xf32>
    %c0_2 = arith.constant 0 : index
    %c0_3 = arith.constant 0 : index
    %4 = vector.load %arg3[%c0_2, %c0_3] : memref<128x128xbf16, #tpu.memory_space<vmem>>, vector<128x128xbf16>
    %c0_4 = arith.constant 0 : index
    %c0_5 = arith.constant 0 : index
    %5 = vector.load %arg4[%c0_4, %c0_5] : memref<128x128xbf16, #tpu.memory_space<vmem>>, vector<128x128xbf16>
    %cst = arith.constant dense<0.000000e+00> : vector<128x128xf32>
    %6 = tpu.matmul %4, %5, %cst {dimension_numbers = #tpu.dot_dimension_numbers<[1], [0], [0], [1], [0, 0, 1, 1], [], []>} : vector<128x128xbf16>, vector<128x128xbf16>, vector<128x128xf32> -> vector<128x128xf32>
    %7 = arith.addf %3, %6 : vector<128x128xf32>
    %c0_6 = arith.constant 0 : index
    %c0_7 = arith.constant 0 : index
    %8 = vector.load %arg7[%c0_6, %c0_7] : memref<128x128xf32, #tpu.memory_space<vmem>>, vector<128x128xf32>
    tpu.vector_store %arg7[%c0_6, %c0_7], %7 {strides = array<i32>} : memref<128x128xf32, #tpu.memory_space<vmem>>, vector<128x128xf32>,
    %c0_i32_8 = arith.constant 0 : i32
    %9 = arith.cmpi eq, %arg2, %c0_i32_8 : i32
    %10 = arith.extui %9 : i1 to i32
    %c0_i32_9 = arith.constant 0 : i32
    %11 = arith.cmpi ne, %10, %c0_i32_9 : i32
    scf.if %11 {
      %c0_10 = arith.constant 0 : index
      %c0_11 = arith.constant 0 : index
      %12 = vector.load %arg7[%c0_10, %c0_11] : memref<128x128xf32, #tpu.memory_space<vmem>>, vector<128x128xf32>
      %c0_12 = arith.constant 0 : index
      %c0_13 = arith.constant 0 : index
      %13 = vector.load %arg5[%c0_12, %c0_13] : memref<1x128xf32, #tpu.memory_space<vmem>>, vector<1x128xf32>
      %14 = vector.broadcast %13 : vector<1x128xf32> to vector<128x128xf32>
      %15 = arith.addf %12, %14 : vector<128x128xf32>
      %c0_14 = arith.constant 0 : index
      %c0_15 = arith.constant 0 : index
      %16 = vector.load %arg6[%c0_14, %c0_15] : memref<128x128xf32, #tpu.memory_space<vmem>>, vector<128x128xf32>
      tpu.vector_store %arg6[%c0_14, %c0_15], %15 {strides = array<i32>} : memref<128x128xf32, #tpu.memory_space<vmem>>, vector<128x128xf32>,
    } else {
    }
    return
  }
  func.func @transform_0(%arg0: i32, %arg1: i32, %arg2: i32) -> (i32, i32) {
    %c0_i32 = arith.constant 0 : i32
    return %arg0, %arg2 : i32, i32
  }
  func.func @transform_1(%arg0: i32, %arg1: i32, %arg2: i32) -> (i32, i32) {
    %c0_i32 = arith.constant 0 : i32
    return %arg2, %arg1 : i32, i32
  }
  func.func @transform_2(%arg0: i32, %arg1: i32, %arg2: i32) -> (i32, i32) {
    %c0_i32 = arith.constant 0 : i32
    %c0_i32_0 = arith.constant 0 : i32
    return %c0_i32, %arg1 : i32, i32
  }
  func.func @transform_3(%arg0: i32, %arg1: i32, %arg2: i32) -> (i32, i32) {
    %c0_i32 = arith.constant 0 : i32
    return %arg0, %arg1 : i32, i32
  }
}

module attributes {stable_mosaic.version = 11 : i64} {
  func.func @_matmul_bias_kernel(%arg0: i32, %arg1: i32, %arg2: i32, %arg3: memref<32x128xbf16, #tpu.memory_space<vmem>>, %arg4: memref<128x128xbf16, #tpu.memory_space<vmem>>, %arg5: memref<1x128xf32, #tpu.memory_space<vmem>>, %arg6: memref<32x128xf32, #tpu.memory_space<vmem>>, %arg7: memref<32x128xf32, #tpu.memory_space<vmem>>) attributes {dimension_semantics = [#tpu.dimension_semantics<parallel>, #tpu.dimension_semantics<parallel>, #tpu.dimension_semantics<arbitrary>], iteration_bounds = array<i64: 1, 1, 2>, scalar_prefetch = 0 : i64, scratch_operands = 1 : i64, tpu.core_type = #tpu.core_type<tc>, window_params = [{transform_indices = @transform_0, window_bounds = array<i64: 32, 128>}, {transform_indices = @transform_1, window_bounds = array<i64: 128, 128>}, {transform_indices = @transform_2, window_bounds = array<i64: 1, 128>}, {transform_indices = @transform_3, window_bounds = array<i64: 32, 128>}]} {
    %c0_i32 = arith.constant 0 : i32
    %0 = arith.cmpi eq, %arg2, %c0_i32 : i32
    %1 = arith.extui %0 : i1 to i32
    %c0_i32_0 = arith.constant 0 : i32
    %2 = arith.cmpi ne, %1, %c0_i32_0 : i32
    scf.if %2 {
      %cst_9 = arith.constant 0.000000e+00 : f32
      %12 = vector.broadcast %cst_9 : f32 to vector<32x128xf32>
      %c0_10 = arith.constant 0 : index
      %c0_11 = arith.constant 0 : index
      %13 = vector.load %arg7[%c0_10, %c0_11] : memref<32x128xf32, #tpu.memory_space<vmem>>, vector<32x128xf32>
      tpu.vector_store %arg7[%c0_10, %c0_11], %12 {strides = array<i32>} : memref<32x128xf32, #tpu.memory_space<vmem>>, vector<32x128xf32>,
    } else {
    }
    %c0 = arith.constant 0 : index
    %c0_1 = arith.constant 0 : index
    %3 = vector.load %arg7[%c0, %c0_1] : memref<32x128xf32, #tpu.memory_space<vmem>>, vector<32x128xf32>
    %c0_2 = arith.constant 0 : index
    %c0_3 = arith.constant 0 : index
    %4 = vector.load %arg3[%c0_2, %c0_3] : memref<32x128xbf16, #tpu.memory_space<vmem>>, vector<32x128xbf16>
    %c0_4 = arith.constant 0 : index
    %c0_5 = arith.constant 0 : index
    %5 = vector.load %arg4[%c0_4, %c0_5] : memref<128x128xbf16, #tpu.memory_space<vmem>>, vector<128x128xbf16>
    %cst = arith.constant dense<0.000000e+00> : vector<32x128xf32>
    %6 = tpu.matmul %4, %5, %cst {dimension_numbers = #tpu.dot_dimension_numbers<[1], [0], [0], [1], [0, 0, 1, 1], [], []>} : vector<32x128xbf16>, vector<128x128xbf16>, vector<32x128xf32> -> vector<32x128xf32>
    %7 = arith.addf %3, %6 : vector<32x128xf32>
    %c0_6 = arith.constant 0 : index
    %c0_7 = arith.constant 0 : index
    %8 = vector.load %arg7[%c0_6, %c0_7] : memref<32x128xf32, #tpu.memory_space<vmem>>, vector<32x128xf32>
    tpu.vector_store %arg7[%c0_6, %c0_7], %7 {strides = array<i32>} : memref<32x128xf32, #tpu.memory_space<vmem>>, vector<32x128xf32>,
    %c1_i32 = arith.constant 1 : i32
    %9 = arith.cmpi eq, %arg2, %c1_i32 : i32
    %10 = arith.extui %9 : i1 to i32
    %c0_i32_8 = arith.constant 0 : i32
    %11 = arith.cmpi ne, %10, %c0_i32_8 : i32
    scf.if %11 {
      %c0_9 = arith.constant 0 : index
      %c0_10 = arith.constant 0 : index
      %12 = vector.load %arg7[%c0_9, %c0_10] : memref<32x128xf32, #tpu.memory_space<vmem>>, vector<32x128xf32>
      %c0_11 = arith.constant 0 : index
      %c0_12 = arith.constant 0 : index
      %13 = vector.load %arg5[%c0_11, %c0_12] : memref<1x128xf32, #tpu.memory_space<vmem>>, vector<1x128xf32>
      %14 = vector.broadcast %13 : vector<1x128xf32> to vector<32x128xf32>
      %15 = arith.addf %12, %14 : vector<32x128xf32>
      %c0_13 = arith.constant 0 : index
      %c0_14 = arith.constant 0 : index
      %16 = vector.load %arg6[%c0_13, %c0_14] : memref<32x128xf32, #tpu.memory_space<vmem>>, vector<32x128xf32>
      tpu.vector_store %arg6[%c0_13, %c0_14], %15 {strides = array<i32>} : memref<32x128xf32, #tpu.memory_space<vmem>>, vector<32x128xf32>,
    } else {
    }
    return
  }
  func.func @transform_0(%arg0: i32, %arg1: i32, %arg2: i32) -> (i32, i32) {
    %c0_i32 = arith.constant 0 : i32
    return %arg0, %arg2 : i32, i32
  }
  func.func @transform_1(%arg0: i32, %arg1: i32, %arg2: i32) -> (i32, i32) {
    %c0_i32 = arith.constant 0 : i32
    return %arg2, %arg1 : i32, i32
  }
  func.func @transform_2(%arg0: i32, %arg1: i32, %arg2: i32) -> (i32, i32) {
    %c0_i32 = arith.constant 0 : i32
    %c0_i32_0 = arith.constant 0 : i32
    return %c0_i32, %arg1 : i32, i32
  }
  func.func @transform_3(%arg0: i32, %arg1: i32, %arg2: i32) -> (i32, i32) {
    %c0_i32 = arith.constant 0 : i32
    return %arg0, %arg1 : i32, i32
  }
}

module attributes {stable_mosaic.version = 11 : i64} {
  func.func @_matmul_bias_kernel(%arg0: i32, %arg1: i32, %arg2: i32, %arg3: memref<32x128xbf16, #tpu.memory_space<vmem>>, %arg4: memref<128x128xbf16, #tpu.memory_space<vmem>>, %arg5: memref<1x128xf32, #tpu.memory_space<vmem>>, %arg6: memref<32x128xf32, #tpu.memory_space<vmem>>, %arg7: memref<32x128xf32, #tpu.memory_space<vmem>>) attributes {dimension_semantics = [#tpu.dimension_semantics<parallel>, #tpu.dimension_semantics<parallel>, #tpu.dimension_semantics<arbitrary>], iteration_bounds = array<i64: 1, 1, 3>, scalar_prefetch = 0 : i64, scratch_operands = 1 : i64, tpu.core_type = #tpu.core_type<tc>, window_params = [{transform_indices = @transform_0, window_bounds = array<i64: 32, 128>}, {transform_indices = @transform_1, window_bounds = array<i64: 128, 128>}, {transform_indices = @transform_2, window_bounds = array<i64: 1, 128>}, {transform_indices = @transform_3, window_bounds = array<i64: 32, 128>}]} {
    %c0_i32 = arith.constant 0 : i32
    %0 = arith.cmpi eq, %arg2, %c0_i32 : i32
    %1 = arith.extui %0 : i1 to i32
    %c0_i32_0 = arith.constant 0 : i32
    %2 = arith.cmpi ne, %1, %c0_i32_0 : i32
    scf.if %2 {
      %cst_9 = arith.constant 0.000000e+00 : f32
      %12 = vector.broadcast %cst_9 : f32 to vector<32x128xf32>
      %c0_10 = arith.constant 0 : index
      %c0_11 = arith.constant 0 : index
      %13 = vector.load %arg7[%c0_10, %c0_11] : memref<32x128xf32, #tpu.memory_space<vmem>>, vector<32x128xf32>
      tpu.vector_store %arg7[%c0_10, %c0_11], %12 {strides = array<i32>} : memref<32x128xf32, #tpu.memory_space<vmem>>, vector<32x128xf32>,
    } else {
    }
    %c0 = arith.constant 0 : index
    %c0_1 = arith.constant 0 : index
    %3 = vector.load %arg7[%c0, %c0_1] : memref<32x128xf32, #tpu.memory_space<vmem>>, vector<32x128xf32>
    %c0_2 = arith.constant 0 : index
    %c0_3 = arith.constant 0 : index
    %4 = vector.load %arg3[%c0_2, %c0_3] : memref<32x128xbf16, #tpu.memory_space<vmem>>, vector<32x128xbf16>
    %c0_4 = arith.constant 0 : index
    %c0_5 = arith.constant 0 : index
    %5 = vector.load %arg4[%c0_4, %c0_5] : memref<128x128xbf16, #tpu.memory_space<vmem>>, vector<128x128xbf16>
    %cst = arith.constant dense<0.000000e+00> : vector<32x128xf32>
    %6 = tpu.matmul %4, %5, %cst {dimension_numbers = #tpu.dot_dimension_numbers<[1], [0], [0], [1], [0, 0, 1, 1], [], []>} : vector<32x128xbf16>, vector<128x128xbf16>, vector<32x128xf32> -> vector<32x128xf32>
    %7 = arith.addf %3, %6 : vector<32x128xf32>
    %c0_6 = arith.constant 0 : index
    %c0_7 = arith.constant 0 : index
    %8 = vector.load %arg7[%c0_6, %c0_7] : memref<32x128xf32, #tpu.memory_space<vmem>>, vector<32x128xf32>
    tpu.vector_store %arg7[%c0_6, %c0_7], %7 {strides = array<i32>} : memref<32x128xf32, #tpu.memory_space<vmem>>, vector<32x128xf32>,
    %c2_i32 = arith.constant 2 : i32
    %9 = arith.cmpi eq, %arg2, %c2_i32 : i32
    %10 = arith.extui %9 : i1 to i32
    %c0_i32_8 = arith.constant 0 : i32
    %11 = arith.cmpi ne, %10, %c0_i32_8 : i32
    scf.if %11 {
      %c0_9 = arith.constant 0 : index
      %c0_10 = arith.constant 0 : index
      %12 = vector.load %arg7[%c0_9, %c0_10] : memref<32x128xf32, #tpu.memory_space<vmem>>, vector<32x128xf32>
      %c0_11 = arith.constant 0 : index
      %c0_12 = arith.constant 0 : index
      %13 = vector.load %arg5[%c0_11, %c0_12] : memref<1x128xf32, #tpu.memory_space<vmem>>, vector<1x128xf32>
      %14 = vector.broadcast %13 : vector<1x128xf32> to vector<32x128xf32>
      %15 = arith.addf %12, %14 : vector<32x128xf32>
      %c0_13 = arith.constant 0 : index
      %c0_14 = arith.constant 0 : index
      %16 = vector.load %arg6[%c0_13, %c0_14] : memref<32x128xf32, #tpu.memory_space<vmem>>, vector<32x128xf32>
      tpu.vector_store %arg6[%c0_13, %c0_14], %15 {strides = array<i32>} : memref<32x128xf32, #tpu.memory_space<vmem>>, vector<32x128xf32>,
    } else {
    }
    return
  }
  func.func @transform_0(%arg0: i32, %arg1: i32, %arg2: i32) -> (i32, i32) {
    %c0_i32 = arith.constant 0 : i32
    return %arg0, %arg2 : i32, i32
  }
  func.func @transform_1(%arg0: i32, %arg1: i32, %arg2: i32) -> (i32, i32) {
    %c0_i32 = arith.constant 0 : i32
    return %arg2, %arg1 : i32, i32
  }
  func.func @transform_2(%arg0: i32, %arg1: i32, %arg2: i32) -> (i32, i32) {
    %c0_i32 = arith.constant 0 : i32
    %c0_i32_0 = arith.constant 0 : i32
    return %c0_i32, %arg1 : i32, i32
  }
  func.func @transform_3(%arg0: i32, %arg1: i32, %arg2: i32) -> (i32, i32) {
    %c0_i32 = arith.constant 0 : i32
    return %arg0, %arg1 : i32, i32
  }
}

module attributes {stable_mosaic.version = 11 : i64} {
  func.func @_matmul_bias_kernel(%arg0: i32, %arg1: i32, %arg2: i32, %arg3: memref<128x128xbf16, #tpu.memory_space<vmem>>, %arg4: memref<128x128xbf16, #tpu.memory_space<vmem>>, %arg5: memref<1x128xf32, #tpu.memory_space<vmem>>, %arg6: memref<128x128xf32, #tpu.memory_space<vmem>>, %arg7: memref<128x128xf32, #tpu.memory_space<vmem>>) attributes {dimension_semantics = [#tpu.dimension_semantics<parallel>, #tpu.dimension_semantics<parallel>, #tpu.dimension_semantics<arbitrary>], iteration_bounds = array<i64: 1, 1, 3>, scalar_prefetch = 0 : i64, scratch_operands = 1 : i64, tpu.core_type = #tpu.core_type<tc>, window_params = [{transform_indices = @transform_0, window_bounds = array<i64: 128, 128>}, {transform_indices = @transform_1, window_bounds = array<i64: 128, 128>}, {transform_indices = @transform_2, window_bounds = array<i64: 1, 128>}, {transform_indices = @transform_3, window_bounds = array<i64: 128, 128>}]} {
    %c0_i32 = arith.constant 0 : i32
    %0 = arith.cmpi eq, %arg2, %c0_i32 : i32
    %1 = arith.extui %0 : i1 to i32
    %c0_i32_0 = arith.constant 0 : i32
    %2 = arith.cmpi ne, %1, %c0_i32_0 : i32
    scf.if %2 {
      %cst_9 = arith.constant 0.000000e+00 : f32
      %12 = vector.broadcast %cst_9 : f32 to vector<128x128xf32>
      %c0_10 = arith.constant 0 : index
      %c0_11 = arith.constant 0 : index
      %13 = vector.load %arg7[%c0_10, %c0_11] : memref<128x128xf32, #tpu.memory_space<vmem>>, vector<128x128xf32>
      tpu.vector_store %arg7[%c0_10, %c0_11], %12 {strides = array<i32>} : memref<128x128xf32, #tpu.memory_space<vmem>>, vector<128x128xf32>,
    } else {
    }
    %c0 = arith.constant 0 : index
    %c0_1 = arith.constant 0 : index
    %3 = vector.load %arg7[%c0, %c0_1] : memref<128x128xf32, #tpu.memory_space<vmem>>, vector<128x128xf32>
    %c0_2 = arith.constant 0 : index
    %c0_3 = arith.constant 0 : index
    %4 = vector.load %arg3[%c0_2, %c0_3] : memref<128x128xbf16, #tpu.memory_space<vmem>>, vector<128x128xbf16>
    %c0_4 = arith.constant 0 : index
    %c0_5 = arith.constant 0 : index
    %5 = vector.load %arg4[%c0_4, %c0_5] : memref<128x128xbf16, #tpu.memory_space<vmem>>, vector<128x128xbf16>
    %cst = arith.constant dense<0.000000e+00> : vector<128x128xf32>
    %6 = tpu.matmul %4, %5, %cst {dimension_numbers = #tpu.dot_dimension_numbers<[1], [0], [0], [1], [0, 0, 1, 1], [], []>} : vector<128x128xbf16>, vector<128x128xbf16>, vector<128x128xf32> -> vector<128x128xf32>
    %7 = arith.addf %3, %6 : vector<128x128xf32>
    %c0_6 = arith.constant 0 : index
    %c0_7 = arith.constant 0 : index
    %8 = vector.load %arg7[%c0_6, %c0_7] : memref<128x128xf32, #tpu.memory_space<vmem>>, vector<128x128xf32>
    tpu.vector_store %arg7[%c0_6, %c0_7], %7 {strides = array<i32>} : memref<128x128xf32, #tpu.memory_space<vmem>>, vector<128x128xf32>,
    %c2_i32 = arith.constant 2 : i32
    %9 = arith.cmpi eq, %arg2, %c2_i32 : i32
    %10 = arith.extui %9 : i1 to i32
    %c0_i32_8 = arith.constant 0 : i32
    %11 = arith.cmpi ne, %10, %c0_i32_8 : i32
    scf.if %11 {
      %c0_9 = arith.constant 0 : index
      %c0_10 = arith.constant 0 : index
      %12 = vector.load %arg7[%c0_9, %c0_10] : memref<128x128xf32, #tpu.memory_space<vmem>>, vector<128x128xf32>
      %c0_11 = arith.constant 0 : index
      %c0_12 = arith.constant 0 : index
      %13 = vector.load %arg5[%c0_11, %c0_12] : memref<1x128xf32, #tpu.memory_space<vmem>>, vector<1x128xf32>
      %14 = vector.broadcast %13 : vector<1x128xf32> to vector<128x128xf32>
      %15 = arith.addf %12, %14 : vector<128x128xf32>
      %c0_13 = arith.constant 0 : index
      %c0_14 = arith.constant 0 : index
      %16 = vector.load %arg6[%c0_13, %c0_14] : memref<128x128xf32, #tpu.memory_space<vmem>>, vector<128x128xf32>
      tpu.vector_store %arg6[%c0_13, %c0_14], %15 {strides = array<i32>} : memref<128x128xf32, #tpu.memory_space<vmem>>, vector<128x128xf32>,
    } else {
    }
    return
  }
  func.func @transform_0(%arg0: i32, %arg1: i32, %arg2: i32) -> (i32, i32) {
    %c0_i32 = arith.constant 0 : i32
    return %arg0, %arg2 : i32, i32
  }
  func.func @transform_1(%arg0: i32, %arg1: i32, %arg2: i32) -> (i32, i32) {
    %c0_i32 = arith.constant 0 : i32
    return %arg2, %arg1 : i32, i32
  }
  func.func @transform_2(%arg0: i32, %arg1: i32, %arg2: i32) -> (i32, i32) {
    %c0_i32 = arith.constant 0 : i32
    %c0_i32_0 = arith.constant 0 : i32
    return %c0_i32, %arg1 : i32, i32
  }
  func.func @transform_3(%arg0: i32, %arg1: i32, %arg2: i32) -> (i32, i32) {
    %c0_i32 = arith.constant 0 : i32
    return %arg0, %arg1 : i32, i32
  }
}

module attributes {stable_mosaic.version = 11 : i64} {
  func.func @_matmul_bias_kernel(%arg0: i32, %arg1: i32, %arg2: i32, %arg3: memref<128x128xbf16, #tpu.memory_space<vmem>>, %arg4: memref<128x128xbf16, #tpu.memory_space<vmem>>, %arg5: memref<1x128xf32, #tpu.memory_space<vmem>>, %arg6: memref<128x128xf32, #tpu.memory_space<vmem>>, %arg7: memref<128x128xf32, #tpu.memory_space<vmem>>) attributes {dimension_semantics = [#tpu.dimension_semantics<parallel>, #tpu.dimension_semantics<parallel>, #tpu.dimension_semantics<arbitrary>], iteration_bounds = array<i64: 4, 1, 4>, scalar_prefetch = 0 : i64, scratch_operands = 1 : i64, tpu.core_type = #tpu.core_type<tc>, window_params = [{transform_indices = @transform_0, window_bounds = array<i64: 128, 128>}, {transform_indices = @transform_1, window_bounds = array<i64: 128, 128>}, {transform_indices = @transform_2, window_bounds = array<i64: 1, 128>}, {transform_indices = @transform_3, window_bounds = array<i64: 128, 128>}]} {
    %c0_i32 = arith.constant 0 : i32
    %0 = arith.cmpi eq, %arg2, %c0_i32 : i32
    %1 = arith.extui %0 : i1 to i32
    %c0_i32_0 = arith.constant 0 : i32
    %2 = arith.cmpi ne, %1, %c0_i32_0 : i32
    scf.if %2 {
      %cst_9 = arith.constant 0.000000e+00 : f32
      %12 = vector.broadcast %cst_9 : f32 to vector<128x128xf32>
      %c0_10 = arith.constant 0 : index
      %c0_11 = arith.constant 0 : index
      %13 = vector.load %arg7[%c0_10, %c0_11] : memref<128x128xf32, #tpu.memory_space<vmem>>, vector<128x128xf32>
      tpu.vector_store %arg7[%c0_10, %c0_11], %12 {strides = array<i32>} : memref<128x128xf32, #tpu.memory_space<vmem>>, vector<128x128xf32>,
    } else {
    }
    %c0 = arith.constant 0 : index
    %c0_1 = arith.constant 0 : index
    %3 = vector.load %arg7[%c0, %c0_1] : memref<128x128xf32, #tpu.memory_space<vmem>>, vector<128x128xf32>
    %c0_2 = arith.constant 0 : index
    %c0_3 = arith.constant 0 : index
    %4 = vector.load %arg3[%c0_2, %c0_3] : memref<128x128xbf16, #tpu.memory_space<vmem>>, vector<128x128xbf16>
    %c0_4 = arith.constant 0 : index
    %c0_5 = arith.constant 0 : index
    %5 = vector.load %arg4[%c0_4, %c0_5] : memref<128x128xbf16, #tpu.memory_space<vmem>>, vector<128x128xbf16>
    %cst = arith.constant dense<0.000000e+00> : vector<128x128xf32>
    %6 = tpu.matmul %4, %5, %cst {dimension_numbers = #tpu.dot_dimension_numbers<[1], [0], [0], [1], [0, 0, 1, 1], [], []>} : vector<128x128xbf16>, vector<128x128xbf16>, vector<128x128xf32> -> vector<128x128xf32>
    %7 = arith.addf %3, %6 : vector<128x128xf32>
    %c0_6 = arith.constant 0 : index
    %c0_7 = arith.constant 0 : index
    %8 = vector.load %arg7[%c0_6, %c0_7] : memref<128x128xf32, #tpu.memory_space<vmem>>, vector<128x128xf32>
    tpu.vector_store %arg7[%c0_6, %c0_7], %7 {strides = array<i32>} : memref<128x128xf32, #tpu.memory_space<vmem>>, vector<128x128xf32>,
    %c3_i32 = arith.constant 3 : i32
    %9 = arith.cmpi eq, %arg2, %c3_i32 : i32
    %10 = arith.extui %9 : i1 to i32
    %c0_i32_8 = arith.constant 0 : i32
    %11 = arith.cmpi ne, %10, %c0_i32_8 : i32
    scf.if %11 {
      %c0_9 = arith.constant 0 : index
      %c0_10 = arith.constant 0 : index
      %12 = vector.load %arg7[%c0_9, %c0_10] : memref<128x128xf32, #tpu.memory_space<vmem>>, vector<128x128xf32>
      %c0_11 = arith.constant 0 : index
      %c0_12 = arith.constant 0 : index
      %13 = vector.load %arg5[%c0_11, %c0_12] : memref<1x128xf32, #tpu.memory_space<vmem>>, vector<1x128xf32>
      %14 = vector.broadcast %13 : vector<1x128xf32> to vector<128x128xf32>
      %15 = arith.addf %12, %14 : vector<128x128xf32>
      %16 = math.tanh %15 : vector<128x128xf32>
      %c0_13 = arith.constant 0 : index
      %c0_14 = arith.constant 0 : index
      %17 = vector.load %arg6[%c0_13, %c0_14] : memref<128x128xf32, #tpu.memory_space<vmem>>, vector<128x128xf32>
      tpu.vector_store %arg6[%c0_13, %c0_14], %16 {strides = array<i32>} : memref<128x128xf32, #tpu.memory_space<vmem>>, vector<128x128xf32>,
    } else {
    }
    return
  }
  func.func @transform_0(%arg0: i32, %arg1: i32, %arg2: i32) -> (i32, i32) {
    %c0_i32 = arith.constant 0 : i32
    return %arg0, %arg2 : i32, i32
  }
  func.func @transform_1(%arg0: i32, %arg1: i32, %arg2: i32) -> (i32, i32) {
    %c0_i32 = arith.constant 0 : i32
    return %arg2, %arg1 : i32, i32
  }
  func.func @transform_2(%arg0: i32, %arg1: i32, %arg2: i32) -> (i32, i32) {
    %c0_i32 = arith.constant 0 : i32
    %c0_i32_0 = arith.constant 0 : i32
    return %c0_i32, %arg1 : i32, i32
  }
  func.func @transform_3(%arg0: i32, %arg1: i32, %arg2: i32) -> (i32, i32) {
    %c0_i32 = arith.constant 0 : i32
    return %arg0, %arg1 : i32, i32
  }
}

</mosaic_0001>

<llo_original>
// kernel: resnet_generator_forward.10
$region0: #{resnet_generator_forward.10}
  #allocation0 [shape = 'u32[]', space=smem, size = 0x4, offset = 0x4, fixed_abs, tag = 'smem constant byte address 0x4 - core index']
  #allocation1 [shape = 'u32[144,128]{1,0:T(1,128)}', space=vmem, size = 0x12000, scoped, tag = 'internal scratch']
  #allocation2 [shape = 'f32[128,128]{1,0:T(8,128)}', space=vmem, size = 0x10000, scoped, tag = 'scratch operand']
  %s0 = inlined_call_operand.vmem [shape: bf16[512,256], index: 0, kind: input, shape index: {}]
  %s1 = inlined_call_operand.vmem [shape: bf16[256,128], index: 1, kind: input, shape index: {}]
  %s2 = inlined_call_operand.vmem [shape: f32[1,128], index: 2, kind: input, shape index: {}]
  %s3 = inlined_call_operand.vmem [shape: f32[512,128], index: 3, kind: output, shape index: {}]
  %s4 = sld [smem:[#allocation0]]
  $region94: #{resnet_generator_forward.10} parent=0
    _
  %s6 = ssub.s32 1, %s4
  %s7 = scalar_select 0, %s6, %s4
  $region1: #{resnet_generator_forward.10} parent=0
    #allocation3 [shape = 'u8[65536]{0}', space=vmem, size = 0x10000, scoped, tag = 'input window, operand 0']
    loop: start=0, step=1, limit=10
    $region2: #{resnet_generator_forward.10} parent=1 // loop_pre_header
      _
    $region3: #{resnet_generator_forward.10} parent=1 // loop_header
      %s9 = sphi 0, %s13
      %p10 = scmp.ge.s32.totalorder %s9, 10
      %s16 = sphi 0, %s35
      %s17 = sphi 0, %s31
      %s18 = sphi 0, %s27
      %s19 = sphi 0, %s16
      %s20 = sphi 0, %s17
      %s21 = sphi 0, %s18
      %s22 = sphi 0, %s19
      %s23 = sphi 0, %s20
      %s24 = sphi 0, %s21
      %s40 = sphi 0, %s42
      %s43 = sphi 0, %s40
      %s44 = sphi 0, %s43
      %s60 = sphi 0, %s44
      %s68 = sphi 0, %s70
      %s71 = sphi 0, %s68
      %s72 = sphi 0, %s71
      %s88 = sphi 0, %s72
      %s94 = sphi 0, %s96
      %s97 = sphi 0, %s94
      %s98 = sphi 0, %s97
      %s114 = sphi 0, %s98
      %s122 = sphi 0, %s124
      %s125 = sphi 0, %s122
      %s126 = sphi 0, %s125
      %s142 = sphi 0, %s126
    $region4: #{resnet_generator_forward.10} parent=1 // loop_header_branch
      %12 = sbr.rel (%p10) target = $region8
    $region5: #{resnet_generator_forward.10} parent=1 // loop_body
      %s14 = ssub.s32 %s9, 1
      %s15 = ssub.s32 %s9, 2
      %s25 = sadd.s32 1, %s18
      %p26 = scmp.ge.s32.totalorder %s25, 2
      %s27 = scalar_select %p26, 0, %s25
      %s28 = sadd.s32 1, %s17
      %s29 = scalar_select %p26, %s28, %s17
      %p30 = scmp.ge.s32.totalorder %s29, 1
      %s31 = scalar_select %p30, 0, %s29
      %s32 = sadd.s32 1, %s16
      %s33 = scalar_select %p30, %s32, %s16
      %p34 = scmp.ge.s32.totalorder %s33, 4
      %s35 = scalar_select %p34, 0, %s33
      %s36 = ssub.s32 %s16, %s35
      %s37 = ssub.s32 %s18, %s27
      %s38 = sor.u32 %s36, %s37
      %p39 = scmp.eq.s32.totalorder %s38, 0
      %s41 = sadd.s32 %s40, 1
      %s42 = scalar_select %p39, %s40, %s41
      %p45 = pneg %p39
      %p46 = scmp.eq.s32.totalorder %s9, 7
      %p47 = por %p45, %p46
      %p48 = scmp.ne.s32.totalorder %s40, %s43
      %p49 = scmp.eq.s32.totalorder %s9, 0
      %p50 = por %p48, %p49
      %p51 = scmp.ne.s32.totalorder %s40, %s43
      %p52 = scmp.eq.s32.totalorder %s14, 7
      %p53 = por %p51, %p52
      %p54 = scmp.ne.s32.totalorder %s43, %s44
      %p55 = scmp.eq.s32.totalorder %s14, 0
      %p56 = por %p54, %p55
      %p57 = scmp.ne.s32.totalorder %s43, %s44
      %p58 = scmp.eq.s32.totalorder %s15, 7
      %p59 = por %p57, %p58
      %p61 = scmp.ne.s32.totalorder %s44, %s60
      %p62 = scmp.eq.s32.totalorder %s15, 0
      %p63 = por %p61, %p62
      %s64 = ssub.s32 %s18, %s27
      %s65 = ssub.s32 %s17, %s31
      %s66 = sor.u32 %s64, %s65
      %p67 = scmp.eq.s32.totalorder %s66, 0
      %s69 = sadd.s32 %s68, 1
      %s70 = scalar_select %p67, %s68, %s69
      %p73 = pneg %p67
      %p74 = scmp.eq.s32.totalorder %s9, 7
      %p75 = por %p73, %p74
      %p76 = scmp.ne.s32.totalorder %s68, %s71
      %p77 = scmp.eq.s32.totalorder %s9, 0
      %p78 = por %p76, %p77
      %p79 = scmp.ne.s32.totalorder %s68, %s71
      %p80 = scmp.eq.s32.totalorder %s14, 7
      %p81 = por %p79, %p80
      %p82 = scmp.ne.s32.totalorder %s71, %s72
      %p83 = scmp.eq.s32.totalorder %s14, 0
      %p84 = por %p82, %p83
      %p85 = scmp.ne.s32.totalorder %s71, %s72
      %p86 = scmp.eq.s32.totalorder %s15, 7
      %p87 = por %p85, %p86
      %p89 = scmp.ne.s32.totalorder %s72, %s88
      %p90 = scmp.eq.s32.totalorder %s15, 0
      %p91 = por %p89, %p90
      %s92 = ssub.s32 %s17, %s31
      %p93 = scmp.eq.s32.totalorder %s92, 0
      %s95 = sadd.s32 %s94, 1
      %s96 = scalar_select %p93, %s94, %s95
      %p99 = pneg %p93
      %p100 = scmp.eq.s32.totalorder %s9, 7
      %p101 = por %p99, %p100
      %p102 = scmp.ne.s32.totalorder %s94, %s97
      %p103 = scmp.eq.s32.totalorder %s9, 0
      %p104 = por %p102, %p103
      %p105 = scmp.ne.s32.totalorder %s94, %s97
      %p106 = scmp.eq.s32.totalorder %s14, 7
      %p107 = por %p105, %p106
      %p108 = scmp.ne.s32.totalorder %s97, %s98
      %p109 = scmp.eq.s32.totalorder %s14, 0
      %p110 = por %p108, %p109
      %p111 = scmp.ne.s32.totalorder %s97, %s98
      %p112 = scmp.eq.s32.totalorder %s15, 7
      %p113 = por %p111, %p112
      %p115 = scmp.ne.s32.totalorder %s98, %s114
      %p116 = scmp.eq.s32.totalorder %s15, 0
      %p117 = por %p115, %p116
      %s118 = ssub.s32 %s16, %s35
      %s119 = ssub.s32 %s17, %s31
      %s120 = sor.u32 %s118, %s119
      %p121 = scmp.eq.s32.totalorder %s120, 0
      %s123 = sadd.s32 %s122, 1
      %s124 = scalar_select %p121, %s122, %s123
      %p127 = pneg %p121
      %p128 = scmp.eq.s32.totalorder %s9, 7
      %p129 = por %p127, %p128
      %p130 = scmp.ne.s32.totalorder %s122, %s125
      %p131 = scmp.eq.s32.totalorder %s9, 0
      %p132 = por %p130, %p131
      %p133 = scmp.ne.s32.totalorder %s122, %s125
      %p134 = scmp.eq.s32.totalorder %s14, 7
      %p135 = por %p133, %p134
      %p136 = scmp.ne.s32.totalorder %s125, %s126
      %p137 = scmp.eq.s32.totalorder %s14, 0
      %p138 = por %p136, %p137
      %p139 = scmp.ne.s32.totalorder %s125, %s126
      %p140 = scmp.eq.s32.totalorder %s15, 7
      %p141 = por %p139, %p140
      %p143 = scmp.ne.s32.totalorder %s126, %s142
      %p144 = scmp.eq.s32.totalorder %s15, 0
      %p145 = por %p143, %p144
      %p146 = scmp.le.s32.totalorder 1, %s9
      %p147 = scmp.lt.s32.totalorder %s9, 9
      %p148 = pnand %p146, %p147
      %p149 = pneg %p148
      // Predicated region
      $region9: #{resnet_generator_forward.10} parent=5 // pred_check
        _
      $region10: #{resnet_generator_forward.10} parent=5 // pred_check_branch
        %151 = sbr.rel (%p148) target = $region12
      $region11: #{resnet_generator_forward.10} parent=5 // pred_region
        %s152 = ssub.s32 %s9, 1
        // Predicated region
        $region13: #{resnet_generator_forward.10} parent=11 // pred_check
          %p153 = pneg %p110
        $region14: #{resnet_generator_forward.10} parent=11 // pred_check_branch
          %155 = sbr.rel (%p153) target = $region16
        $region15: #{resnet_generator_forward.10} parent=11 // pred_region
          %p156 = scmp.lt.s32.totalorder %s20, 0
          %s157 = scalar_select %p156, %s20, 0
          %s158 = scalar_lea.vmem %s2, %s157
        $region16: #{resnet_generator_forward.10} parent=11 // pred_fallthru
          _
      $region12: #{resnet_generator_forward.10} parent=5 // pred_fallthru
        _
      %p159 = scmp.lt.s32.totalorder %s9, 8
      // Predicated region
      $region17: #{resnet_generator_forward.10} parent=5 // pred_check
        %p160 = pneg %p159
      $region18: #{resnet_generator_forward.10} parent=5 // pred_check_branch
        %162 = sbr.rel (%p160) target = $region20
      $region19: #{resnet_generator_forward.10} parent=5 // pred_region
        // Predicated region
        $region21: #{resnet_generator_forward.10} parent=19 // pred_check
          %p163 = pneg %p50
        $region22: #{resnet_generator_forward.10} parent=19 // pred_check_branch
          %165 = sbr.rel (%p163) target = $region24
        $region23: #{resnet_generator_forward.10} parent=19 // pred_region
          %s166 = sand.u32 %s40, 1
          %s167 = sand.u32 %s40, 1
          %s168 = smul.addr %s167, 64
          %s169 = scalar_lea.vmem [#allocation3], %s168
          %s170 = smul.u32 16, %s16
          %s171 = smul.addr %s170, 2
          %s172 = sadd.s32 %s18, %s171
          %s173 = smul.addr %s172, 4
          %s174 = scalar_lea.vmem %s0, %s173
          // Predicated region
          $region25: #{resnet_generator_forward.10} parent=23 // pred_check
            _
          $region26: #{resnet_generator_forward.10} parent=23 // pred_check_branch
            %176 = sbr.rel (0) target = $region28
          $region27: #{resnet_generator_forward.10} parent=23 // pred_region
            // Predicated region
            $region29: #{resnet_generator_forward.10} parent=27 // pred_check
              _
            $region30: #{resnet_generator_forward.10} parent=27 // pred_check_branch
              %178 = sbr.rel target = $region32
            $region31: #{resnet_generator_forward.10} parent=27 // pred_region
              // Predicated region
              $region44: #{resnet_generator_forward.10} parent=31 // pred_check
                _
              $region45: #{resnet_generator_forward.10} parent=31 // pred_check_branch
                %223 = sbr.rel (0) target = $region47
              $region46: #{resnet_generator_forward.10} parent=31 // pred_region
                loop: start=0, step=1, limit=1
                $region48: #{resnet_generator_forward.10} parent=46 // loop_pre_header
                  _
                $region49: #{resnet_generator_forward.10} parent=46 // loop_header
                  %s225 = sphi 0, %s229
                  %p226 = scmp.ge.s32.totalorder %s225, 1
                  %s230 = sphi %s174, %s174
                  %s231 = sphi %s169, %s169
                $region50: #{resnet_generator_forward.10} parent=46 // loop_header_branch
                  %228 = sbr.rel (%p226) target = $region54
                $region51: #{resnet_generator_forward.10} parent=46 // loop_body
                  _
                $region52: #{resnet_generator_forward.10} parent=46 // loop_footer
                  %s229 = sadd.s32 1, %s225
                $region53: #{resnet_generator_forward.10} parent=46 // loop_footer_branch
                  %224 = sbr.rel target = $region49
                $region54: #{resnet_generator_forward.10} parent=46 // loop_exit
                  _
                loop: start=0, step=1, limit=1
                $region55: #{resnet_generator_forward.10} parent=46 // loop_pre_header
                  _
                $region56: #{resnet_generator_forward.10} parent=46 // loop_header
                  %s234 = sphi 0, %s238
                  %p235 = scmp.ge.s32.totalorder %s234, 1
                  %s239 = sphi %s174, %s174
                  %s240 = sphi %s169, %s169
                $region57: #{resnet_generator_forward.10} parent=46 // loop_header_branch
                  %237 = sbr.rel (%p235) target = $region61
                $region58: #{resnet_generator_forward.10} parent=46 // loop_body
                  %v241 = vld [vmem:[%s239] sm:$0xf]
                  %242 = vst [vmem:[%s240] sm:$0xf] %v241
                  %v243 = vld [vmem:[%s239 + $0x8] sm:$0xf]
                  %244 = vst [vmem:[%s240 + $0x4] sm:$0xf] %v243
                  %v245 = vld [vmem:[%s239 + $0x10] sm:$0xf]
                  %246 = vst [vmem:[%s240 + $0x8] sm:$0xf] %v245
                  %v247 = vld [vmem:[%s239 + $0x18] sm:$0xf]
                  %248 = vst [vmem:[%s240 + $0xc] sm:$0xf] %v247
                  %v249 = vld [vmem:[%s239 + $0x20] sm:$0xf]
                  %250 = vst [vmem:[%s240 + $0x10] sm:$0xf] %v249
                  %v251 = vld [vmem:[%s239 + $0x28] sm:$0xf]
                  %252 = vst [vmem:[%s240 + $0x14] sm:$0xf] %v251
                  %v253 = vld [vmem:[%s239 + $0x30] sm:$0xf]
                  %254 = vst [vmem:[%s240 + $0x18] sm:$0xf] %v253
                  %v255 = vld [vmem:[%s239 + $0x38] sm:$0xf]
                  %256 = vst [vmem:[%s240 + $0x1c] sm:$0xf] %v255
                  %v257 = vld [vmem:[%s239 + $0x40] sm:$0xf]
                  %258 = vst [vmem:[%s240 + $0x20] sm:$0xf] %v257
                  %v259 = vld [vmem:[%s239 + $0x48] sm:$0xf]
                  %260 = vst [vmem:[%s240 + $0x24] sm:$0xf] %v259
                  %v261 = vld [vmem:[%s239 + $0x50] sm:$0xf]
                  %262 = vst [vmem:[%s240 + $0x28] sm:$0xf] %v261
                  %v263 = vld [vmem:[%s239 + $0x58] sm:$0xf]
                  %264 = vst [vmem:[%s240 + $0x2c] sm:$0xf] %v263
                  %v265 = vld [vmem:[%s239 + $0x60] sm:$0xf]
                  %266 = vst [vmem:[%s240 + $0x30] sm:$0xf] %v265
                  %v267 = vld [vmem:[%s239 + $0x68] sm:$0xf]
                  %268 = vst [vmem:[%s240 + $0x34] sm:$0xf] %v267
                  %v269 = vld [vmem:[%s239 + $0x70] sm:$0xf]
                  %270 = vst [vmem:[%s240 + $0x38] sm:$0xf] %v269
                  %v271 = vld [vmem:[%s239 + $0x78] sm:$0xf]
                  %272 = vst [vmem:[%s240 + $0x3c] sm:$0xf] %v271
                $region59: #{resnet_generator_forward.10} parent=46 // loop_footer
                  %s238 = sadd.s32 1, %s234
                $region60: #{resnet_generator_forward.10} parent=46 // loop_footer_branch
                  %233 = sbr.rel target = $region56
                $region61: #{resnet_generator_forward.10} parent=46 // loop_exit
                  _
              $region47: #{resnet_generator_forward.10} parent=31 // pred_fallthru
                _
            $region32: #{resnet_generator_forward.10} parent=27 // pred_fallthru
              _
            // Predicated region
            $region33: #{resnet_generator_forward.10} parent=27 // pred_check
              _
            $region34: #{resnet_generator_forward.10} parent=27 // pred_check_branch
              %180 = sbr.rel (0) target = $region36
            $region35: #{resnet_generator_forward.10} parent=27 // pred_region
              loop: start=0, step=1, limit=1
              $region37: #{resnet_generator_forward.10} parent=35 // loop_pre_header
                _
              $region38: #{resnet_generator_forward.10} parent=35 // loop_header
                %s183 = sphi 0, %s187
                %p184 = scmp.ge.s32.totalorder %s183, 1
                %s188 = sphi %s174, %s174
                %s189 = sphi %s169, %s169
              $region39: #{resnet_generator_forward.10} parent=35 // loop_header_branch
                %186 = sbr.rel (%p184) target = $region43
              $region40: #{resnet_generator_forward.10} parent=35 // loop_body
                %v190 = vld [vmem:[%s188] sm:$0xf]
                %191 = vst [vmem:[%s189] sm:$0xf] %v190
                %v192 = vld [vmem:[%s188 + $0x8] sm:$0xf]
                %193 = vst [vmem:[%s189 + $0x4] sm:$0xf] %v192
                %v194 = vld [vmem:[%s188 + $0x10] sm:$0xf]
                %195 = vst [vmem:[%s189 + $0x8] sm:$0xf] %v194
                %v196 = vld [vmem:[%s188 + $0x18] sm:$0xf]
                %197 = vst [vmem:[%s189 + $0xc] sm:$0xf] %v196
                %v198 = vld [vmem:[%s188 + $0x20] sm:$0xf]
                %199 = vst [vmem:[%s189 + $0x10] sm:$0xf] %v198
                %v200 = vld [vmem:[%s188 + $0x28] sm:$0xf]
                %201 = vst [vmem:[%s189 + $0x14] sm:$0xf] %v200
                %v202 = vld [vmem:[%s188 + $0x30] sm:$0xf]
                %203 = vst [vmem:[%s189 + $0x18] sm:$0xf] %v202
                %v204 = vld [vmem:[%s188 + $0x38] sm:$0xf]
                %205 = vst [vmem:[%s189 + $0x1c] sm:$0xf] %v204
                %v206 = vld [vmem:[%s188 + $0x40] sm:$0xf]
                %207 = vst [vmem:[%s189 + $0x20] sm:$0xf] %v206
                %v208 = vld [vmem:[%s188 + $0x48] sm:$0xf]
                %209 = vst [vmem:[%s189 + $0x24] sm:$0xf] %v208
                %v210 = vld [vmem:[%s188 + $0x50] sm:$0xf]
                %211 = vst [vmem:[%s189 + $0x28] sm:$0xf] %v210
                %v212 = vld [vmem:[%s188 + $0x58] sm:$0xf]
                %213 = vst [vmem:[%s189 + $0x2c] sm:$0xf] %v212
                %v214 = vld [vmem:[%s188 + $0x60] sm:$0xf]
                %215 = vst [vmem:[%s189 + $0x30] sm:$0xf] %v214
                %v216 = vld [vmem:[%s188 + $0x68] sm:$0xf]
                %217 = vst [vmem:[%s189 + $0x34] sm:$0xf] %v216
                %v218 = vld [vmem:[%s188 + $0x70] sm:$0xf]
                %219 = vst [vmem:[%s189 + $0x38] sm:$0xf] %v218
                %v220 = vld [vmem:[%s188 + $0x78] sm:$0xf]
                %221 = vst [vmem:[%s189 + $0x3c] sm:$0xf] %v220
              $region41: #{resnet_generator_forward.10} parent=35 // loop_footer
                %s187 = sadd.s32 1, %s183
              $region42: #{resnet_generator_forward.10} parent=35 // loop_footer_branch
                %182 = sbr.rel target = $region38
              $region43: #{resnet_generator_forward.10} parent=35 // loop_exit
                _
            $region36: #{resnet_generator_forward.10} parent=27 // pred_fallthru
              _
          $region28: #{resnet_generator_forward.10} parent=23 // pred_fallthru
            _
          %273 = vnop
        $region24: #{resnet_generator_forward.10} parent=19 // pred_fallthru
          _
        // Predicated region
        $region62: #{resnet_generator_forward.10} parent=19 // pred_check
          %p274 = pneg %p78
        $region63: #{resnet_generator_forward.10} parent=19 // pred_check_branch
          %276 = sbr.rel (%p274) target = $region65
        $region64: #{resnet_generator_forward.10} parent=19 // pred_region
          %s277 = smul.u32 16, %s18
          %p278 = scmp.lt.s32.totalorder %s277, 31
          %s279 = scalar_select %p278, %s277, 31
          %p280 = scmp.lt.s32.totalorder %s17, 0
          %s281 = scalar_select %p280, %s17, 0
          %s282 = sadd.s32 %s281, %s279
          %s283 = smul.addr %s282, 4
          %s284 = scalar_lea.vmem %s1, %s283
          %s285 = smul.u32 16, %s18
        $region65: #{resnet_generator_forward.10} parent=19 // pred_fallthru
          _
      $region20: #{resnet_generator_forward.10} parent=5 // pred_fallthru
        _
      %p286 = scmp.le.s32.totalorder 1, %s9
      %p287 = scmp.lt.s32.totalorder %s9, 9
      %p288 = pnand %p286, %p287
      %p289 = pneg %p288
      // Predicated region
      $region66: #{resnet_generator_forward.10} parent=5 // pred_check
        _
      $region67: #{resnet_generator_forward.10} parent=5 // pred_check_branch
        %291 = sbr.rel (%p288) target = $region69
      $region68: #{resnet_generator_forward.10} parent=5 // pred_region
        %s292 = ssub.s32 %s9, 1
        %s293 = sand.u32 %s43, 1
        %s294 = sand.u32 %s43, 1
        %s295 = smul.addr %s294, 64
        %s296 = scalar_lea.vmem [#allocation3], %s295
        // Predicated region
        $region70: #{resnet_generator_forward.10} parent=68 // pred_check
          %p297 = pneg %p56
        $region71: #{resnet_generator_forward.10} parent=68 // pred_check_branch
          %299 = sbr.rel (%p297) target = $region73
        $region72: #{resnet_generator_forward.10} parent=68 // pred_region
          _
        $region73: #{resnet_generator_forward.10} parent=68 // pred_fallthru
          _
        %s300 = sand.u32 %s43, 1
        %s301 = sand.u32 %s43, 1
        %s302 = smul.addr %s301, 64
        %s303 = scalar_lea.vmem [#allocation3], %s302
        %p304 = pneg %p56
        %p305 = pneg %p53
        %s306 = smul.u32 16, %s21
        %p307 = scmp.lt.s32.totalorder %s306, 31
        %s308 = scalar_select %p307, %s306, 31
        %p309 = scmp.lt.s32.totalorder %s20, 0
        %s310 = scalar_select %p309, %s20, 0
        %s311 = sadd.s32 %s310, %s308
        %s312 = smul.addr %s311, 4
        %s313 = scalar_lea.vmem %s1, %s312
        %p314 = pneg %p84
        %p315 = pneg %p81
        %p316 = scmp.lt.s32.totalorder %s20, 0
        %s317 = scalar_select %p316, %s20, 0
        %s318 = scalar_lea.vmem %s2, %s317
        %p319 = pneg %p110
        %p320 = pneg %p107
        %p321 = pneg %p138
        %p322 = pneg %p135
        %s323 = smul.u32 16, %s19
        %p324 = scmp.lt.s32.totalorder %s323, 63
        %s325 = scalar_select %p324, %s323, 63
        %p326 = scmp.lt.s32.totalorder %s20, 0
        %s327 = scalar_select %p326, %s20, 0
        %s328 = sadd.s32 %s327, %s325
        %s329 = smul.addr %s328, 8
        %s330 = scalar_lea.vmem %s3, %s329
        %s331 = smul.u32 16, %s19
        %s332 = smul.u32 16, %s21
        %p333 = scmp.lt.s32.totalorder %s332, 31
        %s334 = scalar_select %p333, %s332, 31
        %p335 = scmp.lt.s32.totalorder %s20, 0
        %s336 = scalar_select %p335, %s20, 0
        %s337 = sadd.s32 %s336, %s334
        %s338 = smul.addr %s337, 4
        %s339 = scalar_lea.vmem %s1, %s338
        %s340 = smul.u32 16, %s21
        %p341 = scmp.lt.s32.totalorder %s20, 0
        %s342 = scalar_select %p341, %s20, 0
        %s343 = scalar_lea.vmem %s2, %s342
        %s344 = smul.u32 16, %s19
        %p345 = scmp.lt.s32.totalorder %s344, 63
        %s346 = scalar_select %p345, %s344, 63
        %p347 = scmp.lt.s32.totalorder %s20, 0
        %s348 = scalar_select %p347, %s20, 0
        %s349 = sadd.s32 %s348, %s346
        %s350 = smul.addr %s349, 8
        %s351 = scalar_lea.vmem %s3, %s350
        %s352 = smul.u32 16, %s19
        %p354 = scmp.eq.s32.totalorder %s21, 0
        // Predicated region
        $region74: #{resnet_generator_forward.10} parent=68 // pred_check
          %p355 = pneg %p354
        $region75: #{resnet_generator_forward.10} parent=68 // pred_check_branch
          %357 = sbr.rel (%p355) target = $region77
        $region76: #{resnet_generator_forward.10} parent=68 // pred_region
          %358 = vst [vmem:[#allocation2] sm:$0xff] 0.0
          %359 = vst [vmem:[#allocation2 + $0x8] sm:$0xff] 0.0
          %360 = vst [vmem:[#allocation2 + $0x10] sm:$0xff] 0.0
          %361 = vst [vmem:[#allocation2 + $0x18] sm:$0xff] 0.0
          %362 = vst [vmem:[#allocation2 + $0x20] sm:$0xff] 0.0
          %363 = vst [vmem:[#allocation2 + $0x28] sm:$0xff] 0.0
          %364 = vst [vmem:[#allocation2 + $0x30] sm:$0xff] 0.0
          %365 = vst [vmem:[#allocation2 + $0x38] sm:$0xff] 0.0
          %366 = vst [vmem:[#allocation2 + $0x40] sm:$0xff] 0.0
          %367 = vst [vmem:[#allocation2 + $0x48] sm:$0xff] 0.0
          %368 = vst [vmem:[#allocation2 + $0x50] sm:$0xff] 0.0
          %369 = vst [vmem:[#allocation2 + $0x58] sm:$0xff] 0.0
          %370 = vst [vmem:[#allocation2 + $0x60] sm:$0xff] 0.0
          %371 = vst [vmem:[#allocation2 + $0x68] sm:$0xff] 0.0
          %372 = vst [vmem:[#allocation2 + $0x70] sm:$0xff] 0.0
          %373 = vst [vmem:[#allocation2 + $0x78] sm:$0xff] 0.0
        $region77: #{resnet_generator_forward.10} parent=68 // pred_fallthru
          _
        %v374 = vld [vmem:[#allocation2] sm:$0xff]
        %v375 = vld [vmem:[#allocation2 + $0x8] sm:$0xff]
        %v376 = vld [vmem:[#allocation2 + $0x10] sm:$0xff]
        %v377 = vld [vmem:[#allocation2 + $0x18] sm:$0xff]
        %v378 = vld [vmem:[#allocation2 + $0x20] sm:$0xff]
        %v379 = vld [vmem:[#allocation2 + $0x28] sm:$0xff]
        %v380 = vld [vmem:[#allocation2 + $0x30] sm:$0xff]
        %v381 = vld [vmem:[#allocation2 + $0x38] sm:$0xff]
        %v382 = vld [vmem:[#allocation2 + $0x40] sm:$0xff]
        %v383 = vld [vmem:[#allocation2 + $0x48] sm:$0xff]
        %v384 = vld [vmem:[#allocation2 + $0x50] sm:$0xff]
        %v385 = vld [vmem:[#allocation2 + $0x58] sm:$0xff]
        %v386 = vld [vmem:[#allocation2 + $0x60] sm:$0xff]
        %v387 = vld [vmem:[#allocation2 + $0x68] sm:$0xff]
        %v388 = vld [vmem:[#allocation2 + $0x70] sm:$0xff]
        %v389 = vld [vmem:[#allocation2 + $0x78] sm:$0xff]
        %v390 = vld [vmem:[%s296] sm:$0xf]
        %v391 = vld [vmem:[%s296 + $0x4] sm:$0xf]
        %v392 = vld [vmem:[%s296 + $0x8] sm:$0xf]
        %v393 = vld [vmem:[%s296 + $0xc] sm:$0xf]
        %v394 = vld [vmem:[%s296 + $0x10] sm:$0xf]
        %v395 = vld [vmem:[%s296 + $0x14] sm:$0xf]
        %v396 = vld [vmem:[%s296 + $0x18] sm:$0xf]
        %v397 = vld [vmem:[%s296 + $0x1c] sm:$0xf]
        %v398 = vld [vmem:[%s296 + $0x20] sm:$0xf]
        %v399 = vld [vmem:[%s296 + $0x24] sm:$0xf]
        %v400 = vld [vmem:[%s296 + $0x28] sm:$0xf]
        %v401 = vld [vmem:[%s296 + $0x2c] sm:$0xf]
        %v402 = vld [vmem:[%s296 + $0x30] sm:$0xf]
        %v403 = vld [vmem:[%s296 + $0x34] sm:$0xf]
        %v404 = vld [vmem:[%s296 + $0x38] sm:$0xf]
        %v405 = vld [vmem:[%s296 + $0x3c] sm:$0xf]
        %v406 = vld [vmem:[%s339] sm:$0xf]
        %v407 = vld [vmem:[%s339 + $0x4] sm:$0xf]
        %v408 = vld [vmem:[%s339 + $0x8] sm:$0xf]
        %v409 = vld [vmem:[%s339 + $0xc] sm:$0xf]
        %v410 = vld [vmem:[%s339 + $0x10] sm:$0xf]
        %v411 = vld [vmem:[%s339 + $0x14] sm:$0xf]
        %v412 = vld [vmem:[%s339 + $0x18] sm:$0xf]
        %v413 = vld [vmem:[%s339 + $0x1c] sm:$0xf]
        %v414 = vld [vmem:[%s339 + $0x20] sm:$0xf]
        %v415 = vld [vmem:[%s339 + $0x24] sm:$0xf]
        %v416 = vld [vmem:[%s339 + $0x28] sm:$0xf]
        %v417 = vld [vmem:[%s339 + $0x2c] sm:$0xf]
        %v418 = vld [vmem:[%s339 + $0x30] sm:$0xf]
        %v419 = vld [vmem:[%s339 + $0x34] sm:$0xf]
        %v420 = vld [vmem:[%s339 + $0x38] sm:$0xf]
        %v421 = vld [vmem:[%s339 + $0x3c] sm:$0xf]
        %v438 = vunpack.c.l.b16 %v390
        %v439 = vunpack.c.l.b16 %v391
        %v440 = vunpack.c.l.b16 %v392
        %v441 = vunpack.c.l.b16 %v393
        %v442 = vunpack.c.l.b16 %v394
        %v443 = vunpack.c.l.b16 %v395
        %v444 = vunpack.c.l.b16 %v396
        %v445 = vunpack.c.l.b16 %v397
        %v446 = vunpack.c.l.b16 %v398
        %v447 = vunpack.c.l.b16 %v399
        %v448 = vunpack.c.l.b16 %v400
        %v449 = vunpack.c.l.b16 %v401
        %v450 = vunpack.c.l.b16 %v402
        %v451 = vunpack.c.l.b16 %v403
        %v452 = vunpack.c.l.b16 %v404
        %v453 = vunpack.c.l.b16 %v405
        %v454 = vpack.c.b16 %v439, %v438
        %v455 = vpack.c.b16 %v441, %v440
        %v456 = vpack.c.b16 %v443, %v442
        %v457 = vpack.c.b16 %v445, %v444
        %v458 = vpack.c.b16 %v447, %v446
        %v459 = vpack.c.b16 %v449, %v448
        %v460 = vpack.c.b16 %v451, %v450
        %v461 = vpack.c.b16 %v453, %v452
        %v486 = vunpack.c.l.b16 %v406
        %v487 = vunpack.c.l.b16 %v407
        %v488 = vunpack.c.l.b16 %v408
        %v489 = vunpack.c.l.b16 %v409
        %v490 = vunpack.c.l.b16 %v410
        %v491 = vunpack.c.l.b16 %v411
        %v492 = vunpack.c.l.b16 %v412
        %v493 = vunpack.c.l.b16 %v413
        %v494 = vunpack.c.l.b16 %v414
        %v495 = vunpack.c.l.b16 %v415
        %v496 = vunpack.c.l.b16 %v416
        %v497 = vunpack.c.l.b16 %v417
        %v498 = vunpack.c.l.b16 %v418
        %v499 = vunpack.c.l.b16 %v419
        %v500 = vunpack.c.l.b16 %v420
        %v501 = vunpack.c.l.b16 %v421
        %v502 = vpack.c.b16 %v487, %v486
        %v503 = vpack.c.b16 %v489, %v488
        %v504 = vpack.c.b16 %v491, %v490
        %v505 = vpack.c.b16 %v493, %v492
        %v506 = vpack.c.b16 %v495, %v494
        %v507 = vpack.c.b16 %v497, %v496
        %v508 = vpack.c.b16 %v499, %v498
        %v509 = vpack.c.b16 %v501, %v500
        %518 = vmatprep.subr.bf16.mxu0 0
        %519 = vmatpush1.bf16.msra.mxu0 %v502
        %520 = vmatprep.subr.bf16.mxu0 0
        %521 = vmatpush1.bf16.msra.mxu0 %v503
        %522 = vmatprep.subr.bf16.mxu0 0
        %523 = vmatpush1.bf16.msra.mxu0 %v504
        %524 = vmatprep.subr.bf16.mxu0 0
        %525 = vmatpush1.bf16.msra.mxu0 %v505
        %526 = vmatprep.subr.bf16.mxu0 0
        %527 = vmatpush1.bf16.msra.mxu0 %v506
        %528 = vmatprep.subr.bf16.mxu0 0
        %529 = vmatpush1.bf16.msra.mxu0 %v507
        %530 = vmatprep.subr.bf16.mxu0 0
        %531 = vmatpush1.bf16.msra.mxu0 %v508
        %532 = vmatprep.subr.bf16.mxu0 0
        %533 = vmatpush1.bf16.msra.mxu0 %v509
        %534 = vmatprep.subr.bf16.mxu0 0
        %535 = vmatpush1.bf16.msra.mxu0 0
        %536 = vmatprep.subr.bf16.mxu0 0
        %537 = vmatpush1.bf16.msra.mxu0 0
        %538 = vmatprep.subr.bf16.mxu0 0
        %539 = vmatpush1.bf16.msra.mxu0 0
        %540 = vmatprep.subr.bf16.mxu0 0
        %541 = vmatpush1.bf16.msra.mxu0 0
        %542 = vmatprep.subr.bf16.mxu0 0
        %543 = vmatpush1.bf16.msra.mxu0 0
        %544 = vmatprep.subr.bf16.mxu0 0
        %545 = vmatpush1.bf16.msra.mxu0 0
        %546 = vmatprep.subr.bf16.mxu0 0
        %547 = vmatpush1.bf16.msra.mxu0 0
        %548 = vmatprep.subr.bf16.mxu0 0
        %549 = vmatpush1.bf16.msra.mxu0 0
        %550 = vmatprep.mubr.bf16.mxu0 0
        %551 = vmatmul.mubr.bf16.gmra.mrb[0].mxu0 %v454
        %v552 = vpop.f32.mrb[0].mxu0
        %v553 = vadd.f32 0.0, %v552
        %v554 = vpop.f32.mrb[0].mxu0
        %v555 = vpop.f32.mrb[0].mxu0
        %v556 = vadd.f32 0.0, %v555
        %v557 = vpop.f32.mrb[0].mxu0
        %558 = vmatprep.mubr.bf16.mxu0 0
        %559 = vmatmul.mubr.bf16.gmra.mrb[0].mxu0 %v455
        %v560 = vpop.f32.mrb[0].mxu0
        %v561 = vadd.f32 0.0, %v560
        %v562 = vpop.f32.mrb[0].mxu0
        %v563 = vpop.f32.mrb[0].mxu0
        %v564 = vadd.f32 0.0, %v563
        %v565 = vpop.f32.mrb[0].mxu0
        %566 = vmatprep.mubr.bf16.mxu0 0
        %567 = vmatmul.mubr.bf16.gmra.mrb[0].mxu0 %v456
        %v568 = vpop.f32.mrb[0].mxu0
        %v569 = vadd.f32 0.0, %v568
        %v570 = vpop.f32.mrb[0].mxu0
        %v571 = vpop.f32.mrb[0].mxu0
        %v572 = vadd.f32 0.0, %v571
        %v573 = vpop.f32.mrb[0].mxu0
        %574 = vmatprep.mubr.bf16.mxu0 0
        %575 = vmatmul.mubr.bf16.gmra.mrb[0].mxu0 %v457
        %v576 = vpop.f32.mrb[0].mxu0
        %v577 = vadd.f32 0.0, %v576
        %v578 = vpop.f32.mrb[0].mxu0
        %v579 = vpop.f32.mrb[0].mxu0
        %v580 = vadd.f32 0.0, %v579
        %v581 = vpop.f32.mrb[0].mxu0
        %582 = vmatprep.mubr.bf16.mxu0 0
        %583 = vmatmul.mubr.bf16.gmra.mrb[0].mxu0 %v458
        %v584 = vpop.f32.mrb[0].mxu0
        %v585 = vadd.f32 0.0, %v584
        %v586 = vpop.f32.mrb[0].mxu0
        %v587 = vpop.f32.mrb[0].mxu0
        %v588 = vadd.f32 0.0, %v587
        %v589 = vpop.f32.mrb[0].mxu0
        %590 = vmatprep.mubr.bf16.mxu0 0
        %591 = vmatmul.mubr.bf16.gmra.mrb[0].mxu0 %v459
        %v592 = vpop.f32.mrb[0].mxu0
        %v593 = vadd.f32 0.0, %v592
        %v594 = vpop.f32.mrb[0].mxu0
        %v595 = vpop.f32.mrb[0].mxu0
        %v596 = vadd.f32 0.0, %v595
        %v597 = vpop.f32.mrb[0].mxu0
        %598 = vmatprep.mubr.bf16.mxu0 0
        %599 = vmatmul.mubr.bf16.gmra.mrb[0].mxu0 %v460
        %v600 = vpop.f32.mrb[0].mxu0
        %v601 = vadd.f32 0.0, %v600
        %v602 = vpop.f32.mrb[0].mxu0
        %v603 = vpop.f32.mrb[0].mxu0
        %v604 = vadd.f32 0.0, %v603
        %v605 = vpop.f32.mrb[0].mxu0
        %606 = vmatprep.mubr.bf16.mxu0 0
        %607 = vmatmul.mubr.bf16.gmra.mrb[0].mxu0 %v461
        %v608 = vpop.f32.mrb[0].mxu0
        %v609 = vadd.f32 0.0, %v608
        %v610 = vpop.f32.mrb[0].mxu0
        %v611 = vpop.f32.mrb[0].mxu0
        %v612 = vadd.f32 0.0, %v611
        %v613 = vpop.f32.mrb[0].mxu0
        %614 = vdwg.mxu0
        %v615 = vadd.f32 %v374, %v553
        %v616 = vadd.f32 %v375, %v556
        %v617 = vadd.f32 %v376, %v561
        %v618 = vadd.f32 %v377, %v564
        %v619 = vadd.f32 %v378, %v569
        %v620 = vadd.f32 %v379, %v572
        %v621 = vadd.f32 %v380, %v577
        %v622 = vadd.f32 %v381, %v580
        %v623 = vadd.f32 %v382, %v585
        %v624 = vadd.f32 %v383, %v588
        %v625 = vadd.f32 %v384, %v593
        %v626 = vadd.f32 %v385, %v596
        %v627 = vadd.f32 %v386, %v601
        %v628 = vadd.f32 %v387, %v604
        %v629 = vadd.f32 %v388, %v609
        %v630 = vadd.f32 %v389, %v612
        %631 = vst [vmem:[#allocation2] sm:$0xff] %v615
        %632 = vst [vmem:[#allocation2 + $0x8] sm:$0xff] %v616
        %633 = vst [vmem:[#allocation2 + $0x10] sm:$0xff] %v617
        %634 = vst [vmem:[#allocation2 + $0x18] sm:$0xff] %v618
        %635 = vst [vmem:[#allocation2 + $0x20] sm:$0xff] %v619
        %636 = vst [vmem:[#allocation2 + $0x28] sm:$0xff] %v620
        %637 = vst [vmem:[#allocation2 + $0x30] sm:$0xff] %v621
        %638 = vst [vmem:[#allocation2 + $0x38] sm:$0xff] %v622
        %639 = vst [vmem:[#allocation2 + $0x40] sm:$0xff] %v623
        %640 = vst [vmem:[#allocation2 + $0x48] sm:$0xff] %v624
        %641 = vst [vmem:[#allocation2 + $0x50] sm:$0xff] %v625
        %642 = vst [vmem:[#allocation2 + $0x58] sm:$0xff] %v626
        %643 = vst [vmem:[#allocation2 + $0x60] sm:$0xff] %v627
        %644 = vst [vmem:[#allocation2 + $0x68] sm:$0xff] %v628
        %645 = vst [vmem:[#allocation2 + $0x70] sm:$0xff] %v629
        %646 = vst [vmem:[#allocation2 + $0x78] sm:$0xff] %v630
        %p647 = scmp.eq.s32.totalorder %s21, 1
        // Predicated region
        $region78: #{resnet_generator_forward.10} parent=68 // pred_check
          %p648 = pneg %p647
        $region79: #{resnet_generator_forward.10} parent=68 // pred_check_branch
          %650 = sbr.rel (%p648) target = $region81
        $region80: #{resnet_generator_forward.10} parent=68 // pred_region
          %v651 = vld [vmem:[#allocation2] sm:$0xff]
          %v652 = vld [vmem:[#allocation2 + $0x8] sm:$0xff]
          %v653 = vld [vmem:[#allocation2 + $0x10] sm:$0xff]
          %v654 = vld [vmem:[#allocation2 + $0x18] sm:$0xff]
          %v655 = vld [vmem:[#allocation2 + $0x20] sm:$0xff]
          %v656 = vld [vmem:[#allocation2 + $0x28] sm:$0xff]
          %v657 = vld [vmem:[#allocation2 + $0x30] sm:$0xff]
          %v658 = vld [vmem:[#allocation2 + $0x38] sm:$0xff]
          %v659 = vld [vmem:[#allocation2 + $0x40] sm:$0xff]
          %v660 = vld [vmem:[#allocation2 + $0x48] sm:$0xff]
          %v661 = vld [vmem:[#allocation2 + $0x50] sm:$0xff]
          %v662 = vld [vmem:[#allocation2 + $0x58] sm:$0xff]
          %v663 = vld [vmem:[#allocation2 + $0x60] sm:$0xff]
          %v664 = vld [vmem:[#allocation2 + $0x68] sm:$0xff]
          %v665 = vld [vmem:[#allocation2 + $0x70] sm:$0xff]
          %v666 = vld [vmem:[#allocation2 + $0x78] sm:$0xff]
          %v667 = vld [vmem:[%s343] sm:$0x1]
          %v669 = vlaneseq
          %v670 = vshrl.u32 %v669, 7
          %v671 = vsub.s32 0, %v670
          %v672 = vrot.slane %v667, %v671
          %v674 = vadd.f32 %v651, %v672
          %v675 = vadd.f32 %v652, %v672
          %v676 = vadd.f32 %v653, %v672
          %v677 = vadd.f32 %v654, %v672
          %v678 = vadd.f32 %v655, %v672
          %v679 = vadd.f32 %v656, %v672
          %v680 = vadd.f32 %v657, %v672
          %v681 = vadd.f32 %v658, %v672
          %v682 = vadd.f32 %v659, %v672
          %v683 = vadd.f32 %v660, %v672
          %v684 = vadd.f32 %v661, %v672
          %v685 = vadd.f32 %v662, %v672
          %v686 = vadd.f32 %v663, %v672
          %v687 = vadd.f32 %v664, %v672
          %v688 = vadd.f32 %v665, %v672
          %v689 = vadd.f32 %v666, %v672
          %690 = vst [vmem:[%s351] sm:$0xff] %v674
          %691 = vst [vmem:[%s351 + $0x8] sm:$0xff] %v675
          %692 = vst [vmem:[%s351 + $0x10] sm:$0xff] %v676
          %693 = vst [vmem:[%s351 + $0x18] sm:$0xff] %v677
          %694 = vst [vmem:[%s351 + $0x20] sm:$0xff] %v678
          %695 = vst [vmem:[%s351 + $0x28] sm:$0xff] %v679
          %696 = vst [vmem:[%s351 + $0x30] sm:$0xff] %v680
          %697 = vst [vmem:[%s351 + $0x38] sm:$0xff] %v681
          %698 = vst [vmem:[%s351 + $0x40] sm:$0xff] %v682
          %699 = vst [vmem:[%s351 + $0x48] sm:$0xff] %v683
          %700 = vst [vmem:[%s351 + $0x50] sm:$0xff] %v684
          %701 = vst [vmem:[%s351 + $0x58] sm:$0xff] %v685
          %702 = vst [vmem:[%s351 + $0x60] sm:$0xff] %v686
          %703 = vst [vmem:[%s351 + $0x68] sm:$0xff] %v687
          %704 = vst [vmem:[%s351 + $0x70] sm:$0xff] %v688
          %705 = vst [vmem:[%s351 + $0x78] sm:$0xff] %v689
        $region81: #{resnet_generator_forward.10} parent=68 // pred_fallthru
          _
        %s706 = smul.u32 16, %s19
        %p707 = scmp.lt.s32.totalorder %s706, 63
        %s708 = scalar_select %p707, %s706, 63
        %p709 = scmp.lt.s32.totalorder %s20, 0
        %s710 = scalar_select %p709, %s20, 0
        %s711 = sadd.s32 %s710, %s708
        %s712 = smul.addr %s711, 8
        %s713 = scalar_lea.vmem %s3, %s712
        // Predicated region
        $region82: #{resnet_generator_forward.10} parent=68 // pred_check
          %p714 = pneg %p135
        $region83: #{resnet_generator_forward.10} parent=68 // pred_check_branch
          %716 = sbr.rel (%p714) target = $region85
        $region84: #{resnet_generator_forward.10} parent=68 // pred_region
          %s717 = smul.u32 16, %s19
        $region85: #{resnet_generator_forward.10} parent=68 // pred_fallthru
          _
      $region69: #{resnet_generator_forward.10} parent=5 // pred_fallthru
        _
      %p718 = scmp.le.s32.totalorder 2, %s9
      // Predicated region
      $region86: #{resnet_generator_forward.10} parent=5 // pred_check
        %p719 = pneg %p718
      $region87: #{resnet_generator_forward.10} parent=5 // pred_check_branch
        %721 = sbr.rel (%p719) target = $region89
      $region88: #{resnet_generator_forward.10} parent=5 // pred_region
        %s722 = ssub.s32 %s9, 2
        // Predicated region
        $region90: #{resnet_generator_forward.10} parent=88 // pred_check
          %p723 = pneg %p141
        $region91: #{resnet_generator_forward.10} parent=88 // pred_check_branch
          %725 = sbr.rel (%p723) target = $region93
        $region92: #{resnet_generator_forward.10} parent=88 // pred_region
          %s726 = smul.u32 16, %s22
          %p727 = scmp.lt.s32.totalorder %s726, 63
          %s728 = scalar_select %p727, %s726, 63
          %p729 = scmp.lt.s32.totalorder %s23, 0
          %s730 = scalar_select %p729, %s23, 0
          %s731 = sadd.s32 %s730, %s728
          %s732 = smul.addr %s731, 8
          %s733 = scalar_lea.vmem %s3, %s732
        $region93: #{resnet_generator_forward.10} parent=88 // pred_fallthru
          _
      $region89: #{resnet_generator_forward.10} parent=5 // pred_fallthru
        _
    $region6: #{resnet_generator_forward.10} parent=1 // loop_footer
      %s13 = sadd.s32 1, %s9
    $region7: #{resnet_generator_forward.10} parent=1 // loop_footer_branch
      %8 = sbr.rel target = $region3
    $region8: #{resnet_generator_forward.10} parent=1 // loop_exit
      _

// kernel: resnet_generator_forward.11
$region0: #{resnet_generator_forward.11}
  #allocation0 [shape = 'u32[]', space=smem, size = 0x4, offset = 0x4, fixed_abs, tag = 'smem constant byte address 0x4 - core index']
  #allocation1 [shape = 'u32[144,128]{1,0:T(1,128)}', space=vmem, size = 0x12000, scoped, tag = 'internal scratch']
  #allocation2 [shape = 'f32[128,128]{1,0:T(8,128)}', space=vmem, size = 0x10000, scoped, tag = 'scratch operand']
  %s0 = inlined_call_operand.vmem [shape: bf16[128,128], index: 0, kind: input, shape index: {}]
  %s1 = inlined_call_operand.vmem [shape: bf16[128,128], index: 1, kind: input, shape index: {}]
  %s2 = inlined_call_operand.vmem [shape: f32[1,128], index: 2, kind: input, shape index: {}]
  %s3 = inlined_call_operand.vmem [shape: f32[128,128], index: 3, kind: output, shape index: {}]
  %s4 = sld [smem:[#allocation0]]
  $region30: #{resnet_generator_forward.11} parent=0
    _
  %s6 = ssub.s32 1, %s4
  %s7 = scalar_select 0, %s6, %s4
  // Predicated region
  $region2: #{resnet_generator_forward.11} parent=0 // pred_check
    _
  $region3: #{resnet_generator_forward.11} parent=0 // pred_check_branch
    %9 = sbr.rel (0) target = $region5
  $region4: #{resnet_generator_forward.11} parent=0 // pred_region
    _
  $region5: #{resnet_generator_forward.11} parent=0 // pred_fallthru
    _
  // Predicated region
  $region6: #{resnet_generator_forward.11} parent=0 // pred_check
    _
  $region7: #{resnet_generator_forward.11} parent=0 // pred_check_branch
    %11 = sbr.rel (0) target = $region9
  $region8: #{resnet_generator_forward.11} parent=0 // pred_region
    _
  $region9: #{resnet_generator_forward.11} parent=0 // pred_fallthru
    _
  // Predicated region
  $region10: #{resnet_generator_forward.11} parent=0 // pred_check
    _
  $region11: #{resnet_generator_forward.11} parent=0 // pred_check_branch
    %13 = sbr.rel (0) target = $region13
  $region12: #{resnet_generator_forward.11} parent=0 // pred_region
    _
  $region13: #{resnet_generator_forward.11} parent=0 // pred_fallthru
    _
  %p15 = scmp.eq.s32.totalorder 0, 0
  // Predicated region
  $region14: #{resnet_generator_forward.11} parent=0 // pred_check
    %p16 = pneg %p15
  $region15: #{resnet_generator_forward.11} parent=0 // pred_check_branch
    %18 = sbr.rel (%p16) target = $region17
  $region16: #{resnet_generator_forward.11} parent=0 // pred_region
    %19 = vst [vmem:[#allocation2] sm:$0xff] 0.0
    %20 = vst [vmem:[#allocation2 + $0x8] sm:$0xff] 0.0
    %21 = vst [vmem:[#allocation2 + $0x10] sm:$0xff] 0.0
    %22 = vst [vmem:[#allocation2 + $0x18] sm:$0xff] 0.0
    %23 = vst [vmem:[#allocation2 + $0x20] sm:$0xff] 0.0
    %24 = vst [vmem:[#allocation2 + $0x28] sm:$0xff] 0.0
    %25 = vst [vmem:[#allocation2 + $0x30] sm:$0xff] 0.0
    %26 = vst [vmem:[#allocation2 + $0x38] sm:$0xff] 0.0
    %27 = vst [vmem:[#allocation2 + $0x40] sm:$0xff] 0.0
    %28 = vst [vmem:[#allocation2 + $0x48] sm:$0xff] 0.0
    %29 = vst [vmem:[#allocation2 + $0x50] sm:$0xff] 0.0
    %30 = vst [vmem:[#allocation2 + $0x58] sm:$0xff] 0.0
    %31 = vst [vmem:[#allocation2 + $0x60] sm:$0xff] 0.0
    %32 = vst [vmem:[#allocation2 + $0x68] sm:$0xff] 0.0
    %33 = vst [vmem:[#allocation2 + $0x70] sm:$0xff] 0.0
    %34 = vst [vmem:[#allocation2 + $0x78] sm:$0xff] 0.0
  $region17: #{resnet_generator_forward.11} parent=0 // pred_fallthru
    _
  %v35 = vld [vmem:[#allocation2] sm:$0xff]
  %v36 = vld [vmem:[#allocation2 + $0x8] sm:$0xff]
  %v37 = vld [vmem:[#allocation2 + $0x10] sm:$0xff]
  %v38 = vld [vmem:[#allocation2 + $0x18] sm:$0xff]
  %v39 = vld [vmem:[#allocation2 + $0x20] sm:$0xff]
  %v40 = vld [vmem:[#allocation2 + $0x28] sm:$0xff]
  %v41 = vld [vmem:[#allocation2 + $0x30] sm:$0xff]
  %v42 = vld [vmem:[#allocation2 + $0x38] sm:$0xff]
  %v43 = vld [vmem:[#allocation2 + $0x40] sm:$0xff]
  %v44 = vld [vmem:[#allocation2 + $0x48] sm:$0xff]
  %v45 = vld [vmem:[#allocation2 + $0x50] sm:$0xff]
  %v46 = vld [vmem:[#allocation2 + $0x58] sm:$0xff]
  %v47 = vld [vmem:[#allocation2 + $0x60] sm:$0xff]
  %v48 = vld [vmem:[#allocation2 + $0x68] sm:$0xff]
  %v49 = vld [vmem:[#allocation2 + $0x70] sm:$0xff]
  %v50 = vld [vmem:[#allocation2 + $0x78] sm:$0xff]
  %v51 = vld [vmem:[%s0] sm:$0xf]
  %v52 = vld [vmem:[%s0 + $0x4] sm:$0xf]
  %v53 = vld [vmem:[%s0 + $0x8] sm:$0xf]
  %v54 = vld [vmem:[%s0 + $0xc] sm:$0xf]
  %v55 = vld [vmem:[%s0 + $0x10] sm:$0xf]
  %v56 = vld [vmem:[%s0 + $0x14] sm:$0xf]
  %v57 = vld [vmem:[%s0 + $0x18] sm:$0xf]
  %v58 = vld [vmem:[%s0 + $0x1c] sm:$0xf]
  %v59 = vld [vmem:[%s0 + $0x20] sm:$0xf]
  %v60 = vld [vmem:[%s0 + $0x24] sm:$0xf]
  %v61 = vld [vmem:[%s0 + $0x28] sm:$0xf]
  %v62 = vld [vmem:[%s0 + $0x2c] sm:$0xf]
  %v63 = vld [vmem:[%s0 + $0x30] sm:$0xf]
  %v64 = vld [vmem:[%s0 + $0x34] sm:$0xf]
  %v65 = vld [vmem:[%s0 + $0x38] sm:$0xf]
  %v66 = vld [vmem:[%s0 + $0x3c] sm:$0xf]
  %v67 = vld [vmem:[%s1] sm:$0xf]
  %v68 = vld [vmem:[%s1 + $0x4] sm:$0xf]
  %v69 = vld [vmem:[%s1 + $0x8] sm:$0xf]
  %v70 = vld [vmem:[%s1 + $0xc] sm:$0xf]
  %v71 = vld [vmem:[%s1 + $0x10] sm:$0xf]
  %v72 = vld [vmem:[%s1 + $0x14] sm:$0xf]
  %v73 = vld [vmem:[%s1 + $0x18] sm:$0xf]
  %v74 = vld [vmem:[%s1 + $0x1c] sm:$0xf]
  %v75 = vld [vmem:[%s1 + $0x20] sm:$0xf]
  %v76 = vld [vmem:[%s1 + $0x24] sm:$0xf]
  %v77 = vld [vmem:[%s1 + $0x28] sm:$0xf]
  %v78 = vld [vmem:[%s1 + $0x2c] sm:$0xf]
  %v79 = vld [vmem:[%s1 + $0x30] sm:$0xf]
  %v80 = vld [vmem:[%s1 + $0x34] sm:$0xf]
  %v81 = vld [vmem:[%s1 + $0x38] sm:$0xf]
  %v82 = vld [vmem:[%s1 + $0x3c] sm:$0xf]
  %v99 = vunpack.c.l.b16 %v51
  %v100 = vunpack.c.l.b16 %v52
  %v101 = vunpack.c.l.b16 %v53
  %v102 = vunpack.c.l.b16 %v54
  %v103 = vunpack.c.l.b16 %v55
  %v104 = vunpack.c.l.b16 %v56
  %v105 = vunpack.c.l.b16 %v57
  %v106 = vunpack.c.l.b16 %v58
  %v107 = vunpack.c.l.b16 %v59
  %v108 = vunpack.c.l.b16 %v60
  %v109 = vunpack.c.l.b16 %v61
  %v110 = vunpack.c.l.b16 %v62
  %v111 = vunpack.c.l.b16 %v63
  %v112 = vunpack.c.l.b16 %v64
  %v113 = vunpack.c.l.b16 %v65
  %v114 = vunpack.c.l.b16 %v66
  %v115 = vpack.c.b16 %v100, %v99
  %v116 = vpack.c.b16 %v102, %v101
  %v117 = vpack.c.b16 %v104, %v103
  %v118 = vpack.c.b16 %v106, %v105
  %v119 = vpack.c.b16 %v108, %v107
  %v120 = vpack.c.b16 %v110, %v109
  %v121 = vpack.c.b16 %v112, %v111
  %v122 = vpack.c.b16 %v114, %v113
  %v147 = vunpack.c.l.b16 %v67
  %v148 = vunpack.c.l.b16 %v68
  %v149 = vunpack.c.l.b16 %v69
  %v150 = vunpack.c.l.b16 %v70
  %v151 = vunpack.c.l.b16 %v71
  %v152 = vunpack.c.l.b16 %v72
  %v153 = vunpack.c.l.b16 %v73
  %v154 = vunpack.c.l.b16 %v74
  %v155 = vunpack.c.l.b16 %v75
  %v156 = vunpack.c.l.b16 %v76
  %v157 = vunpack.c.l.b16 %v77
  %v158 = vunpack.c.l.b16 %v78
  %v159 = vunpack.c.l.b16 %v79
  %v160 = vunpack.c.l.b16 %v80
  %v161 = vunpack.c.l.b16 %v81
  %v162 = vunpack.c.l.b16 %v82
  %v163 = vpack.c.b16 %v148, %v147
  %v164 = vpack.c.b16 %v150, %v149
  %v165 = vpack.c.b16 %v152, %v151
  %v166 = vpack.c.b16 %v154, %v153
  %v167 = vpack.c.b16 %v156, %v155
  %v168 = vpack.c.b16 %v158, %v157
  %v169 = vpack.c.b16 %v160, %v159
  %v170 = vpack.c.b16 %v162, %v161
  %179 = vmatprep.subr.bf16.mxu0 0
  %180 = vmatpush1.bf16.msra.mxu0 %v163
  %181 = vmatprep.subr.bf16.mxu0 0
  %182 = vmatpush1.bf16.msra.mxu0 %v164
  %183 = vmatprep.subr.bf16.mxu0 0
  %184 = vmatpush1.bf16.msra.mxu0 %v165
  %185 = vmatprep.subr.bf16.mxu0 0
  %186 = vmatpush1.bf16.msra.mxu0 %v166
  %187 = vmatprep.subr.bf16.mxu0 0
  %188 = vmatpush1.bf16.msra.mxu0 %v167
  %189 = vmatprep.subr.bf16.mxu0 0
  %190 = vmatpush1.bf16.msra.mxu0 %v168
  %191 = vmatprep.subr.bf16.mxu0 0
  %192 = vmatpush1.bf16.msra.mxu0 %v169
  %193 = vmatprep.subr.bf16.mxu0 0
  %194 = vmatpush1.bf16.msra.mxu0 %v170
  %195 = vmatprep.subr.bf16.mxu0 0
  %196 = vmatpush1.bf16.msra.mxu0 0
  %197 = vmatprep.subr.bf16.mxu0 0
  %198 = vmatpush1.bf16.msra.mxu0 0
  %199 = vmatprep.subr.bf16.mxu0 0
  %200 = vmatpush1.bf16.msra.mxu0 0
  %201 = vmatprep.subr.bf16.mxu0 0
  %202 = vmatpush1.bf16.msra.mxu0 0
  %203 = vmatprep.subr.bf16.mxu0 0
  %204 = vmatpush1.bf16.msra.mxu0 0
  %205 = vmatprep.subr.bf16.mxu0 0
  %206 = vmatpush1.bf16.msra.mxu0 0
  %207 = vmatprep.subr.bf16.mxu0 0
  %208 = vmatpush1.bf16.msra.mxu0 0
  %209 = vmatprep.subr.bf16.mxu0 0
  %210 = vmatpush1.bf16.msra.mxu0 0
  %211 = vmatprep.mubr.bf16.mxu0 0
  %212 = vmatmul.mubr.bf16.gmra.mrb[0].mxu0 %v115
  %v213 = vpop.f32.mrb[0].mxu0
  %v214 = vadd.f32 0.0, %v213
  %v215 = vpop.f32.mrb[0].mxu0
  %v216 = vpop.f32.mrb[0].mxu0
  %v217 = vadd.f32 0.0, %v216
  %v218 = vpop.f32.mrb[0].mxu0
  %219 = vmatprep.mubr.bf16.mxu0 0
  %220 = vmatmul.mubr.bf16.gmra.mrb[0].mxu0 %v116
  %v221 = vpop.f32.mrb[0].mxu0
  %v222 = vadd.f32 0.0, %v221
  %v223 = vpop.f32.mrb[0].mxu0
  %v224 = vpop.f32.mrb[0].mxu0
  %v225 = vadd.f32 0.0, %v224
  %v226 = vpop.f32.mrb[0].mxu0
  %227 = vmatprep.mubr.bf16.mxu0 0
  %228 = vmatmul.mubr.bf16.gmra.mrb[0].mxu0 %v117
  %v229 = vpop.f32.mrb[0].mxu0
  %v230 = vadd.f32 0.0, %v229
  %v231 = vpop.f32.mrb[0].mxu0
  %v232 = vpop.f32.mrb[0].mxu0
  %v233 = vadd.f32 0.0, %v232
  %v234 = vpop.f32.mrb[0].mxu0
  %235 = vmatprep.mubr.bf16.mxu0 0
  %236 = vmatmul.mubr.bf16.gmra.mrb[0].mxu0 %v118
  %v237 = vpop.f32.mrb[0].mxu0
  %v238 = vadd.f32 0.0, %v237
  %v239 = vpop.f32.mrb[0].mxu0
  %v240 = vpop.f32.mrb[0].mxu0
  %v241 = vadd.f32 0.0, %v240
  %v242 = vpop.f32.mrb[0].mxu0
  %243 = vmatprep.mubr.bf16.mxu0 0
  %244 = vmatmul.mubr.bf16.gmra.mrb[0].mxu0 %v119
  %v245 = vpop.f32.mrb[0].mxu0
  %v246 = vadd.f32 0.0, %v245
  %v247 = vpop.f32.mrb[0].mxu0
  %v248 = vpop.f32.mrb[0].mxu0
  %v249 = vadd.f32 0.0, %v248
  %v250 = vpop.f32.mrb[0].mxu0
  %251 = vmatprep.mubr.bf16.mxu0 0
  %252 = vmatmul.mubr.bf16.gmra.mrb[0].mxu0 %v120
  %v253 = vpop.f32.mrb[0].mxu0
  %v254 = vadd.f32 0.0, %v253
  %v255 = vpop.f32.mrb[0].mxu0
  %v256 = vpop.f32.mrb[0].mxu0
  %v257 = vadd.f32 0.0, %v256
  %v258 = vpop.f32.mrb[0].mxu0
  %259 = vmatprep.mubr.bf16.mxu0 0
  %260 = vmatmul.mubr.bf16.gmra.mrb[0].mxu0 %v121
  %v261 = vpop.f32.mrb[0].mxu0
  %v262 = vadd.f32 0.0, %v261
  %v263 = vpop.f32.mrb[0].mxu0
  %v264 = vpop.f32.mrb[0].mxu0
  %v265 = vadd.f32 0.0, %v264
  %v266 = vpop.f32.mrb[0].mxu0
  %267 = vmatprep.mubr.bf16.mxu0 0
  %268 = vmatmul.mubr.bf16.gmra.mrb[0].mxu0 %v122
  %v269 = vpop.f32.mrb[0].mxu0
  %v270 = vadd.f32 0.0, %v269
  %v271 = vpop.f32.mrb[0].mxu0
  %v272 = vpop.f32.mrb[0].mxu0
  %v273 = vadd.f32 0.0, %v272
  %v274 = vpop.f32.mrb[0].mxu0
  %275 = vdwg.mxu0
  %v276 = vadd.f32 %v35, %v214
  %v277 = vadd.f32 %v36, %v217
  %v278 = vadd.f32 %v37, %v222
  %v279 = vadd.f32 %v38, %v225
  %v280 = vadd.f32 %v39, %v230
  %v281 = vadd.f32 %v40, %v233
  %v282 = vadd.f32 %v41, %v238
  %v283 = vadd.f32 %v42, %v241
  %v284 = vadd.f32 %v43, %v246
  %v285 = vadd.f32 %v44, %v249
  %v286 = vadd.f32 %v45, %v254
  %v287 = vadd.f32 %v46, %v257
  %v288 = vadd.f32 %v47, %v262
  %v289 = vadd.f32 %v48, %v265
  %v290 = vadd.f32 %v49, %v270
  %v291 = vadd.f32 %v50, %v273
  %292 = vst [vmem:[#allocation2] sm:$0xff] %v276
  %293 = vst [vmem:[#allocation2 + $0x8] sm:$0xff] %v277
  %294 = vst [vmem:[#allocation2 + $0x10] sm:$0xff] %v278
  %295 = vst [vmem:[#allocation2 + $0x18] sm:$0xff] %v279
  %296 = vst [vmem:[#allocation2 + $0x20] sm:$0xff] %v280
  %297 = vst [vmem:[#allocation2 + $0x28] sm:$0xff] %v281
  %298 = vst [vmem:[#allocation2 + $0x30] sm:$0xff] %v282
  %299 = vst [vmem:[#allocation2 + $0x38] sm:$0xff] %v283
  %300 = vst [vmem:[#allocation2 + $0x40] sm:$0xff] %v284
  %301 = vst [vmem:[#allocation2 + $0x48] sm:$0xff] %v285
  %302 = vst [vmem:[#allocation2 + $0x50] sm:$0xff] %v286
  %303 = vst [vmem:[#allocation2 + $0x58] sm:$0xff] %v287
  %304 = vst [vmem:[#allocation2 + $0x60] sm:$0xff] %v288
  %305 = vst [vmem:[#allocation2 + $0x68] sm:$0xff] %v289
  %306 = vst [vmem:[#allocation2 + $0x70] sm:$0xff] %v290
  %307 = vst [vmem:[#allocation2 + $0x78] sm:$0xff] %v291
  // Predicated region
  $region18: #{resnet_generator_forward.11} parent=0 // pred_check
    %p308 = pneg %p15
  $region19: #{resnet_generator_forward.11} parent=0 // pred_check_branch
    %310 = sbr.rel (%p308) target = $region21
  $region20: #{resnet_generator_forward.11} parent=0 // pred_region
    %v311 = vld [vmem:[#allocation2] sm:$0xff]
    %v312 = vld [vmem:[#allocation2 + $0x8] sm:$0xff]
    %v313 = vld [vmem:[#allocation2 + $0x10] sm:$0xff]
    %v314 = vld [vmem:[#allocation2 + $0x18] sm:$0xff]
    %v315 = vld [vmem:[#allocation2 + $0x20] sm:$0xff]
    %v316 = vld [vmem:[#allocation2 + $0x28] sm:$0xff]
    %v317 = vld [vmem:[#allocation2 + $0x30] sm:$0xff]
    %v318 = vld [vmem:[#allocation2 + $0x38] sm:$0xff]
    %v319 = vld [vmem:[#allocation2 + $0x40] sm:$0xff]
    %v320 = vld [vmem:[#allocation2 + $0x48] sm:$0xff]
    %v321 = vld [vmem:[#allocation2 + $0x50] sm:$0xff]
    %v322 = vld [vmem:[#allocation2 + $0x58] sm:$0xff]
    %v323 = vld [vmem:[#allocation2 + $0x60] sm:$0xff]
    %v324 = vld [vmem:[#allocation2 + $0x68] sm:$0xff]
    %v325 = vld [vmem:[#allocation2 + $0x70] sm:$0xff]
    %v326 = vld [vmem:[#allocation2 + $0x78] sm:$0xff]
    %v327 = vld [vmem:[%s2] sm:$0x1]
    %v329 = vlaneseq
    %v330 = vshrl.u32 %v329, 7
    %v331 = vsub.s32 0, %v330
    %v332 = vrot.slane %v327, %v331
    %v334 = vadd.f32 %v311, %v332
    %v335 = vadd.f32 %v312, %v332
    %v336 = vadd.f32 %v313, %v332
    %v337 = vadd.f32 %v314, %v332
    %v338 = vadd.f32 %v315, %v332
    %v339 = vadd.f32 %v316, %v332
    %v340 = vadd.f32 %v317, %v332
    %v341 = vadd.f32 %v318, %v332
    %v342 = vadd.f32 %v319, %v332
    %v343 = vadd.f32 %v320, %v332
    %v344 = vadd.f32 %v321, %v332
    %v345 = vadd.f32 %v322, %v332
    %v346 = vadd.f32 %v323, %v332
    %v347 = vadd.f32 %v324, %v332
    %v348 = vadd.f32 %v325, %v332
    %v349 = vadd.f32 %v326, %v332
    %350 = vst [vmem:[%s3] sm:$0xff] %v334
    %351 = vst [vmem:[%s3 + $0x8] sm:$0xff] %v335
    %352 = vst [vmem:[%s3 + $0x10] sm:$0xff] %v336
    %353 = vst [vmem:[%s3 + $0x18] sm:$0xff] %v337
    %354 = vst [vmem:[%s3 + $0x20] sm:$0xff] %v338
    %355 = vst [vmem:[%s3 + $0x28] sm:$0xff] %v339
    %356 = vst [vmem:[%s3 + $0x30] sm:$0xff] %v340
    %357 = vst [vmem:[%s3 + $0x38] sm:$0xff] %v341
    %358 = vst [vmem:[%s3 + $0x40] sm:$0xff] %v342
    %359 = vst [vmem:[%s3 + $0x48] sm:$0xff] %v343
    %360 = vst [vmem:[%s3 + $0x50] sm:$0xff] %v344
    %361 = vst [vmem:[%s3 + $0x58] sm:$0xff] %v345
    %362 = vst [vmem:[%s3 + $0x60] sm:$0xff] %v346
    %363 = vst [vmem:[%s3 + $0x68] sm:$0xff] %v347
    %364 = vst [vmem:[%s3 + $0x70] sm:$0xff] %v348
    %365 = vst [vmem:[%s3 + $0x78] sm:$0xff] %v349
  $region21: #{resnet_generator_forward.11} parent=0 // pred_fallthru
    _
  // Predicated region
  $region22: #{resnet_generator_forward.11} parent=0 // pred_check
    _
  $region23: #{resnet_generator_forward.11} parent=0 // pred_check_branch
    %367 = sbr.rel (0) target = $region25
  $region24: #{resnet_generator_forward.11} parent=0 // pred_region
    _
  $region25: #{resnet_generator_forward.11} parent=0 // pred_fallthru
    _
  // Predicated region
  $region26: #{resnet_generator_forward.11} parent=0 // pred_check
    _
  $region27: #{resnet_generator_forward.11} parent=0 // pred_check_branch
    %369 = sbr.rel (0) target = $region29
  $region28: #{resnet_generator_forward.11} parent=0 // pred_region
    _
  $region29: #{resnet_generator_forward.11} parent=0 // pred_fallthru
    _

// kernel: resnet_generator_forward.12
$region0: #{resnet_generator_forward.12}
  #allocation0 [shape = 'u32[]', space=smem, size = 0x4, offset = 0x4, fixed_abs, tag = 'smem constant byte address 0x4 - core index']
  #allocation1 [shape = 'u32[144,128]{1,0:T(1,128)}', space=vmem, size = 0x12000, scoped, tag = 'internal scratch']
  #allocation2 [shape = 'f32[32,128]{1,0:T(8,128)}', space=vmem, size = 0x4000, scoped, tag = 'scratch operand']
  %s0 = inlined_call_operand.vmem [shape: bf16[32,256], index: 0, kind: input, shape index: {}]
  %s1 = inlined_call_operand.vmem [shape: bf16[256,128], index: 1, kind: input, shape index: {}]
  %s2 = inlined_call_operand.vmem [shape: f32[1,128], index: 2, kind: input, shape index: {}]
  %s3 = inlined_call_operand.vmem [shape: f32[32,128], index: 3, kind: output, shape index: {}]
  %s4 = sld [smem:[#allocation0]]
  $region94: #{resnet_generator_forward.12} parent=0
    _
  %s6 = ssub.s32 1, %s4
  %s7 = scalar_select 0, %s6, %s4
  $region1: #{resnet_generator_forward.12} parent=0
    #allocation3 [shape = 'u8[16384]{0}', space=vmem, size = 0x4000, scoped, tag = 'input window, operand 0']
    loop: start=0, step=1, limit=4
    $region2: #{resnet_generator_forward.12} parent=1 // loop_pre_header
      _
    $region3: #{resnet_generator_forward.12} parent=1 // loop_header
      %s9 = sphi 0, %s13
      %p10 = scmp.ge.s32.totalorder %s9, 4
      %s16 = sphi 0, %s35
      %s17 = sphi 0, %s31
      %s18 = sphi 0, %s27
      %s19 = sphi 0, %s16
      %s20 = sphi 0, %s17
      %s21 = sphi 0, %s18
      %s22 = sphi 0, %s19
      %s23 = sphi 0, %s20
      %s24 = sphi 0, %s21
      %s40 = sphi 0, %s42
      %s43 = sphi 0, %s40
      %s44 = sphi 0, %s43
      %s60 = sphi 0, %s44
      %s68 = sphi 0, %s70
      %s71 = sphi 0, %s68
      %s72 = sphi 0, %s71
      %s88 = sphi 0, %s72
      %s94 = sphi 0, %s96
      %s97 = sphi 0, %s94
      %s98 = sphi 0, %s97
      %s114 = sphi 0, %s98
      %s122 = sphi 0, %s124
      %s125 = sphi 0, %s122
      %s126 = sphi 0, %s125
      %s142 = sphi 0, %s126
    $region4: #{resnet_generator_forward.12} parent=1 // loop_header_branch
      %12 = sbr.rel (%p10) target = $region8
    $region5: #{resnet_generator_forward.12} parent=1 // loop_body
      %s14 = ssub.s32 %s9, 1
      %s15 = ssub.s32 %s9, 2
      %s25 = sadd.s32 1, %s18
      %p26 = scmp.ge.s32.totalorder %s25, 2
      %s27 = scalar_select %p26, 0, %s25
      %s28 = sadd.s32 1, %s17
      %s29 = scalar_select %p26, %s28, %s17
      %p30 = scmp.ge.s32.totalorder %s29, 1
      %s31 = scalar_select %p30, 0, %s29
      %s32 = sadd.s32 1, %s16
      %s33 = scalar_select %p30, %s32, %s16
      %p34 = scmp.ge.s32.totalorder %s33, 1
      %s35 = scalar_select %p34, 0, %s33
      %s36 = ssub.s32 %s16, %s35
      %s37 = ssub.s32 %s18, %s27
      %s38 = sor.u32 %s36, %s37
      %p39 = scmp.eq.s32.totalorder %s38, 0
      %s41 = sadd.s32 %s40, 1
      %s42 = scalar_select %p39, %s40, %s41
      %p45 = pneg %p39
      %p46 = scmp.eq.s32.totalorder %s9, 1
      %p47 = por %p45, %p46
      %p48 = scmp.ne.s32.totalorder %s40, %s43
      %p49 = scmp.eq.s32.totalorder %s9, 0
      %p50 = por %p48, %p49
      %p51 = scmp.ne.s32.totalorder %s40, %s43
      %p52 = scmp.eq.s32.totalorder %s14, 1
      %p53 = por %p51, %p52
      %p54 = scmp.ne.s32.totalorder %s43, %s44
      %p55 = scmp.eq.s32.totalorder %s14, 0
      %p56 = por %p54, %p55
      %p57 = scmp.ne.s32.totalorder %s43, %s44
      %p58 = scmp.eq.s32.totalorder %s15, 1
      %p59 = por %p57, %p58
      %p61 = scmp.ne.s32.totalorder %s44, %s60
      %p62 = scmp.eq.s32.totalorder %s15, 0
      %p63 = por %p61, %p62
      %s64 = ssub.s32 %s18, %s27
      %s65 = ssub.s32 %s17, %s31
      %s66 = sor.u32 %s64, %s65
      %p67 = scmp.eq.s32.totalorder %s66, 0
      %s69 = sadd.s32 %s68, 1
      %s70 = scalar_select %p67, %s68, %s69
      %p73 = pneg %p67
      %p74 = scmp.eq.s32.totalorder %s9, 1
      %p75 = por %p73, %p74
      %p76 = scmp.ne.s32.totalorder %s68, %s71
      %p77 = scmp.eq.s32.totalorder %s9, 0
      %p78 = por %p76, %p77
      %p79 = scmp.ne.s32.totalorder %s68, %s71
      %p80 = scmp.eq.s32.totalorder %s14, 1
      %p81 = por %p79, %p80
      %p82 = scmp.ne.s32.totalorder %s71, %s72
      %p83 = scmp.eq.s32.totalorder %s14, 0
      %p84 = por %p82, %p83
      %p85 = scmp.ne.s32.totalorder %s71, %s72
      %p86 = scmp.eq.s32.totalorder %s15, 1
      %p87 = por %p85, %p86
      %p89 = scmp.ne.s32.totalorder %s72, %s88
      %p90 = scmp.eq.s32.totalorder %s15, 0
      %p91 = por %p89, %p90
      %s92 = ssub.s32 %s17, %s31
      %p93 = scmp.eq.s32.totalorder %s92, 0
      %s95 = sadd.s32 %s94, 1
      %s96 = scalar_select %p93, %s94, %s95
      %p99 = pneg %p93
      %p100 = scmp.eq.s32.totalorder %s9, 1
      %p101 = por %p99, %p100
      %p102 = scmp.ne.s32.totalorder %s94, %s97
      %p103 = scmp.eq.s32.totalorder %s9, 0
      %p104 = por %p102, %p103
      %p105 = scmp.ne.s32.totalorder %s94, %s97
      %p106 = scmp.eq.s32.totalorder %s14, 1
      %p107 = por %p105, %p106
      %p108 = scmp.ne.s32.totalorder %s97, %s98
      %p109 = scmp.eq.s32.totalorder %s14, 0
      %p110 = por %p108, %p109
      %p111 = scmp.ne.s32.totalorder %s97, %s98
      %p112 = scmp.eq.s32.totalorder %s15, 1
      %p113 = por %p111, %p112
      %p115 = scmp.ne.s32.totalorder %s98, %s114
      %p116 = scmp.eq.s32.totalorder %s15, 0
      %p117 = por %p115, %p116
      %s118 = ssub.s32 %s16, %s35
      %s119 = ssub.s32 %s17, %s31
      %s120 = sor.u32 %s118, %s119
      %p121 = scmp.eq.s32.totalorder %s120, 0
      %s123 = sadd.s32 %s122, 1
      %s124 = scalar_select %p121, %s122, %s123
      %p127 = pneg %p121
      %p128 = scmp.eq.s32.totalorder %s9, 1
      %p129 = por %p127, %p128
      %p130 = scmp.ne.s32.totalorder %s122, %s125
      %p131 = scmp.eq.s32.totalorder %s9, 0
      %p132 = por %p130, %p131
      %p133 = scmp.ne.s32.totalorder %s122, %s125
      %p134 = scmp.eq.s32.totalorder %s14, 1
      %p135 = por %p133, %p134
      %p136 = scmp.ne.s32.totalorder %s125, %s126
      %p137 = scmp.eq.s32.totalorder %s14, 0
      %p138 = por %p136, %p137
      %p139 = scmp.ne.s32.totalorder %s125, %s126
      %p140 = scmp.eq.s32.totalorder %s15, 1
      %p141 = por %p139, %p140
      %p143 = scmp.ne.s32.totalorder %s126, %s142
      %p144 = scmp.eq.s32.totalorder %s15, 0
      %p145 = por %p143, %p144
      %p146 = scmp.le.s32.totalorder 1, %s9
      %p147 = scmp.lt.s32.totalorder %s9, 3
      %p148 = pnand %p146, %p147
      %p149 = pneg %p148
      // Predicated region
      $region9: #{resnet_generator_forward.12} parent=5 // pred_check
        _
      $region10: #{resnet_generator_forward.12} parent=5 // pred_check_branch
        %151 = sbr.rel (%p148) target = $region12
      $region11: #{resnet_generator_forward.12} parent=5 // pred_region
        %s152 = ssub.s32 %s9, 1
        // Predicated region
        $region13: #{resnet_generator_forward.12} parent=11 // pred_check
          %p153 = pneg %p110
        $region14: #{resnet_generator_forward.12} parent=11 // pred_check_branch
          %155 = sbr.rel (%p153) target = $region16
        $region15: #{resnet_generator_forward.12} parent=11 // pred_region
          %p156 = scmp.lt.s32.totalorder %s20, 0
          %s157 = scalar_select %p156, %s20, 0
          %s158 = scalar_lea.vmem %s2, %s157
        $region16: #{resnet_generator_forward.12} parent=11 // pred_fallthru
          _
      $region12: #{resnet_generator_forward.12} parent=5 // pred_fallthru
        _
      %p159 = scmp.lt.s32.totalorder %s9, 2
      // Predicated region
      $region17: #{resnet_generator_forward.12} parent=5 // pred_check
        %p160 = pneg %p159
      $region18: #{resnet_generator_forward.12} parent=5 // pred_check_branch
        %162 = sbr.rel (%p160) target = $region20
      $region19: #{resnet_generator_forward.12} parent=5 // pred_region
        // Predicated region
        $region21: #{resnet_generator_forward.12} parent=19 // pred_check
          %p163 = pneg %p50
        $region22: #{resnet_generator_forward.12} parent=19 // pred_check_branch
          %165 = sbr.rel (%p163) target = $region24
        $region23: #{resnet_generator_forward.12} parent=19 // pred_region
          %s166 = sand.u32 %s40, 1
          %s167 = sand.u32 %s40, 1
          %s168 = smul.addr %s167, 16
          %s169 = scalar_lea.vmem [#allocation3], %s168
          %s170 = smul.u32 4, %s16
          %s171 = smul.addr %s170, 2
          %s172 = sadd.s32 %s18, %s171
          %s173 = smul.addr %s172, 4
          %s174 = scalar_lea.vmem %s0, %s173
          // Predicated region
          $region25: #{resnet_generator_forward.12} parent=23 // pred_check
            _
          $region26: #{resnet_generator_forward.12} parent=23 // pred_check_branch
            %176 = sbr.rel (0) target = $region28
          $region27: #{resnet_generator_forward.12} parent=23 // pred_region
            // Predicated region
            $region29: #{resnet_generator_forward.12} parent=27 // pred_check
              _
            $region30: #{resnet_generator_forward.12} parent=27 // pred_check_branch
              %178 = sbr.rel target = $region32
            $region31: #{resnet_generator_forward.12} parent=27 // pred_region
              // Predicated region
              $region44: #{resnet_generator_forward.12} parent=31 // pred_check
                _
              $region45: #{resnet_generator_forward.12} parent=31 // pred_check_branch
                %199 = sbr.rel (0) target = $region47
              $region46: #{resnet_generator_forward.12} parent=31 // pred_region
                loop: start=0, step=1, limit=1
                $region48: #{resnet_generator_forward.12} parent=46 // loop_pre_header
                  _
                $region49: #{resnet_generator_forward.12} parent=46 // loop_header
                  %s201 = sphi 0, %s205
                  %p202 = scmp.ge.s32.totalorder %s201, 1
                  %s206 = sphi %s174, %s174
                  %s207 = sphi %s169, %s169
                $region50: #{resnet_generator_forward.12} parent=46 // loop_header_branch
                  %204 = sbr.rel (%p202) target = $region54
                $region51: #{resnet_generator_forward.12} parent=46 // loop_body
                  _
                $region52: #{resnet_generator_forward.12} parent=46 // loop_footer
                  %s205 = sadd.s32 1, %s201
                $region53: #{resnet_generator_forward.12} parent=46 // loop_footer_branch
                  %200 = sbr.rel target = $region49
                $region54: #{resnet_generator_forward.12} parent=46 // loop_exit
                  _
                loop: start=0, step=1, limit=1
                $region55: #{resnet_generator_forward.12} parent=46 // loop_pre_header
                  _
                $region56: #{resnet_generator_forward.12} parent=46 // loop_header
                  %s210 = sphi 0, %s214
                  %p211 = scmp.ge.s32.totalorder %s210, 1
                  %s215 = sphi %s174, %s174
                  %s216 = sphi %s169, %s169
                $region57: #{resnet_generator_forward.12} parent=46 // loop_header_branch
                  %213 = sbr.rel (%p211) target = $region61
                $region58: #{resnet_generator_forward.12} parent=46 // loop_body
                  %v217 = vld [vmem:[%s215] sm:$0xf]
                  %218 = vst [vmem:[%s216] sm:$0xf] %v217
                  %v219 = vld [vmem:[%s215 + $0x8] sm:$0xf]
                  %220 = vst [vmem:[%s216 + $0x4] sm:$0xf] %v219
                  %v221 = vld [vmem:[%s215 + $0x10] sm:$0xf]
                  %222 = vst [vmem:[%s216 + $0x8] sm:$0xf] %v221
                  %v223 = vld [vmem:[%s215 + $0x18] sm:$0xf]
                  %224 = vst [vmem:[%s216 + $0xc] sm:$0xf] %v223
                $region59: #{resnet_generator_forward.12} parent=46 // loop_footer
                  %s214 = sadd.s32 1, %s210
                $region60: #{resnet_generator_forward.12} parent=46 // loop_footer_branch
                  %209 = sbr.rel target = $region56
                $region61: #{resnet_generator_forward.12} parent=46 // loop_exit
                  _
              $region47: #{resnet_generator_forward.12} parent=31 // pred_fallthru
                _
            $region32: #{resnet_generator_forward.12} parent=27 // pred_fallthru
              _
            // Predicated region
            $region33: #{resnet_generator_forward.12} parent=27 // pred_check
              _
            $region34: #{resnet_generator_forward.12} parent=27 // pred_check_branch
              %180 = sbr.rel (0) target = $region36
            $region35: #{resnet_generator_forward.12} parent=27 // pred_region
              loop: start=0, step=1, limit=1
              $region37: #{resnet_generator_forward.12} parent=35 // loop_pre_header
                _
              $region38: #{resnet_generator_forward.12} parent=35 // loop_header
                %s183 = sphi 0, %s187
                %p184 = scmp.ge.s32.totalorder %s183, 1
                %s188 = sphi %s174, %s174
                %s189 = sphi %s169, %s169
              $region39: #{resnet_generator_forward.12} parent=35 // loop_header_branch
                %186 = sbr.rel (%p184) target = $region43
              $region40: #{resnet_generator_forward.12} parent=35 // loop_body
                %v190 = vld [vmem:[%s188] sm:$0xf]
                %191 = vst [vmem:[%s189] sm:$0xf] %v190
                %v192 = vld [vmem:[%s188 + $0x8] sm:$0xf]
                %193 = vst [vmem:[%s189 + $0x4] sm:$0xf] %v192
                %v194 = vld [vmem:[%s188 + $0x10] sm:$0xf]
                %195 = vst [vmem:[%s189 + $0x8] sm:$0xf] %v194
                %v196 = vld [vmem:[%s188 + $0x18] sm:$0xf]
                %197 = vst [vmem:[%s189 + $0xc] sm:$0xf] %v196
              $region41: #{resnet_generator_forward.12} parent=35 // loop_footer
                %s187 = sadd.s32 1, %s183
              $region42: #{resnet_generator_forward.12} parent=35 // loop_footer_branch
                %182 = sbr.rel target = $region38
              $region43: #{resnet_generator_forward.12} parent=35 // loop_exit
                _
            $region36: #{resnet_generator_forward.12} parent=27 // pred_fallthru
              _
          $region28: #{resnet_generator_forward.12} parent=23 // pred_fallthru
            _
          %225 = vnop
        $region24: #{resnet_generator_forward.12} parent=19 // pred_fallthru
          _
        // Predicated region
        $region62: #{resnet_generator_forward.12} parent=19 // pred_check
          %p226 = pneg %p78
        $region63: #{resnet_generator_forward.12} parent=19 // pred_check_branch
          %228 = sbr.rel (%p226) target = $region65
        $region64: #{resnet_generator_forward.12} parent=19 // pred_region
          %s229 = smul.u32 16, %s18
          %p230 = scmp.lt.s32.totalorder %s229, 31
          %s231 = scalar_select %p230, %s229, 31
          %p232 = scmp.lt.s32.totalorder %s17, 0
          %s233 = scalar_select %p232, %s17, 0
          %s234 = sadd.s32 %s233, %s231
          %s235 = smul.addr %s234, 4
          %s236 = scalar_lea.vmem %s1, %s235
          %s237 = smul.u32 16, %s18
        $region65: #{resnet_generator_forward.12} parent=19 // pred_fallthru
          _
      $region20: #{resnet_generator_forward.12} parent=5 // pred_fallthru
        _
      %p238 = scmp.le.s32.totalorder 1, %s9
      %p239 = scmp.lt.s32.totalorder %s9, 3
      %p240 = pnand %p238, %p239
      %p241 = pneg %p240
      // Predicated region
      $region66: #{resnet_generator_forward.12} parent=5 // pred_check
        _
      $region67: #{resnet_generator_forward.12} parent=5 // pred_check_branch
        %243 = sbr.rel (%p240) target = $region69
      $region68: #{resnet_generator_forward.12} parent=5 // pred_region
        %s244 = ssub.s32 %s9, 1
        %s245 = sand.u32 %s43, 1
        %s246 = sand.u32 %s43, 1
        %s247 = smul.addr %s246, 16
        %s248 = scalar_lea.vmem [#allocation3], %s247
        // Predicated region
        $region70: #{resnet_generator_forward.12} parent=68 // pred_check
          %p249 = pneg %p56
        $region71: #{resnet_generator_forward.12} parent=68 // pred_check_branch
          %251 = sbr.rel (%p249) target = $region73
        $region72: #{resnet_generator_forward.12} parent=68 // pred_region
          _
        $region73: #{resnet_generator_forward.12} parent=68 // pred_fallthru
          _
        %s252 = sand.u32 %s43, 1
        %s253 = sand.u32 %s43, 1
        %s254 = smul.addr %s253, 16
        %s255 = scalar_lea.vmem [#allocation3], %s254
        %p256 = pneg %p56
        %p257 = pneg %p53
        %s258 = smul.u32 16, %s21
        %p259 = scmp.lt.s32.totalorder %s258, 31
        %s260 = scalar_select %p259, %s258, 31
        %p261 = scmp.lt.s32.totalorder %s20, 0
        %s262 = scalar_select %p261, %s20, 0
        %s263 = sadd.s32 %s262, %s260
        %s264 = smul.addr %s263, 4
        %s265 = scalar_lea.vmem %s1, %s264
        %p266 = pneg %p84
        %p267 = pneg %p81
        %p268 = scmp.lt.s32.totalorder %s20, 0
        %s269 = scalar_select %p268, %s20, 0
        %s270 = scalar_lea.vmem %s2, %s269
        %p271 = pneg %p110
        %p272 = pneg %p107
        %p273 = pneg %p138
        %p274 = pneg %p135
        %s275 = smul.u32 4, %s19
        %p276 = scmp.lt.s32.totalorder %s275, 3
        %s277 = scalar_select %p276, %s275, 3
        %p278 = scmp.lt.s32.totalorder %s20, 0
        %s279 = scalar_select %p278, %s20, 0
        %s280 = sadd.s32 %s279, %s277
        %s281 = smul.addr %s280, 8
        %s282 = scalar_lea.vmem %s3, %s281
        %s283 = smul.u32 4, %s19
        %s284 = smul.u32 16, %s21
        %p285 = scmp.lt.s32.totalorder %s284, 31
        %s286 = scalar_select %p285, %s284, 31
        %p287 = scmp.lt.s32.totalorder %s20, 0
        %s288 = scalar_select %p287, %s20, 0
        %s289 = sadd.s32 %s288, %s286
        %s290 = smul.addr %s289, 4
        %s291 = scalar_lea.vmem %s1, %s290
        %s292 = smul.u32 16, %s21
        %p293 = scmp.lt.s32.totalorder %s20, 0
        %s294 = scalar_select %p293, %s20, 0
        %s295 = scalar_lea.vmem %s2, %s294
        %s296 = smul.u32 4, %s19
        %p297 = scmp.lt.s32.totalorder %s296, 3
        %s298 = scalar_select %p297, %s296, 3
        %p299 = scmp.lt.s32.totalorder %s20, 0
        %s300 = scalar_select %p299, %s20, 0
        %s301 = sadd.s32 %s300, %s298
        %s302 = smul.addr %s301, 8
        %s303 = scalar_lea.vmem %s3, %s302
        %s304 = smul.u32 4, %s19
        %p306 = scmp.eq.s32.totalorder %s21, 0
        // Predicated region
        $region74: #{resnet_generator_forward.12} parent=68 // pred_check
          %p307 = pneg %p306
        $region75: #{resnet_generator_forward.12} parent=68 // pred_check_branch
          %309 = sbr.rel (%p307) target = $region77
        $region76: #{resnet_generator_forward.12} parent=68 // pred_region
          %310 = vst [vmem:[#allocation2] sm:$0xff] 0.0
          %311 = vst [vmem:[#allocation2 + $0x8] sm:$0xff] 0.0
          %312 = vst [vmem:[#allocation2 + $0x10] sm:$0xff] 0.0
          %313 = vst [vmem:[#allocation2 + $0x18] sm:$0xff] 0.0
        $region77: #{resnet_generator_forward.12} parent=68 // pred_fallthru
          _
        %v314 = vld [vmem:[#allocation2] sm:$0xff]
        %v315 = vld [vmem:[#allocation2 + $0x8] sm:$0xff]
        %v316 = vld [vmem:[#allocation2 + $0x10] sm:$0xff]
        %v317 = vld [vmem:[#allocation2 + $0x18] sm:$0xff]
        %v318 = vld [vmem:[%s248] sm:$0xf]
        %v319 = vld [vmem:[%s248 + $0x4] sm:$0xf]
        %v320 = vld [vmem:[%s248 + $0x8] sm:$0xf]
        %v321 = vld [vmem:[%s248 + $0xc] sm:$0xf]
        %v322 = vld [vmem:[%s291] sm:$0xf]
        %v323 = vld [vmem:[%s291 + $0x4] sm:$0xf]
        %v324 = vld [vmem:[%s291 + $0x8] sm:$0xf]
        %v325 = vld [vmem:[%s291 + $0xc] sm:$0xf]
        %v326 = vld [vmem:[%s291 + $0x10] sm:$0xf]
        %v327 = vld [vmem:[%s291 + $0x14] sm:$0xf]
        %v328 = vld [vmem:[%s291 + $0x18] sm:$0xf]
        %v329 = vld [vmem:[%s291 + $0x1c] sm:$0xf]
        %v330 = vld [vmem:[%s291 + $0x20] sm:$0xf]
        %v331 = vld [vmem:[%s291 + $0x24] sm:$0xf]
        %v332 = vld [vmem:[%s291 + $0x28] sm:$0xf]
        %v333 = vld [vmem:[%s291 + $0x2c] sm:$0xf]
        %v334 = vld [vmem:[%s291 + $0x30] sm:$0xf]
        %v335 = vld [vmem:[%s291 + $0x34] sm:$0xf]
        %v336 = vld [vmem:[%s291 + $0x38] sm:$0xf]
        %v337 = vld [vmem:[%s291 + $0x3c] sm:$0xf]
        %v342 = vunpack.c.l.b16 %v318
        %v343 = vunpack.c.l.b16 %v319
        %v344 = vunpack.c.l.b16 %v320
        %v345 = vunpack.c.l.b16 %v321
        %v346 = vpack.c.b16 %v343, %v342
        %v347 = vpack.c.b16 %v345, %v344
        %v366 = vunpack.c.l.b16 %v322
        %v367 = vunpack.c.l.b16 %v323
        %v368 = vunpack.c.l.b16 %v324
        %v369 = vunpack.c.l.b16 %v325
        %v370 = vunpack.c.l.b16 %v326
        %v371 = vunpack.c.l.b16 %v327
        %v372 = vunpack.c.l.b16 %v328
        %v373 = vunpack.c.l.b16 %v329
        %v374 = vunpack.c.l.b16 %v330
        %v375 = vunpack.c.l.b16 %v331
        %v376 = vunpack.c.l.b16 %v332
        %v377 = vunpack.c.l.b16 %v333
        %v378 = vunpack.c.l.b16 %v334
        %v379 = vunpack.c.l.b16 %v335
        %v380 = vunpack.c.l.b16 %v336
        %v381 = vunpack.c.l.b16 %v337
        %v382 = vpack.c.b16 %v367, %v366
        %v383 = vpack.c.b16 %v369, %v368
        %v384 = vpack.c.b16 %v371, %v370
        %v385 = vpack.c.b16 %v373, %v372
        %v386 = vpack.c.b16 %v375, %v374
        %v387 = vpack.c.b16 %v377, %v376
        %v388 = vpack.c.b16 %v379, %v378
        %v389 = vpack.c.b16 %v381, %v380
        %398 = vmatprep.subr.bf16.mxu0 0
        %399 = vmatpush1.bf16.msra.mxu0 %v382
        %400 = vmatprep.subr.bf16.mxu0 0
        %401 = vmatpush1.bf16.msra.mxu0 %v383
        %402 = vmatprep.subr.bf16.mxu0 0
        %403 = vmatpush1.bf16.msra.mxu0 %v384
        %404 = vmatprep.subr.bf16.mxu0 0
        %405 = vmatpush1.bf16.msra.mxu0 %v385
        %406 = vmatprep.subr.bf16.mxu0 0
        %407 = vmatpush1.bf16.msra.mxu0 %v386
        %408 = vmatprep.subr.bf16.mxu0 0
        %409 = vmatpush1.bf16.msra.mxu0 %v387
        %410 = vmatprep.subr.bf16.mxu0 0
        %411 = vmatpush1.bf16.msra.mxu0 %v388
        %412 = vmatprep.subr.bf16.mxu0 0
        %413 = vmatpush1.bf16.msra.mxu0 %v389
        %414 = vmatprep.subr.bf16.mxu0 0
        %415 = vmatpush1.bf16.msra.mxu0 0
        %416 = vmatprep.subr.bf16.mxu0 0
        %417 = vmatpush1.bf16.msra.mxu0 0
        %418 = vmatprep.subr.bf16.mxu0 0
        %419 = vmatpush1.bf16.msra.mxu0 0
        %420 = vmatprep.subr.bf16.mxu0 0
        %421 = vmatpush1.bf16.msra.mxu0 0
        %422 = vmatprep.subr.bf16.mxu0 0
        %423 = vmatpush1.bf16.msra.mxu0 0
        %424 = vmatprep.subr.bf16.mxu0 0
        %425 = vmatpush1.bf16.msra.mxu0 0
        %426 = vmatprep.subr.bf16.mxu0 0
        %427 = vmatpush1.bf16.msra.mxu0 0
        %428 = vmatprep.subr.bf16.mxu0 0
        %429 = vmatpush1.bf16.msra.mxu0 0
        %430 = vmatprep.mubr.bf16.mxu0 0
        %431 = vmatmul.mubr.bf16.gmra.mrb[0].mxu0 %v346
        %v432 = vpop.f32.mrb[0].mxu0
        %v433 = vadd.f32 0.0, %v432
        %v434 = vpop.f32.mrb[0].mxu0
        %v435 = vpop.f32.mrb[0].mxu0
        %v436 = vadd.f32 0.0, %v435
        %v437 = vpop.f32.mrb[0].mxu0
        %438 = vmatprep.mubr.bf16.mxu0 0
        %439 = vmatmul.mubr.bf16.gmra.mrb[0].mxu0 %v347
        %v440 = vpop.f32.mrb[0].mxu0
        %v441 = vadd.f32 0.0, %v440
        %v442 = vpop.f32.mrb[0].mxu0
        %v443 = vpop.f32.mrb[0].mxu0
        %v444 = vadd.f32 0.0, %v443
        %v445 = vpop.f32.mrb[0].mxu0
        %446 = vdwg.mxu0
        %v447 = vadd.f32 %v314, %v433
        %v448 = vadd.f32 %v315, %v436
        %v449 = vadd.f32 %v316, %v441
        %v450 = vadd.f32 %v317, %v444
        %451 = vst [vmem:[#allocation2] sm:$0xff] %v447
        %452 = vst [vmem:[#allocation2 + $0x8] sm:$0xff] %v448
        %453 = vst [vmem:[#allocation2 + $0x10] sm:$0xff] %v449
        %454 = vst [vmem:[#allocation2 + $0x18] sm:$0xff] %v450
        %p455 = scmp.eq.s32.totalorder %s21, 1
        // Predicated region
        $region78: #{resnet_generator_forward.12} parent=68 // pred_check
          %p456 = pneg %p455
        $region79: #{resnet_generator_forward.12} parent=68 // pred_check_branch
          %458 = sbr.rel (%p456) target = $region81
        $region80: #{resnet_generator_forward.12} parent=68 // pred_region
          %v459 = vld [vmem:[#allocation2] sm:$0xff]
          %v460 = vld [vmem:[#allocation2 + $0x8] sm:$0xff]
          %v461 = vld [vmem:[#allocation2 + $0x10] sm:$0xff]
          %v462 = vld [vmem:[#allocation2 + $0x18] sm:$0xff]
          %v463 = vld [vmem:[%s295] sm:$0x1]
          %v465 = vlaneseq
          %v466 = vshrl.u32 %v465, 7
          %v467 = vsub.s32 0, %v466
          %v468 = vrot.slane %v463, %v467
          %v470 = vadd.f32 %v459, %v468
          %v471 = vadd.f32 %v460, %v468
          %v472 = vadd.f32 %v461, %v468
          %v473 = vadd.f32 %v462, %v468
          %474 = vst [vmem:[%s303] sm:$0xff] %v470
          %475 = vst [vmem:[%s303 + $0x8] sm:$0xff] %v471
          %476 = vst [vmem:[%s303 + $0x10] sm:$0xff] %v472
          %477 = vst [vmem:[%s303 + $0x18] sm:$0xff] %v473
        $region81: #{resnet_generator_forward.12} parent=68 // pred_fallthru
          _
        %s478 = smul.u32 4, %s19
        %p479 = scmp.lt.s32.totalorder %s478, 3
        %s480 = scalar_select %p479, %s478, 3
        %p481 = scmp.lt.s32.totalorder %s20, 0
        %s482 = scalar_select %p481, %s20, 0
        %s483 = sadd.s32 %s482, %s480
        %s484 = smul.addr %s483, 8
        %s485 = scalar_lea.vmem %s3, %s484
        // Predicated region
        $region82: #{resnet_generator_forward.12} parent=68 // pred_check
          %p486 = pneg %p135
        $region83: #{resnet_generator_forward.12} parent=68 // pred_check_branch
          %488 = sbr.rel (%p486) target = $region85
        $region84: #{resnet_generator_forward.12} parent=68 // pred_region
          %s489 = smul.u32 4, %s19
        $region85: #{resnet_generator_forward.12} parent=68 // pred_fallthru
          _
        // Predicated region
        $region86: #{resnet_generator_forward.12} parent=68 // pred_check
          %p490 = pneg %p135
        $region87: #{resnet_generator_forward.12} parent=68 // pred_check_branch
          %492 = sbr.rel (%p490) target = $region89
        $region88: #{resnet_generator_forward.12} parent=68 // pred_region
          %s493 = smul.u32 4, %s19
          %p494 = scmp.lt.s32.totalorder %s493, 3
          %s495 = scalar_select %p494, %s493, 3
          %p496 = scmp.lt.s32.totalorder %s20, 0
          %s497 = scalar_select %p496, %s20, 0
          %s498 = sadd.s32 %s497, %s495
          %s499 = smul.addr %s498, 8
          %s500 = scalar_lea.vmem %s3, %s499
        $region89: #{resnet_generator_forward.12} parent=68 // pred_fallthru
          _
      $region69: #{resnet_generator_forward.12} parent=5 // pred_fallthru
        _
      %p501 = scmp.le.s32.totalorder 2, %s9
      // Predicated region
      $region90: #{resnet_generator_forward.12} parent=5 // pred_check
        %p502 = pneg %p501
      $region91: #{resnet_generator_forward.12} parent=5 // pred_check_branch
        %504 = sbr.rel (%p502) target = $region93
      $region92: #{resnet_generator_forward.12} parent=5 // pred_region
        %s505 = ssub.s32 %s9, 2
      $region93: #{resnet_generator_forward.12} parent=5 // pred_fallthru
        _
    $region6: #{resnet_generator_forward.12} parent=1 // loop_footer
      %s13 = sadd.s32 1, %s9
    $region7: #{resnet_generator_forward.12} parent=1 // loop_footer_branch
      %8 = sbr.rel target = $region3
    $region8: #{resnet_generator_forward.12} parent=1 // loop_exit
      _

// kernel: resnet_generator_forward.13
$region0: #{resnet_generator_forward.13}
  #allocation0 [shape = 'u32[]', space=smem, size = 0x4, offset = 0x4, fixed_abs, tag = 'smem constant byte address 0x4 - core index']
  #allocation1 [shape = 'u32[144,128]{1,0:T(1,128)}', space=vmem, size = 0x12000, scoped, tag = 'internal scratch']
  #allocation2 [shape = 'f32[32,128]{1,0:T(8,128)}', space=vmem, size = 0x4000, scoped, tag = 'scratch operand']
  %s0 = inlined_call_operand.vmem [shape: bf16[32,384], index: 0, kind: input, shape index: {}]
  %s1 = inlined_call_operand.vmem [shape: bf16[384,128], index: 1, kind: input, shape index: {}]
  %s2 = inlined_call_operand.vmem [shape: f32[1,128], index: 2, kind: input, shape index: {}]
  %s3 = inlined_call_operand.vmem [shape: f32[32,128], index: 3, kind: output, shape index: {}]
  %s4 = sld [smem:[#allocation0]]
  $region94: #{resnet_generator_forward.13} parent=0
    _
  %s6 = ssub.s32 1, %s4
  %s7 = scalar_select 0, %s6, %s4
  $region1: #{resnet_generator_forward.13} parent=0
    #allocation3 [shape = 'u8[16384]{0}', space=vmem, size = 0x4000, scoped, tag = 'input window, operand 0']
    loop: start=0, step=1, limit=5
    $region2: #{resnet_generator_forward.13} parent=1 // loop_pre_header
      _
    $region3: #{resnet_generator_forward.13} parent=1 // loop_header
      %s9 = sphi 0, %s13
      %p10 = scmp.ge.s32.totalorder %s9, 5
      %s16 = sphi 0, %s35
      %s17 = sphi 0, %s31
      %s18 = sphi 0, %s27
      %s19 = sphi 0, %s16
      %s20 = sphi 0, %s17
      %s21 = sphi 0, %s18
      %s22 = sphi 0, %s19
      %s23 = sphi 0, %s20
      %s24 = sphi 0, %s21
      %s40 = sphi 0, %s42
      %s43 = sphi 0, %s40
      %s44 = sphi 0, %s43
      %s60 = sphi 0, %s44
      %s68 = sphi 0, %s70
      %s71 = sphi 0, %s68
      %s72 = sphi 0, %s71
      %s88 = sphi 0, %s72
      %s94 = sphi 0, %s96
      %s97 = sphi 0, %s94
      %s98 = sphi 0, %s97
      %s114 = sphi 0, %s98
      %s122 = sphi 0, %s124
      %s125 = sphi 0, %s122
      %s126 = sphi 0, %s125
      %s142 = sphi 0, %s126
    $region4: #{resnet_generator_forward.13} parent=1 // loop_header_branch
      %12 = sbr.rel (%p10) target = $region8
    $region5: #{resnet_generator_forward.13} parent=1 // loop_body
      %s14 = ssub.s32 %s9, 1
      %s15 = ssub.s32 %s9, 2
      %s25 = sadd.s32 1, %s18
      %p26 = scmp.ge.s32.totalorder %s25, 3
      %s27 = scalar_select %p26, 0, %s25
      %s28 = sadd.s32 1, %s17
      %s29 = scalar_select %p26, %s28, %s17
      %p30 = scmp.ge.s32.totalorder %s29, 1
      %s31 = scalar_select %p30, 0, %s29
      %s32 = sadd.s32 1, %s16
      %s33 = scalar_select %p30, %s32, %s16
      %p34 = scmp.ge.s32.totalorder %s33, 1
      %s35 = scalar_select %p34, 0, %s33
      %s36 = ssub.s32 %s16, %s35
      %s37 = ssub.s32 %s18, %s27
      %s38 = sor.u32 %s36, %s37
      %p39 = scmp.eq.s32.totalorder %s38, 0
      %s41 = sadd.s32 %s40, 1
      %s42 = scalar_select %p39, %s40, %s41
      %p45 = pneg %p39
      %p46 = scmp.eq.s32.totalorder %s9, 2
      %p47 = por %p45, %p46
      %p48 = scmp.ne.s32.totalorder %s40, %s43
      %p49 = scmp.eq.s32.totalorder %s9, 0
      %p50 = por %p48, %p49
      %p51 = scmp.ne.s32.totalorder %s40, %s43
      %p52 = scmp.eq.s32.totalorder %s14, 2
      %p53 = por %p51, %p52
      %p54 = scmp.ne.s32.totalorder %s43, %s44
      %p55 = scmp.eq.s32.totalorder %s14, 0
      %p56 = por %p54, %p55
      %p57 = scmp.ne.s32.totalorder %s43, %s44
      %p58 = scmp.eq.s32.totalorder %s15, 2
      %p59 = por %p57, %p58
      %p61 = scmp.ne.s32.totalorder %s44, %s60
      %p62 = scmp.eq.s32.totalorder %s15, 0
      %p63 = por %p61, %p62
      %s64 = ssub.s32 %s18, %s27
      %s65 = ssub.s32 %s17, %s31
      %s66 = sor.u32 %s64, %s65
      %p67 = scmp.eq.s32.totalorder %s66, 0
      %s69 = sadd.s32 %s68, 1
      %s70 = scalar_select %p67, %s68, %s69
      %p73 = pneg %p67
      %p74 = scmp.eq.s32.totalorder %s9, 2
      %p75 = por %p73, %p74
      %p76 = scmp.ne.s32.totalorder %s68, %s71
      %p77 = scmp.eq.s32.totalorder %s9, 0
      %p78 = por %p76, %p77
      %p79 = scmp.ne.s32.totalorder %s68, %s71
      %p80 = scmp.eq.s32.totalorder %s14, 2
      %p81 = por %p79, %p80
      %p82 = scmp.ne.s32.totalorder %s71, %s72
      %p83 = scmp.eq.s32.totalorder %s14, 0
      %p84 = por %p82, %p83
      %p85 = scmp.ne.s32.totalorder %s71, %s72
      %p86 = scmp.eq.s32.totalorder %s15, 2
      %p87 = por %p85, %p86
      %p89 = scmp.ne.s32.totalorder %s72, %s88
      %p90 = scmp.eq.s32.totalorder %s15, 0
      %p91 = por %p89, %p90
      %s92 = ssub.s32 %s17, %s31
      %p93 = scmp.eq.s32.totalorder %s92, 0
      %s95 = sadd.s32 %s94, 1
      %s96 = scalar_select %p93, %s94, %s95
      %p99 = pneg %p93
      %p100 = scmp.eq.s32.totalorder %s9, 2
      %p101 = por %p99, %p100
      %p102 = scmp.ne.s32.totalorder %s94, %s97
      %p103 = scmp.eq.s32.totalorder %s9, 0
      %p104 = por %p102, %p103
      %p105 = scmp.ne.s32.totalorder %s94, %s97
      %p106 = scmp.eq.s32.totalorder %s14, 2
      %p107 = por %p105, %p106
      %p108 = scmp.ne.s32.totalorder %s97, %s98
      %p109 = scmp.eq.s32.totalorder %s14, 0
      %p110 = por %p108, %p109
      %p111 = scmp.ne.s32.totalorder %s97, %s98
      %p112 = scmp.eq.s32.totalorder %s15, 2
      %p113 = por %p111, %p112
      %p115 = scmp.ne.s32.totalorder %s98, %s114
      %p116 = scmp.eq.s32.totalorder %s15, 0
      %p117 = por %p115, %p116
      %s118 = ssub.s32 %s16, %s35
      %s119 = ssub.s32 %s17, %s31
      %s120 = sor.u32 %s118, %s119
      %p121 = scmp.eq.s32.totalorder %s120, 0
      %s123 = sadd.s32 %s122, 1
      %s124 = scalar_select %p121, %s122, %s123
      %p127 = pneg %p121
      %p128 = scmp.eq.s32.totalorder %s9, 2
      %p129 = por %p127, %p128
      %p130 = scmp.ne.s32.totalorder %s122, %s125
      %p131 = scmp.eq.s32.totalorder %s9, 0
      %p132 = por %p130, %p131
      %p133 = scmp.ne.s32.totalorder %s122, %s125
      %p134 = scmp.eq.s32.totalorder %s14, 2
      %p135 = por %p133, %p134
      %p136 = scmp.ne.s32.totalorder %s125, %s126
      %p137 = scmp.eq.s32.totalorder %s14, 0
      %p138 = por %p136, %p137
      %p139 = scmp.ne.s32.totalorder %s125, %s126
      %p140 = scmp.eq.s32.totalorder %s15, 2
      %p141 = por %p139, %p140
      %p143 = scmp.ne.s32.totalorder %s126, %s142
      %p144 = scmp.eq.s32.totalorder %s15, 0
      %p145 = por %p143, %p144
      %p146 = scmp.le.s32.totalorder 1, %s9
      %p147 = scmp.lt.s32.totalorder %s9, 4
      %p148 = pnand %p146, %p147
      %p149 = pneg %p148
      // Predicated region
      $region9: #{resnet_generator_forward.13} parent=5 // pred_check
        _
      $region10: #{resnet_generator_forward.13} parent=5 // pred_check_branch
        %151 = sbr.rel (%p148) target = $region12
      $region11: #{resnet_generator_forward.13} parent=5 // pred_region
        %s152 = ssub.s32 %s9, 1
        // Predicated region
        $region13: #{resnet_generator_forward.13} parent=11 // pred_check
          %p153 = pneg %p110
        $region14: #{resnet_generator_forward.13} parent=11 // pred_check_branch
          %155 = sbr.rel (%p153) target = $region16
        $region15: #{resnet_generator_forward.13} parent=11 // pred_region
          %p156 = scmp.lt.s32.totalorder %s20, 0
          %s157 = scalar_select %p156, %s20, 0
          %s158 = scalar_lea.vmem %s2, %s157
        $region16: #{resnet_generator_forward.13} parent=11 // pred_fallthru
          _
      $region12: #{resnet_generator_forward.13} parent=5 // pred_fallthru
        _
      %p159 = scmp.lt.s32.totalorder %s9, 3
      // Predicated region
      $region17: #{resnet_generator_forward.13} parent=5 // pred_check
        %p160 = pneg %p159
      $region18: #{resnet_generator_forward.13} parent=5 // pred_check_branch
        %162 = sbr.rel (%p160) target = $region20
      $region19: #{resnet_generator_forward.13} parent=5 // pred_region
        // Predicated region
        $region21: #{resnet_generator_forward.13} parent=19 // pred_check
          %p163 = pneg %p50
        $region22: #{resnet_generator_forward.13} parent=19 // pred_check_branch
          %165 = sbr.rel (%p163) target = $region24
        $region23: #{resnet_generator_forward.13} parent=19 // pred_region
          %s166 = sand.u32 %s40, 1
          %s167 = sand.u32 %s40, 1
          %s168 = smul.addr %s167, 16
          %s169 = scalar_lea.vmem [#allocation3], %s168
          %s170 = smul.u32 4, %s16
          %s171 = smul.addr %s170, 3
          %s172 = sadd.s32 %s18, %s171
          %s173 = smul.addr %s172, 4
          %s174 = scalar_lea.vmem %s0, %s173
          // Predicated region
          $region25: #{resnet_generator_forward.13} parent=23 // pred_check
            _
          $region26: #{resnet_generator_forward.13} parent=23 // pred_check_branch
            %176 = sbr.rel (0) target = $region28
          $region27: #{resnet_generator_forward.13} parent=23 // pred_region
            // Predicated region
            $region29: #{resnet_generator_forward.13} parent=27 // pred_check
              _
            $region30: #{resnet_generator_forward.13} parent=27 // pred_check_branch
              %178 = sbr.rel target = $region32
            $region31: #{resnet_generator_forward.13} parent=27 // pred_region
              // Predicated region
              $region44: #{resnet_generator_forward.13} parent=31 // pred_check
                _
              $region45: #{resnet_generator_forward.13} parent=31 // pred_check_branch
                %199 = sbr.rel (0) target = $region47
              $region46: #{resnet_generator_forward.13} parent=31 // pred_region
                loop: start=0, step=1, limit=1
                $region48: #{resnet_generator_forward.13} parent=46 // loop_pre_header
                  _
                $region49: #{resnet_generator_forward.13} parent=46 // loop_header
                  %s201 = sphi 0, %s205
                  %p202 = scmp.ge.s32.totalorder %s201, 1
                  %s206 = sphi %s174, %s174
                  %s207 = sphi %s169, %s169
                $region50: #{resnet_generator_forward.13} parent=46 // loop_header_branch
                  %204 = sbr.rel (%p202) target = $region54
                $region51: #{resnet_generator_forward.13} parent=46 // loop_body
                  _
                $region52: #{resnet_generator_forward.13} parent=46 // loop_footer
                  %s205 = sadd.s32 1, %s201
                $region53: #{resnet_generator_forward.13} parent=46 // loop_footer_branch
                  %200 = sbr.rel target = $region49
                $region54: #{resnet_generator_forward.13} parent=46 // loop_exit
                  _
                loop: start=0, step=1, limit=1
                $region55: #{resnet_generator_forward.13} parent=46 // loop_pre_header
                  _
                $region56: #{resnet_generator_forward.13} parent=46 // loop_header
                  %s210 = sphi 0, %s214
                  %p211 = scmp.ge.s32.totalorder %s210, 1
                  %s215 = sphi %s174, %s174
                  %s216 = sphi %s169, %s169
                $region57: #{resnet_generator_forward.13} parent=46 // loop_header_branch
                  %213 = sbr.rel (%p211) target = $region61
                $region58: #{resnet_generator_forward.13} parent=46 // loop_body
                  %v217 = vld [vmem:[%s215] sm:$0xf]
                  %218 = vst [vmem:[%s216] sm:$0xf] %v217
                  %v219 = vld [vmem:[%s215 + $0xc] sm:$0xf]
                  %220 = vst [vmem:[%s216 + $0x4] sm:$0xf] %v219
                  %v221 = vld [vmem:[%s215 + $0x18] sm:$0xf]
                  %222 = vst [vmem:[%s216 + $0x8] sm:$0xf] %v221
                  %v223 = vld [vmem:[%s215 + $0x24] sm:$0xf]
                  %224 = vst [vmem:[%s216 + $0xc] sm:$0xf] %v223
                $region59: #{resnet_generator_forward.13} parent=46 // loop_footer
                  %s214 = sadd.s32 1, %s210
                $region60: #{resnet_generator_forward.13} parent=46 // loop_footer_branch
                  %209 = sbr.rel target = $region56
                $region61: #{resnet_generator_forward.13} parent=46 // loop_exit
                  _
              $region47: #{resnet_generator_forward.13} parent=31 // pred_fallthru
                _
            $region32: #{resnet_generator_forward.13} parent=27 // pred_fallthru
              _
            // Predicated region
            $region33: #{resnet_generator_forward.13} parent=27 // pred_check
              _
            $region34: #{resnet_generator_forward.13} parent=27 // pred_check_branch
              %180 = sbr.rel (0) target = $region36
            $region35: #{resnet_generator_forward.13} parent=27 // pred_region
              loop: start=0, step=1, limit=1
              $region37: #{resnet_generator_forward.13} parent=35 // loop_pre_header
                _
              $region38: #{resnet_generator_forward.13} parent=35 // loop_header
                %s183 = sphi 0, %s187
                %p184 = scmp.ge.s32.totalorder %s183, 1
                %s188 = sphi %s174, %s174
                %s189 = sphi %s169, %s169
              $region39: #{resnet_generator_forward.13} parent=35 // loop_header_branch
                %186 = sbr.rel (%p184) target = $region43
              $region40: #{resnet_generator_forward.13} parent=35 // loop_body
                %v190 = vld [vmem:[%s188] sm:$0xf]
                %191 = vst [vmem:[%s189] sm:$0xf] %v190
                %v192 = vld [vmem:[%s188 + $0xc] sm:$0xf]
                %193 = vst [vmem:[%s189 + $0x4] sm:$0xf] %v192
                %v194 = vld [vmem:[%s188 + $0x18] sm:$0xf]
                %195 = vst [vmem:[%s189 + $0x8] sm:$0xf] %v194
                %v196 = vld [vmem:[%s188 + $0x24] sm:$0xf]
                %197 = vst [vmem:[%s189 + $0xc] sm:$0xf] %v196
              $region41: #{resnet_generator_forward.13} parent=35 // loop_footer
                %s187 = sadd.s32 1, %s183
              $region42: #{resnet_generator_forward.13} parent=35 // loop_footer_branch
                %182 = sbr.rel target = $region38
              $region43: #{resnet_generator_forward.13} parent=35 // loop_exit
                _
            $region36: #{resnet_generator_forward.13} parent=27 // pred_fallthru
              _
          $region28: #{resnet_generator_forward.13} parent=23 // pred_fallthru
            _
          %225 = vnop
        $region24: #{resnet_generator_forward.13} parent=19 // pred_fallthru
          _
        // Predicated region
        $region62: #{resnet_generator_forward.13} parent=19 // pred_check
          %p226 = pneg %p78
        $region63: #{resnet_generator_forward.13} parent=19 // pred_check_branch
          %228 = sbr.rel (%p226) target = $region65
        $region64: #{resnet_generator_forward.13} parent=19 // pred_region
          %s229 = smul.u32 16, %s18
          %p230 = scmp.lt.s32.totalorder %s229, 47
          %s231 = scalar_select %p230, %s229, 47
          %p232 = scmp.lt.s32.totalorder %s17, 0
          %s233 = scalar_select %p232, %s17, 0
          %s234 = sadd.s32 %s233, %s231
          %s235 = smul.addr %s234, 4
          %s236 = scalar_lea.vmem %s1, %s235
          %s237 = smul.u32 16, %s18
        $region65: #{resnet_generator_forward.13} parent=19 // pred_fallthru
          _
      $region20: #{resnet_generator_forward.13} parent=5 // pred_fallthru
        _
      %p238 = scmp.le.s32.totalorder 1, %s9
      %p239 = scmp.lt.s32.totalorder %s9, 4
      %p240 = pnand %p238, %p239
      %p241 = pneg %p240
      // Predicated region
      $region66: #{resnet_generator_forward.13} parent=5 // pred_check
        _
      $region67: #{resnet_generator_forward.13} parent=5 // pred_check_branch
        %243 = sbr.rel (%p240) target = $region69
      $region68: #{resnet_generator_forward.13} parent=5 // pred_region
        %s244 = ssub.s32 %s9, 1
        %s245 = sand.u32 %s43, 1
        %s246 = sand.u32 %s43, 1
        %s247 = smul.addr %s246, 16
        %s248 = scalar_lea.vmem [#allocation3], %s247
        // Predicated region
        $region70: #{resnet_generator_forward.13} parent=68 // pred_check
          %p249 = pneg %p56
        $region71: #{resnet_generator_forward.13} parent=68 // pred_check_branch
          %251 = sbr.rel (%p249) target = $region73
        $region72: #{resnet_generator_forward.13} parent=68 // pred_region
          _
        $region73: #{resnet_generator_forward.13} parent=68 // pred_fallthru
          _
        %s252 = sand.u32 %s43, 1
        %s253 = sand.u32 %s43, 1
        %s254 = smul.addr %s253, 16
        %s255 = scalar_lea.vmem [#allocation3], %s254
        %p256 = pneg %p56
        %p257 = pneg %p53
        %s258 = smul.u32 16, %s21
        %p259 = scmp.lt.s32.totalorder %s258, 47
        %s260 = scalar_select %p259, %s258, 47
        %p261 = scmp.lt.s32.totalorder %s20, 0
        %s262 = scalar_select %p261, %s20, 0
        %s263 = sadd.s32 %s262, %s260
        %s264 = smul.addr %s263, 4
        %s265 = scalar_lea.vmem %s1, %s264
        %p266 = pneg %p84
        %p267 = pneg %p81
        %p268 = scmp.lt.s32.totalorder %s20, 0
        %s269 = scalar_select %p268, %s20, 0
        %s270 = scalar_lea.vmem %s2, %s269
        %p271 = pneg %p110
        %p272 = pneg %p107
        %p273 = pneg %p138
        %p274 = pneg %p135
        %s275 = smul.u32 4, %s19
        %p276 = scmp.lt.s32.totalorder %s275, 3
        %s277 = scalar_select %p276, %s275, 3
        %p278 = scmp.lt.s32.totalorder %s20, 0
        %s279 = scalar_select %p278, %s20, 0
        %s280 = sadd.s32 %s279, %s277
        %s281 = smul.addr %s280, 8
        %s282 = scalar_lea.vmem %s3, %s281
        %s283 = smul.u32 4, %s19
        %s284 = smul.u32 16, %s21
        %p285 = scmp.lt.s32.totalorder %s284, 47
        %s286 = scalar_select %p285, %s284, 47
        %p287 = scmp.lt.s32.totalorder %s20, 0
        %s288 = scalar_select %p287, %s20, 0
        %s289 = sadd.s32 %s288, %s286
        %s290 = smul.addr %s289, 4
        %s291 = scalar_lea.vmem %s1, %s290
        %s292 = smul.u32 16, %s21
        %p293 = scmp.lt.s32.totalorder %s20, 0
        %s294 = scalar_select %p293, %s20, 0
        %s295 = scalar_lea.vmem %s2, %s294
        %s296 = smul.u32 4, %s19
        %p297 = scmp.lt.s32.totalorder %s296, 3
        %s298 = scalar_select %p297, %s296, 3
        %p299 = scmp.lt.s32.totalorder %s20, 0
        %s300 = scalar_select %p299, %s20, 0
        %s301 = sadd.s32 %s300, %s298
        %s302 = smul.addr %s301, 8
        %s303 = scalar_lea.vmem %s3, %s302
        %s304 = smul.u32 4, %s19
        %p306 = scmp.eq.s32.totalorder %s21, 0
        // Predicated region
        $region74: #{resnet_generator_forward.13} parent=68 // pred_check
          %p307 = pneg %p306
        $region75: #{resnet_generator_forward.13} parent=68 // pred_check_branch
          %309 = sbr.rel (%p307) target = $region77
        $region76: #{resnet_generator_forward.13} parent=68 // pred_region
          %310 = vst [vmem:[#allocation2] sm:$0xff] 0.0
          %311 = vst [vmem:[#allocation2 + $0x8] sm:$0xff] 0.0
          %312 = vst [vmem:[#allocation2 + $0x10] sm:$0xff] 0.0
          %313 = vst [vmem:[#allocation2 + $0x18] sm:$0xff] 0.0
        $region77: #{resnet_generator_forward.13} parent=68 // pred_fallthru
          _
        %v314 = vld [vmem:[#allocation2] sm:$0xff]
        %v315 = vld [vmem:[#allocation2 + $0x8] sm:$0xff]
        %v316 = vld [vmem:[#allocation2 + $0x10] sm:$0xff]
        %v317 = vld [vmem:[#allocation2 + $0x18] sm:$0xff]
        %v318 = vld [vmem:[%s248] sm:$0xf]
        %v319 = vld [vmem:[%s248 + $0x4] sm:$0xf]
        %v320 = vld [vmem:[%s248 + $0x8] sm:$0xf]
        %v321 = vld [vmem:[%s248 + $0xc] sm:$0xf]
        %v322 = vld [vmem:[%s291] sm:$0xf]
        %v323 = vld [vmem:[%s291 + $0x4] sm:$0xf]
        %v324 = vld [vmem:[%s291 + $0x8] sm:$0xf]
        %v325 = vld [vmem:[%s291 + $0xc] sm:$0xf]
        %v326 = vld [vmem:[%s291 + $0x10] sm:$0xf]
        %v327 = vld [vmem:[%s291 + $0x14] sm:$0xf]
        %v328 = vld [vmem:[%s291 + $0x18] sm:$0xf]
        %v329 = vld [vmem:[%s291 + $0x1c] sm:$0xf]
        %v330 = vld [vmem:[%s291 + $0x20] sm:$0xf]
        %v331 = vld [vmem:[%s291 + $0x24] sm:$0xf]
        %v332 = vld [vmem:[%s291 + $0x28] sm:$0xf]
        %v333 = vld [vmem:[%s291 + $0x2c] sm:$0xf]
        %v334 = vld [vmem:[%s291 + $0x30] sm:$0xf]
        %v335 = vld [vmem:[%s291 + $0x34] sm:$0xf]
        %v336 = vld [vmem:[%s291 + $0x38] sm:$0xf]
        %v337 = vld [vmem:[%s291 + $0x3c] sm:$0xf]
        %v342 = vunpack.c.l.b16 %v318
        %v343 = vunpack.c.l.b16 %v319
        %v344 = vunpack.c.l.b16 %v320
        %v345 = vunpack.c.l.b16 %v321
        %v346 = vpack.c.b16 %v343, %v342
        %v347 = vpack.c.b16 %v345, %v344
        %v366 = vunpack.c.l.b16 %v322
        %v367 = vunpack.c.l.b16 %v323
        %v368 = vunpack.c.l.b16 %v324
        %v369 = vunpack.c.l.b16 %v325
        %v370 = vunpack.c.l.b16 %v326
        %v371 = vunpack.c.l.b16 %v327
        %v372 = vunpack.c.l.b16 %v328
        %v373 = vunpack.c.l.b16 %v329
        %v374 = vunpack.c.l.b16 %v330
        %v375 = vunpack.c.l.b16 %v331
        %v376 = vunpack.c.l.b16 %v332
        %v377 = vunpack.c.l.b16 %v333
        %v378 = vunpack.c.l.b16 %v334
        %v379 = vunpack.c.l.b16 %v335
        %v380 = vunpack.c.l.b16 %v336
        %v381 = vunpack.c.l.b16 %v337
        %v382 = vpack.c.b16 %v367, %v366
        %v383 = vpack.c.b16 %v369, %v368
        %v384 = vpack.c.b16 %v371, %v370
        %v385 = vpack.c.b16 %v373, %v372
        %v386 = vpack.c.b16 %v375, %v374
        %v387 = vpack.c.b16 %v377, %v376
        %v388 = vpack.c.b16 %v379, %v378
        %v389 = vpack.c.b16 %v381, %v380
        %398 = vmatprep.subr.bf16.mxu0 0
        %399 = vmatpush1.bf16.msra.mxu0 %v382
        %400 = vmatprep.subr.bf16.mxu0 0
        %401 = vmatpush1.bf16.msra.mxu0 %v383
        %402 = vmatprep.subr.bf16.mxu0 0
        %403 = vmatpush1.bf16.msra.mxu0 %v384
        %404 = vmatprep.subr.bf16.mxu0 0
        %405 = vmatpush1.bf16.msra.mxu0 %v385
        %406 = vmatprep.subr.bf16.mxu0 0
        %407 = vmatpush1.bf16.msra.mxu0 %v386
        %408 = vmatprep.subr.bf16.mxu0 0
        %409 = vmatpush1.bf16.msra.mxu0 %v387
        %410 = vmatprep.subr.bf16.mxu0 0
        %411 = vmatpush1.bf16.msra.mxu0 %v388
        %412 = vmatprep.subr.bf16.mxu0 0
        %413 = vmatpush1.bf16.msra.mxu0 %v389
        %414 = vmatprep.subr.bf16.mxu0 0
        %415 = vmatpush1.bf16.msra.mxu0 0
        %416 = vmatprep.subr.bf16.mxu0 0
        %417 = vmatpush1.bf16.msra.mxu0 0
        %418 = vmatprep.subr.bf16.mxu0 0
        %419 = vmatpush1.bf16.msra.mxu0 0
        %420 = vmatprep.subr.bf16.mxu0 0
        %421 = vmatpush1.bf16.msra.mxu0 0
        %422 = vmatprep.subr.bf16.mxu0 0
        %423 = vmatpush1.bf16.msra.mxu0 0
        %424 = vmatprep.subr.bf16.mxu0 0
        %425 = vmatpush1.bf16.msra.mxu0 0
        %426 = vmatprep.subr.bf16.mxu0 0
        %427 = vmatpush1.bf16.msra.mxu0 0
        %428 = vmatprep.subr.bf16.mxu0 0
        %429 = vmatpush1.bf16.msra.mxu0 0
        %430 = vmatprep.mubr.bf16.mxu0 0
        %431 = vmatmul.mubr.bf16.gmra.mrb[0].mxu0 %v346
        %v432 = vpop.f32.mrb[0].mxu0
        %v433 = vadd.f32 0.0, %v432
        %v434 = vpop.f32.mrb[0].mxu0
        %v435 = vpop.f32.mrb[0].mxu0
        %v436 = vadd.f32 0.0, %v435
        %v437 = vpop.f32.mrb[0].mxu0
        %438 = vmatprep.mubr.bf16.mxu0 0
        %439 = vmatmul.mubr.bf16.gmra.mrb[0].mxu0 %v347
        %v440 = vpop.f32.mrb[0].mxu0
        %v441 = vadd.f32 0.0, %v440
        %v442 = vpop.f32.mrb[0].mxu0
        %v443 = vpop.f32.mrb[0].mxu0
        %v444 = vadd.f32 0.0, %v443
        %v445 = vpop.f32.mrb[0].mxu0
        %446 = vdwg.mxu0
        %v447 = vadd.f32 %v314, %v433
        %v448 = vadd.f32 %v315, %v436
        %v449 = vadd.f32 %v316, %v441
        %v450 = vadd.f32 %v317, %v444
        %451 = vst [vmem:[#allocation2] sm:$0xff] %v447
        %452 = vst [vmem:[#allocation2 + $0x8] sm:$0xff] %v448
        %453 = vst [vmem:[#allocation2 + $0x10] sm:$0xff] %v449
        %454 = vst [vmem:[#allocation2 + $0x18] sm:$0xff] %v450
        %p455 = scmp.eq.s32.totalorder %s21, 2
        // Predicated region
        $region78: #{resnet_generator_forward.13} parent=68 // pred_check
          %p456 = pneg %p455
        $region79: #{resnet_generator_forward.13} parent=68 // pred_check_branch
          %458 = sbr.rel (%p456) target = $region81
        $region80: #{resnet_generator_forward.13} parent=68 // pred_region
          %v459 = vld [vmem:[#allocation2] sm:$0xff]
          %v460 = vld [vmem:[#allocation2 + $0x8] sm:$0xff]
          %v461 = vld [vmem:[#allocation2 + $0x10] sm:$0xff]
          %v462 = vld [vmem:[#allocation2 + $0x18] sm:$0xff]
          %v463 = vld [vmem:[%s295] sm:$0x1]
          %v465 = vlaneseq
          %v466 = vshrl.u32 %v465, 7
          %v467 = vsub.s32 0, %v466
          %v468 = vrot.slane %v463, %v467
          %v470 = vadd.f32 %v459, %v468
          %v471 = vadd.f32 %v460, %v468
          %v472 = vadd.f32 %v461, %v468
          %v473 = vadd.f32 %v462, %v468
          %474 = vst [vmem:[%s303] sm:$0xff] %v470
          %475 = vst [vmem:[%s303 + $0x8] sm:$0xff] %v471
          %476 = vst [vmem:[%s303 + $0x10] sm:$0xff] %v472
          %477 = vst [vmem:[%s303 + $0x18] sm:$0xff] %v473
        $region81: #{resnet_generator_forward.13} parent=68 // pred_fallthru
          _
        %s478 = smul.u32 4, %s19
        %p479 = scmp.lt.s32.totalorder %s478, 3
        %s480 = scalar_select %p479, %s478, 3
        %p481 = scmp.lt.s32.totalorder %s20, 0
        %s482 = scalar_select %p481, %s20, 0
        %s483 = sadd.s32 %s482, %s480
        %s484 = smul.addr %s483, 8
        %s485 = scalar_lea.vmem %s3, %s484
        // Predicated region
        $region82: #{resnet_generator_forward.13} parent=68 // pred_check
          %p486 = pneg %p135
        $region83: #{resnet_generator_forward.13} parent=68 // pred_check_branch
          %488 = sbr.rel (%p486) target = $region85
        $region84: #{resnet_generator_forward.13} parent=68 // pred_region
          %s489 = smul.u32 4, %s19
        $region85: #{resnet_generator_forward.13} parent=68 // pred_fallthru
          _
        // Predicated region
        $region86: #{resnet_generator_forward.13} parent=68 // pred_check
          %p490 = pneg %p135
        $region87: #{resnet_generator_forward.13} parent=68 // pred_check_branch
          %492 = sbr.rel (%p490) target = $region89
        $region88: #{resnet_generator_forward.13} parent=68 // pred_region
          %s493 = smul.u32 4, %s19
          %p494 = scmp.lt.s32.totalorder %s493, 3
          %s495 = scalar_select %p494, %s493, 3
          %p496 = scmp.lt.s32.totalorder %s20, 0
          %s497 = scalar_select %p496, %s20, 0
          %s498 = sadd.s32 %s497, %s495
          %s499 = smul.addr %s498, 8
          %s500 = scalar_lea.vmem %s3, %s499
        $region89: #{resnet_generator_forward.13} parent=68 // pred_fallthru
          _
      $region69: #{resnet_generator_forward.13} parent=5 // pred_fallthru
        _
      %p501 = scmp.le.s32.totalorder 2, %s9
      // Predicated region
      $region90: #{resnet_generator_forward.13} parent=5 // pred_check
        %p502 = pneg %p501
      $region91: #{resnet_generator_forward.13} parent=5 // pred_check_branch
        %504 = sbr.rel (%p502) target = $region93
      $region92: #{resnet_generator_forward.13} parent=5 // pred_region
        %s505 = ssub.s32 %s9, 2
      $region93: #{resnet_generator_forward.13} parent=5 // pred_fallthru
        _
    $region6: #{resnet_generator_forward.13} parent=1 // loop_footer
      %s13 = sadd.s32 1, %s9
    $region7: #{resnet_generator_forward.13} parent=1 // loop_footer_branch
      %8 = sbr.rel target = $region3
    $region8: #{resnet_generator_forward.13} parent=1 // loop_exit
      _

// kernel: resnet_generator_forward.17
$region0: #{resnet_generator_forward.17}
  #allocation0 [shape = 'u32[]', space=smem, size = 0x4, offset = 0x4, fixed_abs, tag = 'smem constant byte address 0x4 - core index']
  #allocation1 [shape = 'u32[144,128]{1,0:T(1,128)}', space=vmem, size = 0x12000, scoped, tag = 'internal scratch']
  #allocation2 [shape = 'f32[128,128]{1,0:T(8,128)}', space=vmem, size = 0x10000, scoped, tag = 'scratch operand']
  %s0 = inlined_call_operand.vmem [shape: bf16[128,384], index: 0, kind: input, shape index: {}]
  %s1 = inlined_call_operand.vmem [shape: bf16[384,128], index: 1, kind: input, shape index: {}]
  %s2 = inlined_call_operand.vmem [shape: f32[1,128], index: 2, kind: input, shape index: {}]
  %s3 = inlined_call_operand.vmem [shape: f32[128,128], index: 3, kind: output, shape index: {}]
  %s4 = sld [smem:[#allocation0]]
  $region94: #{resnet_generator_forward.17} parent=0
    _
  %s6 = ssub.s32 1, %s4
  %s7 = scalar_select 0, %s6, %s4
  $region1: #{resnet_generator_forward.17} parent=0
    #allocation3 [shape = 'u8[65536]{0}', space=vmem, size = 0x10000, scoped, tag = 'input window, operand 0']
    loop: start=0, step=1, limit=5
    $region2: #{resnet_generator_forward.17} parent=1 // loop_pre_header
      _
    $region3: #{resnet_generator_forward.17} parent=1 // loop_header
      %s9 = sphi 0, %s13
      %p10 = scmp.ge.s32.totalorder %s9, 5
      %s16 = sphi 0, %s35
      %s17 = sphi 0, %s31
      %s18 = sphi 0, %s27
      %s19 = sphi 0, %s16
      %s20 = sphi 0, %s17
      %s21 = sphi 0, %s18
      %s22 = sphi 0, %s19
      %s23 = sphi 0, %s20
      %s24 = sphi 0, %s21
      %s40 = sphi 0, %s42
      %s43 = sphi 0, %s40
      %s44 = sphi 0, %s43
      %s60 = sphi 0, %s44
      %s68 = sphi 0, %s70
      %s71 = sphi 0, %s68
      %s72 = sphi 0, %s71
      %s88 = sphi 0, %s72
      %s94 = sphi 0, %s96
      %s97 = sphi 0, %s94
      %s98 = sphi 0, %s97
      %s114 = sphi 0, %s98
      %s122 = sphi 0, %s124
      %s125 = sphi 0, %s122
      %s126 = sphi 0, %s125
      %s142 = sphi 0, %s126
    $region4: #{resnet_generator_forward.17} parent=1 // loop_header_branch
      %12 = sbr.rel (%p10) target = $region8
    $region5: #{resnet_generator_forward.17} parent=1 // loop_body
      %s14 = ssub.s32 %s9, 1
      %s15 = ssub.s32 %s9, 2
      %s25 = sadd.s32 1, %s18
      %p26 = scmp.ge.s32.totalorder %s25, 3
      %s27 = scalar_select %p26, 0, %s25
      %s28 = sadd.s32 1, %s17
      %s29 = scalar_select %p26, %s28, %s17
      %p30 = scmp.ge.s32.totalorder %s29, 1
      %s31 = scalar_select %p30, 0, %s29
      %s32 = sadd.s32 1, %s16
      %s33 = scalar_select %p30, %s32, %s16
      %p34 = scmp.ge.s32.totalorder %s33, 1
      %s35 = scalar_select %p34, 0, %s33
      %s36 = ssub.s32 %s16, %s35
      %s37 = ssub.s32 %s18, %s27
      %s38 = sor.u32 %s36, %s37
      %p39 = scmp.eq.s32.totalorder %s38, 0
      %s41 = sadd.s32 %s40, 1
      %s42 = scalar_select %p39, %s40, %s41
      %p45 = pneg %p39
      %p46 = scmp.eq.s32.totalorder %s9, 2
      %p47 = por %p45, %p46
      %p48 = scmp.ne.s32.totalorder %s40, %s43
      %p49 = scmp.eq.s32.totalorder %s9, 0
      %p50 = por %p48, %p49
      %p51 = scmp.ne.s32.totalorder %s40, %s43
      %p52 = scmp.eq.s32.totalorder %s14, 2
      %p53 = por %p51, %p52
      %p54 = scmp.ne.s32.totalorder %s43, %s44
      %p55 = scmp.eq.s32.totalorder %s14, 0
      %p56 = por %p54, %p55
      %p57 = scmp.ne.s32.totalorder %s43, %s44
      %p58 = scmp.eq.s32.totalorder %s15, 2
      %p59 = por %p57, %p58
      %p61 = scmp.ne.s32.totalorder %s44, %s60
      %p62 = scmp.eq.s32.totalorder %s15, 0
      %p63 = por %p61, %p62
      %s64 = ssub.s32 %s18, %s27
      %s65 = ssub.s32 %s17, %s31
      %s66 = sor.u32 %s64, %s65
      %p67 = scmp.eq.s32.totalorder %s66, 0
      %s69 = sadd.s32 %s68, 1
      %s70 = scalar_select %p67, %s68, %s69
      %p73 = pneg %p67
      %p74 = scmp.eq.s32.totalorder %s9, 2
      %p75 = por %p73, %p74
      %p76 = scmp.ne.s32.totalorder %s68, %s71
      %p77 = scmp.eq.s32.totalorder %s9, 0
      %p78 = por %p76, %p77
      %p79 = scmp.ne.s32.totalorder %s68, %s71
      %p80 = scmp.eq.s32.totalorder %s14, 2
      %p81 = por %p79, %p80
      %p82 = scmp.ne.s32.totalorder %s71, %s72
      %p83 = scmp.eq.s32.totalorder %s14, 0
      %p84 = por %p82, %p83
      %p85 = scmp.ne.s32.totalorder %s71, %s72
      %p86 = scmp.eq.s32.totalorder %s15, 2
      %p87 = por %p85, %p86
      %p89 = scmp.ne.s32.totalorder %s72, %s88
      %p90 = scmp.eq.s32.totalorder %s15, 0
      %p91 = por %p89, %p90
      %s92 = ssub.s32 %s17, %s31
      %p93 = scmp.eq.s32.totalorder %s92, 0
      %s95 = sadd.s32 %s94, 1
      %s96 = scalar_select %p93, %s94, %s95
      %p99 = pneg %p93
      %p100 = scmp.eq.s32.totalorder %s9, 2
      %p101 = por %p99, %p100
      %p102 = scmp.ne.s32.totalorder %s94, %s97
      %p103 = scmp.eq.s32.totalorder %s9, 0
      %p104 = por %p102, %p103
      %p105 = scmp.ne.s32.totalorder %s94, %s97
      %p106 = scmp.eq.s32.totalorder %s14, 2
      %p107 = por %p105, %p106
      %p108 = scmp.ne.s32.totalorder %s97, %s98
      %p109 = scmp.eq.s32.totalorder %s14, 0
      %p110 = por %p108, %p109
      %p111 = scmp.ne.s32.totalorder %s97, %s98
      %p112 = scmp.eq.s32.totalorder %s15, 2
      %p113 = por %p111, %p112
      %p115 = scmp.ne.s32.totalorder %s98, %s114
      %p116 = scmp.eq.s32.totalorder %s15, 0
      %p117 = por %p115, %p116
      %s118 = ssub.s32 %s16, %s35
      %s119 = ssub.s32 %s17, %s31
      %s120 = sor.u32 %s118, %s119
      %p121 = scmp.eq.s32.totalorder %s120, 0
      %s123 = sadd.s32 %s122, 1
      %s124 = scalar_select %p121, %s122, %s123
      %p127 = pneg %p121
      %p128 = scmp.eq.s32.totalorder %s9, 2
      %p129 = por %p127, %p128
      %p130 = scmp.ne.s32.totalorder %s122, %s125
      %p131 = scmp.eq.s32.totalorder %s9, 0
      %p132 = por %p130, %p131
      %p133 = scmp.ne.s32.totalorder %s122, %s125
      %p134 = scmp.eq.s32.totalorder %s14, 2
      %p135 = por %p133, %p134
      %p136 = scmp.ne.s32.totalorder %s125, %s126
      %p137 = scmp.eq.s32.totalorder %s14, 0
      %p138 = por %p136, %p137
      %p139 = scmp.ne.s32.totalorder %s125, %s126
      %p140 = scmp.eq.s32.totalorder %s15, 2
      %p141 = por %p139, %p140
      %p143 = scmp.ne.s32.totalorder %s126, %s142
      %p144 = scmp.eq.s32.totalorder %s15, 0
      %p145 = por %p143, %p144
      %p146 = scmp.le.s32.totalorder 1, %s9
      %p147 = scmp.lt.s32.totalorder %s9, 4
      %p148 = pnand %p146, %p147
      %p149 = pneg %p148
      // Predicated region
      $region9: #{resnet_generator_forward.17} parent=5 // pred_check
        _
      $region10: #{resnet_generator_forward.17} parent=5 // pred_check_branch
        %151 = sbr.rel (%p148) target = $region12
      $region11: #{resnet_generator_forward.17} parent=5 // pred_region
        %s152 = ssub.s32 %s9, 1
        // Predicated region
        $region13: #{resnet_generator_forward.17} parent=11 // pred_check
          %p153 = pneg %p110
        $region14: #{resnet_generator_forward.17} parent=11 // pred_check_branch
          %155 = sbr.rel (%p153) target = $region16
        $region15: #{resnet_generator_forward.17} parent=11 // pred_region
          %p156 = scmp.lt.s32.totalorder %s20, 0
          %s157 = scalar_select %p156, %s20, 0
          %s158 = scalar_lea.vmem %s2, %s157
        $region16: #{resnet_generator_forward.17} parent=11 // pred_fallthru
          _
      $region12: #{resnet_generator_forward.17} parent=5 // pred_fallthru
        _
      %p159 = scmp.lt.s32.totalorder %s9, 3
      // Predicated region
      $region17: #{resnet_generator_forward.17} parent=5 // pred_check
        %p160 = pneg %p159
      $region18: #{resnet_generator_forward.17} parent=5 // pred_check_branch
        %162 = sbr.rel (%p160) target = $region20
      $region19: #{resnet_generator_forward.17} parent=5 // pred_region
        // Predicated region
        $region21: #{resnet_generator_forward.17} parent=19 // pred_check
          %p163 = pneg %p50
        $region22: #{resnet_generator_forward.17} parent=19 // pred_check_branch
          %165 = sbr.rel (%p163) target = $region24
        $region23: #{resnet_generator_forward.17} parent=19 // pred_region
          %s166 = sand.u32 %s40, 1
          %s167 = sand.u32 %s40, 1
          %s168 = smul.addr %s167, 64
          %s169 = scalar_lea.vmem [#allocation3], %s168
          %s170 = smul.u32 16, %s16
          %s171 = smul.addr %s170, 3
          %s172 = sadd.s32 %s18, %s171
          %s173 = smul.addr %s172, 4
          %s174 = scalar_lea.vmem %s0, %s173
          // Predicated region
          $region25: #{resnet_generator_forward.17} parent=23 // pred_check
            _
          $region26: #{resnet_generator_forward.17} parent=23 // pred_check_branch
            %176 = sbr.rel (0) target = $region28
          $region27: #{resnet_generator_forward.17} parent=23 // pred_region
            // Predicated region
            $region29: #{resnet_generator_forward.17} parent=27 // pred_check
              _
            $region30: #{resnet_generator_forward.17} parent=27 // pred_check_branch
              %178 = sbr.rel target = $region32
            $region31: #{resnet_generator_forward.17} parent=27 // pred_region
              // Predicated region
              $region44: #{resnet_generator_forward.17} parent=31 // pred_check
                _
              $region45: #{resnet_generator_forward.17} parent=31 // pred_check_branch
                %223 = sbr.rel (0) target = $region47
              $region46: #{resnet_generator_forward.17} parent=31 // pred_region
                loop: start=0, step=1, limit=1
                $region48: #{resnet_generator_forward.17} parent=46 // loop_pre_header
                  _
                $region49: #{resnet_generator_forward.17} parent=46 // loop_header
                  %s225 = sphi 0, %s229
                  %p226 = scmp.ge.s32.totalorder %s225, 1
                  %s230 = sphi %s174, %s174
                  %s231 = sphi %s169, %s169
                $region50: #{resnet_generator_forward.17} parent=46 // loop_header_branch
                  %228 = sbr.rel (%p226) target = $region54
                $region51: #{resnet_generator_forward.17} parent=46 // loop_body
                  _
                $region52: #{resnet_generator_forward.17} parent=46 // loop_footer
                  %s229 = sadd.s32 1, %s225
                $region53: #{resnet_generator_forward.17} parent=46 // loop_footer_branch
                  %224 = sbr.rel target = $region49
                $region54: #{resnet_generator_forward.17} parent=46 // loop_exit
                  _
                loop: start=0, step=1, limit=1
                $region55: #{resnet_generator_forward.17} parent=46 // loop_pre_header
                  _
                $region56: #{resnet_generator_forward.17} parent=46 // loop_header
                  %s234 = sphi 0, %s238
                  %p235 = scmp.ge.s32.totalorder %s234, 1
                  %s239 = sphi %s174, %s174
                  %s240 = sphi %s169, %s169
                $region57: #{resnet_generator_forward.17} parent=46 // loop_header_branch
                  %237 = sbr.rel (%p235) target = $region61
                $region58: #{resnet_generator_forward.17} parent=46 // loop_body
                  %v241 = vld [vmem:[%s239] sm:$0xf]
                  %242 = vst [vmem:[%s240] sm:$0xf] %v241
                  %v243 = vld [vmem:[%s239 + $0xc] sm:$0xf]
                  %244 = vst [vmem:[%s240 + $0x4] sm:$0xf] %v243
                  %v245 = vld [vmem:[%s239 + $0x18] sm:$0xf]
                  %246 = vst [vmem:[%s240 + $0x8] sm:$0xf] %v245
                  %v247 = vld [vmem:[%s239 + $0x24] sm:$0xf]
                  %248 = vst [vmem:[%s240 + $0xc] sm:$0xf] %v247
                  %v249 = vld [vmem:[%s239 + $0x30] sm:$0xf]
                  %250 = vst [vmem:[%s240 + $0x10] sm:$0xf] %v249
                  %v251 = vld [vmem:[%s239 + $0x3c] sm:$0xf]
                  %252 = vst [vmem:[%s240 + $0x14] sm:$0xf] %v251
                  %v253 = vld [vmem:[%s239 + $0x48] sm:$0xf]
                  %254 = vst [vmem:[%s240 + $0x18] sm:$0xf] %v253
                  %v255 = vld [vmem:[%s239 + $0x54] sm:$0xf]
                  %256 = vst [vmem:[%s240 + $0x1c] sm:$0xf] %v255
                  %v257 = vld [vmem:[%s239 + $0x60] sm:$0xf]
                  %258 = vst [vmem:[%s240 + $0x20] sm:$0xf] %v257
                  %v259 = vld [vmem:[%s239 + $0x6c] sm:$0xf]
                  %260 = vst [vmem:[%s240 + $0x24] sm:$0xf] %v259
                  %v261 = vld [vmem:[%s239 + $0x78] sm:$0xf]
                  %262 = vst [vmem:[%s240 + $0x28] sm:$0xf] %v261
                  %v263 = vld [vmem:[%s239 + $0x84] sm:$0xf]
                  %264 = vst [vmem:[%s240 + $0x2c] sm:$0xf] %v263
                  %v265 = vld [vmem:[%s239 + $0x90] sm:$0xf]
                  %266 = vst [vmem:[%s240 + $0x30] sm:$0xf] %v265
                  %v267 = vld [vmem:[%s239 + $0x9c] sm:$0xf]
                  %268 = vst [vmem:[%s240 + $0x34] sm:$0xf] %v267
                  %v269 = vld [vmem:[%s239 + $0xa8] sm:$0xf]
                  %270 = vst [vmem:[%s240 + $0x38] sm:$0xf] %v269
                  %v271 = vld [vmem:[%s239 + $0xb4] sm:$0xf]
                  %272 = vst [vmem:[%s240 + $0x3c] sm:$0xf] %v271
                $region59: #{resnet_generator_forward.17} parent=46 // loop_footer
                  %s238 = sadd.s32 1, %s234
                $region60: #{resnet_generator_forward.17} parent=46 // loop_footer_branch
                  %233 = sbr.rel target = $region56
                $region61: #{resnet_generator_forward.17} parent=46 // loop_exit
                  _
              $region47: #{resnet_generator_forward.17} parent=31 // pred_fallthru
                _
            $region32: #{resnet_generator_forward.17} parent=27 // pred_fallthru
              _
            // Predicated region
            $region33: #{resnet_generator_forward.17} parent=27 // pred_check
              _
            $region34: #{resnet_generator_forward.17} parent=27 // pred_check_branch
              %180 = sbr.rel (0) target = $region36
            $region35: #{resnet_generator_forward.17} parent=27 // pred_region
              loop: start=0, step=1, limit=1
              $region37: #{resnet_generator_forward.17} parent=35 // loop_pre_header
                _
              $region38: #{resnet_generator_forward.17} parent=35 // loop_header
                %s183 = sphi 0, %s187
                %p184 = scmp.ge.s32.totalorder %s183, 1
                %s188 = sphi %s174, %s174
                %s189 = sphi %s169, %s169
              $region39: #{resnet_generator_forward.17} parent=35 // loop_header_branch
                %186 = sbr.rel (%p184) target = $region43
              $region40: #{resnet_generator_forward.17} parent=35 // loop_body
                %v190 = vld [vmem:[%s188] sm:$0xf]
                %191 = vst [vmem:[%s189] sm:$0xf] %v190
                %v192 = vld [vmem:[%s188 + $0xc] sm:$0xf]
                %193 = vst [vmem:[%s189 + $0x4] sm:$0xf] %v192
                %v194 = vld [vmem:[%s188 + $0x18] sm:$0xf]
                %195 = vst [vmem:[%s189 + $0x8] sm:$0xf] %v194
                %v196 = vld [vmem:[%s188 + $0x24] sm:$0xf]
                %197 = vst [vmem:[%s189 + $0xc] sm:$0xf] %v196
                %v198 = vld [vmem:[%s188 + $0x30] sm:$0xf]
                %199 = vst [vmem:[%s189 + $0x10] sm:$0xf] %v198
                %v200 = vld [vmem:[%s188 + $0x3c] sm:$0xf]
                %201 = vst [vmem:[%s189 + $0x14] sm:$0xf] %v200
                %v202 = vld [vmem:[%s188 + $0x48] sm:$0xf]
                %203 = vst [vmem:[%s189 + $0x18] sm:$0xf] %v202
                %v204 = vld [vmem:[%s188 + $0x54] sm:$0xf]
                %205 = vst [vmem:[%s189 + $0x1c] sm:$0xf] %v204
                %v206 = vld [vmem:[%s188 + $0x60] sm:$0xf]
                %207 = vst [vmem:[%s189 + $0x20] sm:$0xf] %v206
                %v208 = vld [vmem:[%s188 + $0x6c] sm:$0xf]
                %209 = vst [vmem:[%s189 + $0x24] sm:$0xf] %v208
                %v210 = vld [vmem:[%s188 + $0x78] sm:$0xf]
                %211 = vst [vmem:[%s189 + $0x28] sm:$0xf] %v210
                %v212 = vld [vmem:[%s188 + $0x84] sm:$0xf]
                %213 = vst [vmem:[%s189 + $0x2c] sm:$0xf] %v212
                %v214 = vld [vmem:[%s188 + $0x90] sm:$0xf]
                %215 = vst [vmem:[%s189 + $0x30] sm:$0xf] %v214
                %v216 = vld [vmem:[%s188 + $0x9c] sm:$0xf]
                %217 = vst [vmem:[%s189 + $0x34] sm:$0xf] %v216
                %v218 = vld [vmem:[%s188 + $0xa8] sm:$0xf]
                %219 = vst [vmem:[%s189 + $0x38] sm:$0xf] %v218
                %v220 = vld [vmem:[%s188 + $0xb4] sm:$0xf]
                %221 = vst [vmem:[%s189 + $0x3c] sm:$0xf] %v220
              $region41: #{resnet_generator_forward.17} parent=35 // loop_footer
                %s187 = sadd.s32 1, %s183
              $region42: #{resnet_generator_forward.17} parent=35 // loop_footer_branch
                %182 = sbr.rel target = $region38
              $region43: #{resnet_generator_forward.17} parent=35 // loop_exit
                _
            $region36: #{resnet_generator_forward.17} parent=27 // pred_fallthru
              _
          $region28: #{resnet_generator_forward.17} parent=23 // pred_fallthru
            _
          %273 = vnop
        $region24: #{resnet_generator_forward.17} parent=19 // pred_fallthru
          _
        // Predicated region
        $region62: #{resnet_generator_forward.17} parent=19 // pred_check
          %p274 = pneg %p78
        $region63: #{resnet_generator_forward.17} parent=19 // pred_check_branch
          %276 = sbr.rel (%p274) target = $region65
        $region64: #{resnet_generator_forward.17} parent=19 // pred_region
          %s277 = smul.u32 16, %s18
          %p278 = scmp.lt.s32.totalorder %s277, 47
          %s279 = scalar_select %p278, %s277, 47
          %p280 = scmp.lt.s32.totalorder %s17, 0
          %s281 = scalar_select %p280, %s17, 0
          %s282 = sadd.s32 %s281, %s279
          %s283 = smul.addr %s282, 4
          %s284 = scalar_lea.vmem %s1, %s283
          %s285 = smul.u32 16, %s18
        $region65: #{resnet_generator_forward.17} parent=19 // pred_fallthru
          _
      $region20: #{resnet_generator_forward.17} parent=5 // pred_fallthru
        _
      %p286 = scmp.le.s32.totalorder 1, %s9
      %p287 = scmp.lt.s32.totalorder %s9, 4
      %p288 = pnand %p286, %p287
      %p289 = pneg %p288
      // Predicated region
      $region66: #{resnet_generator_forward.17} parent=5 // pred_check
        _
      $region67: #{resnet_generator_forward.17} parent=5 // pred_check_branch
        %291 = sbr.rel (%p288) target = $region69
      $region68: #{resnet_generator_forward.17} parent=5 // pred_region
        %s292 = ssub.s32 %s9, 1
        %s293 = sand.u32 %s43, 1
        %s294 = sand.u32 %s43, 1
        %s295 = smul.addr %s294, 64
        %s296 = scalar_lea.vmem [#allocation3], %s295
        // Predicated region
        $region70: #{resnet_generator_forward.17} parent=68 // pred_check
          %p297 = pneg %p56
        $region71: #{resnet_generator_forward.17} parent=68 // pred_check_branch
          %299 = sbr.rel (%p297) target = $region73
        $region72: #{resnet_generator_forward.17} parent=68 // pred_region
          _
        $region73: #{resnet_generator_forward.17} parent=68 // pred_fallthru
          _
        %s300 = sand.u32 %s43, 1
        %s301 = sand.u32 %s43, 1
        %s302 = smul.addr %s301, 64
        %s303 = scalar_lea.vmem [#allocation3], %s302
        %p304 = pneg %p56
        %p305 = pneg %p53
        %s306 = smul.u32 16, %s21
        %p307 = scmp.lt.s32.totalorder %s306, 47
        %s308 = scalar_select %p307, %s306, 47
        %p309 = scmp.lt.s32.totalorder %s20, 0
        %s310 = scalar_select %p309, %s20, 0
        %s311 = sadd.s32 %s310, %s308
        %s312 = smul.addr %s311, 4
        %s313 = scalar_lea.vmem %s1, %s312
        %p314 = pneg %p84
        %p315 = pneg %p81
        %p316 = scmp.lt.s32.totalorder %s20, 0
        %s317 = scalar_select %p316, %s20, 0
        %s318 = scalar_lea.vmem %s2, %s317
        %p319 = pneg %p110
        %p320 = pneg %p107
        %p321 = pneg %p138
        %p322 = pneg %p135
        %s323 = smul.u32 16, %s19
        %p324 = scmp.lt.s32.totalorder %s323, 15
        %s325 = scalar_select %p324, %s323, 15
        %p326 = scmp.lt.s32.totalorder %s20, 0
        %s327 = scalar_select %p326, %s20, 0
        %s328 = sadd.s32 %s327, %s325
        %s329 = smul.addr %s328, 8
        %s330 = scalar_lea.vmem %s3, %s329
        %s331 = smul.u32 16, %s19
        %s332 = smul.u32 16, %s21
        %p333 = scmp.lt.s32.totalorder %s332, 47
        %s334 = scalar_select %p333, %s332, 47
        %p335 = scmp.lt.s32.totalorder %s20, 0
        %s336 = scalar_select %p335, %s20, 0
        %s337 = sadd.s32 %s336, %s334
        %s338 = smul.addr %s337, 4
        %s339 = scalar_lea.vmem %s1, %s338
        %s340 = smul.u32 16, %s21
        %p341 = scmp.lt.s32.totalorder %s20, 0
        %s342 = scalar_select %p341, %s20, 0
        %s343 = scalar_lea.vmem %s2, %s342
        %s344 = smul.u32 16, %s19
        %p345 = scmp.lt.s32.totalorder %s344, 15
        %s346 = scalar_select %p345, %s344, 15
        %p347 = scmp.lt.s32.totalorder %s20, 0
        %s348 = scalar_select %p347, %s20, 0
        %s349 = sadd.s32 %s348, %s346
        %s350 = smul.addr %s349, 8
        %s351 = scalar_lea.vmem %s3, %s350
        %s352 = smul.u32 16, %s19
        %p354 = scmp.eq.s32.totalorder %s21, 0
        // Predicated region
        $region74: #{resnet_generator_forward.17} parent=68 // pred_check
          %p355 = pneg %p354
        $region75: #{resnet_generator_forward.17} parent=68 // pred_check_branch
          %357 = sbr.rel (%p355) target = $region77
        $region76: #{resnet_generator_forward.17} parent=68 // pred_region
          %358 = vst [vmem:[#allocation2] sm:$0xff] 0.0
          %359 = vst [vmem:[#allocation2 + $0x8] sm:$0xff] 0.0
          %360 = vst [vmem:[#allocation2 + $0x10] sm:$0xff] 0.0
          %361 = vst [vmem:[#allocation2 + $0x18] sm:$0xff] 0.0
          %362 = vst [vmem:[#allocation2 + $0x20] sm:$0xff] 0.0
          %363 = vst [vmem:[#allocation2 + $0x28] sm:$0xff] 0.0
          %364 = vst [vmem:[#allocation2 + $0x30] sm:$0xff] 0.0
          %365 = vst [vmem:[#allocation2 + $0x38] sm:$0xff] 0.0
          %366 = vst [vmem:[#allocation2 + $0x40] sm:$0xff] 0.0
          %367 = vst [vmem:[#allocation2 + $0x48] sm:$0xff] 0.0
          %368 = vst [vmem:[#allocation2 + $0x50] sm:$0xff] 0.0
          %369 = vst [vmem:[#allocation2 + $0x58] sm:$0xff] 0.0
          %370 = vst [vmem:[#allocation2 + $0x60] sm:$0xff] 0.0
          %371 = vst [vmem:[#allocation2 + $0x68] sm:$0xff] 0.0
          %372 = vst [vmem:[#allocation2 + $0x70] sm:$0xff] 0.0
          %373 = vst [vmem:[#allocation2 + $0x78] sm:$0xff] 0.0
        $region77: #{resnet_generator_forward.17} parent=68 // pred_fallthru
          _
        %v374 = vld [vmem:[#allocation2] sm:$0xff]
        %v375 = vld [vmem:[#allocation2 + $0x8] sm:$0xff]
        %v376 = vld [vmem:[#allocation2 + $0x10] sm:$0xff]
        %v377 = vld [vmem:[#allocation2 + $0x18] sm:$0xff]
        %v378 = vld [vmem:[#allocation2 + $0x20] sm:$0xff]
        %v379 = vld [vmem:[#allocation2 + $0x28] sm:$0xff]
        %v380 = vld [vmem:[#allocation2 + $0x30] sm:$0xff]
        %v381 = vld [vmem:[#allocation2 + $0x38] sm:$0xff]
        %v382 = vld [vmem:[#allocation2 + $0x40] sm:$0xff]
        %v383 = vld [vmem:[#allocation2 + $0x48] sm:$0xff]
        %v384 = vld [vmem:[#allocation2 + $0x50] sm:$0xff]
        %v385 = vld [vmem:[#allocation2 + $0x58] sm:$0xff]
        %v386 = vld [vmem:[#allocation2 + $0x60] sm:$0xff]
        %v387 = vld [vmem:[#allocation2 + $0x68] sm:$0xff]
        %v388 = vld [vmem:[#allocation2 + $0x70] sm:$0xff]
        %v389 = vld [vmem:[#allocation2 + $0x78] sm:$0xff]
        %v390 = vld [vmem:[%s296] sm:$0xf]
        %v391 = vld [vmem:[%s296 + $0x4] sm:$0xf]
        %v392 = vld [vmem:[%s296 + $0x8] sm:$0xf]
        %v393 = vld [vmem:[%s296 + $0xc] sm:$0xf]
        %v394 = vld [vmem:[%s296 + $0x10] sm:$0xf]
        %v395 = vld [vmem:[%s296 + $0x14] sm:$0xf]
        %v396 = vld [vmem:[%s296 + $0x18] sm:$0xf]
        %v397 = vld [vmem:[%s296 + $0x1c] sm:$0xf]
        %v398 = vld [vmem:[%s296 + $0x20] sm:$0xf]
        %v399 = vld [vmem:[%s296 + $0x24] sm:$0xf]
        %v400 = vld [vmem:[%s296 + $0x28] sm:$0xf]
        %v401 = vld [vmem:[%s296 + $0x2c] sm:$0xf]
        %v402 = vld [vmem:[%s296 + $0x30] sm:$0xf]
        %v403 = vld [vmem:[%s296 + $0x34] sm:$0xf]
        %v404 = vld [vmem:[%s296 + $0x38] sm:$0xf]
        %v405 = vld [vmem:[%s296 + $0x3c] sm:$0xf]
        %v406 = vld [vmem:[%s339] sm:$0xf]
        %v407 = vld [vmem:[%s339 + $0x4] sm:$0xf]
        %v408 = vld [vmem:[%s339 + $0x8] sm:$0xf]
        %v409 = vld [vmem:[%s339 + $0xc] sm:$0xf]
        %v410 = vld [vmem:[%s339 + $0x10] sm:$0xf]
        %v411 = vld [vmem:[%s339 + $0x14] sm:$0xf]
        %v412 = vld [vmem:[%s339 + $0x18] sm:$0xf]
        %v413 = vld [vmem:[%s339 + $0x1c] sm:$0xf]
        %v414 = vld [vmem:[%s339 + $0x20] sm:$0xf]
        %v415 = vld [vmem:[%s339 + $0x24] sm:$0xf]
        %v416 = vld [vmem:[%s339 + $0x28] sm:$0xf]
        %v417 = vld [vmem:[%s339 + $0x2c] sm:$0xf]
        %v418 = vld [vmem:[%s339 + $0x30] sm:$0xf]
        %v419 = vld [vmem:[%s339 + $0x34] sm:$0xf]
        %v420 = vld [vmem:[%s339 + $0x38] sm:$0xf]
        %v421 = vld [vmem:[%s339 + $0x3c] sm:$0xf]
        %v438 = vunpack.c.l.b16 %v390
        %v439 = vunpack.c.l.b16 %v391
        %v440 = vunpack.c.l.b16 %v392
        %v441 = vunpack.c.l.b16 %v393
        %v442 = vunpack.c.l.b16 %v394
        %v443 = vunpack.c.l.b16 %v395
        %v444 = vunpack.c.l.b16 %v396
        %v445 = vunpack.c.l.b16 %v397
        %v446 = vunpack.c.l.b16 %v398
        %v447 = vunpack.c.l.b16 %v399
        %v448 = vunpack.c.l.b16 %v400
        %v449 = vunpack.c.l.b16 %v401
        %v450 = vunpack.c.l.b16 %v402
        %v451 = vunpack.c.l.b16 %v403
        %v452 = vunpack.c.l.b16 %v404
        %v453 = vunpack.c.l.b16 %v405
        %v454 = vpack.c.b16 %v439, %v438
        %v455 = vpack.c.b16 %v441, %v440
        %v456 = vpack.c.b16 %v443, %v442
        %v457 = vpack.c.b16 %v445, %v444
        %v458 = vpack.c.b16 %v447, %v446
        %v459 = vpack.c.b16 %v449, %v448
        %v460 = vpack.c.b16 %v451, %v450
        %v461 = vpack.c.b16 %v453, %v452
        %v486 = vunpack.c.l.b16 %v406
        %v487 = vunpack.c.l.b16 %v407
        %v488 = vunpack.c.l.b16 %v408
        %v489 = vunpack.c.l.b16 %v409
        %v490 = vunpack.c.l.b16 %v410
        %v491 = vunpack.c.l.b16 %v411
        %v492 = vunpack.c.l.b16 %v412
        %v493 = vunpack.c.l.b16 %v413
        %v494 = vunpack.c.l.b16 %v414
        %v495 = vunpack.c.l.b16 %v415
        %v496 = vunpack.c.l.b16 %v416
        %v497 = vunpack.c.l.b16 %v417
        %v498 = vunpack.c.l.b16 %v418
        %v499 = vunpack.c.l.b16 %v419
        %v500 = vunpack.c.l.b16 %v420
        %v501 = vunpack.c.l.b16 %v421
        %v502 = vpack.c.b16 %v487, %v486
        %v503 = vpack.c.b16 %v489, %v488
        %v504 = vpack.c.b16 %v491, %v490
        %v505 = vpack.c.b16 %v493, %v492
        %v506 = vpack.c.b16 %v495, %v494
        %v507 = vpack.c.b16 %v497, %v496
        %v508 = vpack.c.b16 %v499, %v498
        %v509 = vpack.c.b16 %v501, %v500
        %518 = vmatprep.subr.bf16.mxu0 0
        %519 = vmatpush1.bf16.msra.mxu0 %v502
        %520 = vmatprep.subr.bf16.mxu0 0
        %521 = vmatpush1.bf16.msra.mxu0 %v503
        %522 = vmatprep.subr.bf16.mxu0 0
        %523 = vmatpush1.bf16.msra.mxu0 %v504
        %524 = vmatprep.subr.bf16.mxu0 0
        %525 = vmatpush1.bf16.msra.mxu0 %v505
        %526 = vmatprep.subr.bf16.mxu0 0
        %527 = vmatpush1.bf16.msra.mxu0 %v506
        %528 = vmatprep.subr.bf16.mxu0 0
        %529 = vmatpush1.bf16.msra.mxu0 %v507
        %530 = vmatprep.subr.bf16.mxu0 0
        %531 = vmatpush1.bf16.msra.mxu0 %v508
        %532 = vmatprep.subr.bf16.mxu0 0
        %533 = vmatpush1.bf16.msra.mxu0 %v509
        %534 = vmatprep.subr.bf16.mxu0 0
        %535 = vmatpush1.bf16.msra.mxu0 0
        %536 = vmatprep.subr.bf16.mxu0 0
        %537 = vmatpush1.bf16.msra.mxu0 0
        %538 = vmatprep.subr.bf16.mxu0 0
        %539 = vmatpush1.bf16.msra.mxu0 0
        %540 = vmatprep.subr.bf16.mxu0 0
        %541 = vmatpush1.bf16.msra.mxu0 0
        %542 = vmatprep.subr.bf16.mxu0 0
        %543 = vmatpush1.bf16.msra.mxu0 0
        %544 = vmatprep.subr.bf16.mxu0 0
        %545 = vmatpush1.bf16.msra.mxu0 0
        %546 = vmatprep.subr.bf16.mxu0 0
        %547 = vmatpush1.bf16.msra.mxu0 0
        %548 = vmatprep.subr.bf16.mxu0 0
        %549 = vmatpush1.bf16.msra.mxu0 0
        %550 = vmatprep.mubr.bf16.mxu0 0
        %551 = vmatmul.mubr.bf16.gmra.mrb[0].mxu0 %v454
        %v552 = vpop.f32.mrb[0].mxu0
        %v553 = vadd.f32 0.0, %v552
        %v554 = vpop.f32.mrb[0].mxu0
        %v555 = vpop.f32.mrb[0].mxu0
        %v556 = vadd.f32 0.0, %v555
        %v557 = vpop.f32.mrb[0].mxu0
        %558 = vmatprep.mubr.bf16.mxu0 0
        %559 = vmatmul.mubr.bf16.gmra.mrb[0].mxu0 %v455
        %v560 = vpop.f32.mrb[0].mxu0
        %v561 = vadd.f32 0.0, %v560
        %v562 = vpop.f32.mrb[0].mxu0
        %v563 = vpop.f32.mrb[0].mxu0
        %v564 = vadd.f32 0.0, %v563
        %v565 = vpop.f32.mrb[0].mxu0
        %566 = vmatprep.mubr.bf16.mxu0 0
        %567 = vmatmul.mubr.bf16.gmra.mrb[0].mxu0 %v456
        %v568 = vpop.f32.mrb[0].mxu0
        %v569 = vadd.f32 0.0, %v568
        %v570 = vpop.f32.mrb[0].mxu0
        %v571 = vpop.f32.mrb[0].mxu0
        %v572 = vadd.f32 0.0, %v571
        %v573 = vpop.f32.mrb[0].mxu0
        %574 = vmatprep.mubr.bf16.mxu0 0
        %575 = vmatmul.mubr.bf16.gmra.mrb[0].mxu0 %v457
        %v576 = vpop.f32.mrb[0].mxu0
        %v577 = vadd.f32 0.0, %v576
        %v578 = vpop.f32.mrb[0].mxu0
        %v579 = vpop.f32.mrb[0].mxu0
        %v580 = vadd.f32 0.0, %v579
        %v581 = vpop.f32.mrb[0].mxu0
        %582 = vmatprep.mubr.bf16.mxu0 0
        %583 = vmatmul.mubr.bf16.gmra.mrb[0].mxu0 %v458
        %v584 = vpop.f32.mrb[0].mxu0
        %v585 = vadd.f32 0.0, %v584
        %v586 = vpop.f32.mrb[0].mxu0
        %v587 = vpop.f32.mrb[0].mxu0
        %v588 = vadd.f32 0.0, %v587
        %v589 = vpop.f32.mrb[0].mxu0
        %590 = vmatprep.mubr.bf16.mxu0 0
        %591 = vmatmul.mubr.bf16.gmra.mrb[0].mxu0 %v459
        %v592 = vpop.f32.mrb[0].mxu0
        %v593 = vadd.f32 0.0, %v592
        %v594 = vpop.f32.mrb[0].mxu0
        %v595 = vpop.f32.mrb[0].mxu0
        %v596 = vadd.f32 0.0, %v595
        %v597 = vpop.f32.mrb[0].mxu0
        %598 = vmatprep.mubr.bf16.mxu0 0
        %599 = vmatmul.mubr.bf16.gmra.mrb[0].mxu0 %v460
        %v600 = vpop.f32.mrb[0].mxu0
        %v601 = vadd.f32 0.0, %v600
        %v602 = vpop.f32.mrb[0].mxu0
        %v603 = vpop.f32.mrb[0].mxu0
        %v604 = vadd.f32 0.0, %v603
        %v605 = vpop.f32.mrb[0].mxu0
        %606 = vmatprep.mubr.bf16.mxu0 0
        %607 = vmatmul.mubr.bf16.gmra.mrb[0].mxu0 %v461
        %v608 = vpop.f32.mrb[0].mxu0
        %v609 = vadd.f32 0.0, %v608
        %v610 = vpop.f32.mrb[0].mxu0
        %v611 = vpop.f32.mrb[0].mxu0
        %v612 = vadd.f32 0.0, %v611
        %v613 = vpop.f32.mrb[0].mxu0
        %614 = vdwg.mxu0
        %v615 = vadd.f32 %v374, %v553
        %v616 = vadd.f32 %v375, %v556
        %v617 = vadd.f32 %v376, %v561
        %v618 = vadd.f32 %v377, %v564
        %v619 = vadd.f32 %v378, %v569
        %v620 = vadd.f32 %v379, %v572
        %v621 = vadd.f32 %v380, %v577
        %v622 = vadd.f32 %v381, %v580
        %v623 = vadd.f32 %v382, %v585
        %v624 = vadd.f32 %v383, %v588
        %v625 = vadd.f32 %v384, %v593
        %v626 = vadd.f32 %v385, %v596
        %v627 = vadd.f32 %v386, %v601
        %v628 = vadd.f32 %v387, %v604
        %v629 = vadd.f32 %v388, %v609
        %v630 = vadd.f32 %v389, %v612
        %631 = vst [vmem:[#allocation2] sm:$0xff] %v615
        %632 = vst [vmem:[#allocation2 + $0x8] sm:$0xff] %v616
        %633 = vst [vmem:[#allocation2 + $0x10] sm:$0xff] %v617
        %634 = vst [vmem:[#allocation2 + $0x18] sm:$0xff] %v618
        %635 = vst [vmem:[#allocation2 + $0x20] sm:$0xff] %v619
        %636 = vst [vmem:[#allocation2 + $0x28] sm:$0xff] %v620
        %637 = vst [vmem:[#allocation2 + $0x30] sm:$0xff] %v621
        %638 = vst [vmem:[#allocation2 + $0x38] sm:$0xff] %v622
        %639 = vst [vmem:[#allocation2 + $0x40] sm:$0xff] %v623
        %640 = vst [vmem:[#allocation2 + $0x48] sm:$0xff] %v624
        %641 = vst [vmem:[#allocation2 + $0x50] sm:$0xff] %v625
        %642 = vst [vmem:[#allocation2 + $0x58] sm:$0xff] %v626
        %643 = vst [vmem:[#allocation2 + $0x60] sm:$0xff] %v627
        %644 = vst [vmem:[#allocation2 + $0x68] sm:$0xff] %v628
        %645 = vst [vmem:[#allocation2 + $0x70] sm:$0xff] %v629
        %646 = vst [vmem:[#allocation2 + $0x78] sm:$0xff] %v630
        %p647 = scmp.eq.s32.totalorder %s21, 2
        // Predicated region
        $region78: #{resnet_generator_forward.17} parent=68 // pred_check
          %p648 = pneg %p647
        $region79: #{resnet_generator_forward.17} parent=68 // pred_check_branch
          %650 = sbr.rel (%p648) target = $region81
        $region80: #{resnet_generator_forward.17} parent=68 // pred_region
          %v651 = vld [vmem:[#allocation2] sm:$0xff]
          %v652 = vld [vmem:[#allocation2 + $0x8] sm:$0xff]
          %v653 = vld [vmem:[#allocation2 + $0x10] sm:$0xff]
          %v654 = vld [vmem:[#allocation2 + $0x18] sm:$0xff]
          %v655 = vld [vmem:[#allocation2 + $0x20] sm:$0xff]
          %v656 = vld [vmem:[#allocation2 + $0x28] sm:$0xff]
          %v657 = vld [vmem:[#allocation2 + $0x30] sm:$0xff]
          %v658 = vld [vmem:[#allocation2 + $0x38] sm:$0xff]
          %v659 = vld [vmem:[#allocation2 + $0x40] sm:$0xff]
          %v660 = vld [vmem:[#allocation2 + $0x48] sm:$0xff]
          %v661 = vld [vmem:[#allocation2 + $0x50] sm:$0xff]
          %v662 = vld [vmem:[#allocation2 + $0x58] sm:$0xff]
          %v663 = vld [vmem:[#allocation2 + $0x60] sm:$0xff]
          %v664 = vld [vmem:[#allocation2 + $0x68] sm:$0xff]
          %v665 = vld [vmem:[#allocation2 + $0x70] sm:$0xff]
          %v666 = vld [vmem:[#allocation2 + $0x78] sm:$0xff]
          %v667 = vld [vmem:[%s343] sm:$0x1]
          %v669 = vlaneseq
          %v670 = vshrl.u32 %v669, 7
          %v671 = vsub.s32 0, %v670
          %v672 = vrot.slane %v667, %v671
          %v674 = vadd.f32 %v651, %v672
          %v675 = vadd.f32 %v652, %v672
          %v676 = vadd.f32 %v653, %v672
          %v677 = vadd.f32 %v654, %v672
          %v678 = vadd.f32 %v655, %v672
          %v679 = vadd.f32 %v656, %v672
          %v680 = vadd.f32 %v657, %v672
          %v681 = vadd.f32 %v658, %v672
          %v682 = vadd.f32 %v659, %v672
          %v683 = vadd.f32 %v660, %v672
          %v684 = vadd.f32 %v661, %v672
          %v685 = vadd.f32 %v662, %v672
          %v686 = vadd.f32 %v663, %v672
          %v687 = vadd.f32 %v664, %v672
          %v688 = vadd.f32 %v665, %v672
          %v689 = vadd.f32 %v666, %v672
          %690 = vst [vmem:[%s351] sm:$0xff] %v674
          %691 = vst [vmem:[%s351 + $0x8] sm:$0xff] %v675
          %692 = vst [vmem:[%s351 + $0x10] sm:$0xff] %v676
          %693 = vst [vmem:[%s351 + $0x18] sm:$0xff] %v677
          %694 = vst [vmem:[%s351 + $0x20] sm:$0xff] %v678
          %695 = vst [vmem:[%s351 + $0x28] sm:$0xff] %v679
          %696 = vst [vmem:[%s351 + $0x30] sm:$0xff] %v680
          %697 = vst [vmem:[%s351 + $0x38] sm:$0xff] %v681
          %698 = vst [vmem:[%s351 + $0x40] sm:$0xff] %v682
          %699 = vst [vmem:[%s351 + $0x48] sm:$0xff] %v683
          %700 = vst [vmem:[%s351 + $0x50] sm:$0xff] %v684
          %701 = vst [vmem:[%s351 + $0x58] sm:$0xff] %v685
          %702 = vst [vmem:[%s351 + $0x60] sm:$0xff] %v686
          %703 = vst [vmem:[%s351 + $0x68] sm:$0xff] %v687
          %704 = vst [vmem:[%s351 + $0x70] sm:$0xff] %v688
          %705 = vst [vmem:[%s351 + $0x78] sm:$0xff] %v689
        $region81: #{resnet_generator_forward.17} parent=68 // pred_fallthru
          _
        %s706 = smul.u32 16, %s19
        %p707 = scmp.lt.s32.totalorder %s706, 15
        %s708 = scalar_select %p707, %s706, 15
        %p709 = scmp.lt.s32.totalorder %s20, 0
        %s710 = scalar_select %p709, %s20, 0
        %s711 = sadd.s32 %s710, %s708
        %s712 = smul.addr %s711, 8
        %s713 = scalar_lea.vmem %s3, %s712
        // Predicated region
        $region82: #{resnet_generator_forward.17} parent=68 // pred_check
          %p714 = pneg %p135
        $region83: #{resnet_generator_forward.17} parent=68 // pred_check_branch
          %716 = sbr.rel (%p714) target = $region85
        $region84: #{resnet_generator_forward.17} parent=68 // pred_region
          %s717 = smul.u32 16, %s19
        $region85: #{resnet_generator_forward.17} parent=68 // pred_fallthru
          _
        // Predicated region
        $region86: #{resnet_generator_forward.17} parent=68 // pred_check
          %p718 = pneg %p135
        $region87: #{resnet_generator_forward.17} parent=68 // pred_check_branch
          %720 = sbr.rel (%p718) target = $region89
        $region88: #{resnet_generator_forward.17} parent=68 // pred_region
          %s721 = smul.u32 16, %s19
          %p722 = scmp.lt.s32.totalorder %s721, 15
          %s723 = scalar_select %p722, %s721, 15
          %p724 = scmp.lt.s32.totalorder %s20, 0
          %s725 = scalar_select %p724, %s20, 0
          %s726 = sadd.s32 %s725, %s723
          %s727 = smul.addr %s726, 8
          %s728 = scalar_lea.vmem %s3, %s727
        $region89: #{resnet_generator_forward.17} parent=68 // pred_fallthru
          _
      $region69: #{resnet_generator_forward.17} parent=5 // pred_fallthru
        _
      %p729 = scmp.le.s32.totalorder 2, %s9
      // Predicated region
      $region90: #{resnet_generator_forward.17} parent=5 // pred_check
        %p730 = pneg %p729
      $region91: #{resnet_generator_forward.17} parent=5 // pred_check_branch
        %732 = sbr.rel (%p730) target = $region93
      $region92: #{resnet_generator_forward.17} parent=5 // pred_region
        %s733 = ssub.s32 %s9, 2
      $region93: #{resnet_generator_forward.17} parent=5 // pred_fallthru
        _
    $region6: #{resnet_generator_forward.17} parent=1 // loop_footer
      %s13 = sadd.s32 1, %s9
    $region7: #{resnet_generator_forward.17} parent=1 // loop_footer_branch
      %8 = sbr.rel target = $region3
    $region8: #{resnet_generator_forward.17} parent=1 // loop_exit
      _

// kernel: resnet_generator_forward.19
$region0: #{resnet_generator_forward.19}
  #allocation0 [shape = 'u32[]', space=smem, size = 0x4, offset = 0x4, fixed_abs, tag = 'smem constant byte address 0x4 - core index']
  #allocation1 [shape = 'u32[144,128]{1,0:T(1,128)}', space=vmem, size = 0x12000, scoped, tag = 'internal scratch']
  #allocation2 [shape = 'f32[128,128]{1,0:T(8,128)}', space=vmem, size = 0x10000, scoped, tag = 'scratch operand']
  %s0 = inlined_call_operand.vmem [shape: bf16[512,512], index: 0, kind: input, shape index: {}]
  %s1 = inlined_call_operand.vmem [shape: bf16[512,128], index: 1, kind: input, shape index: {}]
  %s2 = inlined_call_operand.vmem [shape: f32[1,128], index: 2, kind: input, shape index: {}]
  %s3 = inlined_call_operand.vmem [shape: f32[512,128], index: 3, kind: output, shape index: {}]
  %s4 = sld [smem:[#allocation0]]
  $region94: #{resnet_generator_forward.19} parent=0
    _
  %s6 = ssub.s32 1, %s4
  %s7 = scalar_select 0, %s6, %s4
  $region1: #{resnet_generator_forward.19} parent=0
    #allocation3 [shape = 'u8[65536]{0}', space=vmem, size = 0x10000, scoped, tag = 'input window, operand 0']
    loop: start=0, step=1, limit=18
    $region2: #{resnet_generator_forward.19} parent=1 // loop_pre_header
      _
    $region3: #{resnet_generator_forward.19} parent=1 // loop_header
      %s9 = sphi 0, %s13
      %p10 = scmp.ge.s32.totalorder %s9, 18
      %s16 = sphi 0, %s35
      %s17 = sphi 0, %s31
      %s18 = sphi 0, %s27
      %s19 = sphi 0, %s16
      %s20 = sphi 0, %s17
      %s21 = sphi 0, %s18
      %s22 = sphi 0, %s19
      %s23 = sphi 0, %s20
      %s24 = sphi 0, %s21
      %s40 = sphi 0, %s42
      %s43 = sphi 0, %s40
      %s44 = sphi 0, %s43
      %s60 = sphi 0, %s44
      %s68 = sphi 0, %s70
      %s71 = sphi 0, %s68
      %s72 = sphi 0, %s71
      %s88 = sphi 0, %s72
      %s94 = sphi 0, %s96
      %s97 = sphi 0, %s94
      %s98 = sphi 0, %s97
      %s114 = sphi 0, %s98
      %s122 = sphi 0, %s124
      %s125 = sphi 0, %s122
      %s126 = sphi 0, %s125
      %s142 = sphi 0, %s126
    $region4: #{resnet_generator_forward.19} parent=1 // loop_header_branch
      %12 = sbr.rel (%p10) target = $region8
    $region5: #{resnet_generator_forward.19} parent=1 // loop_body
      %s14 = ssub.s32 %s9, 1
      %s15 = ssub.s32 %s9, 2
      %s25 = sadd.s32 1, %s18
      %p26 = scmp.ge.s32.totalorder %s25, 4
      %s27 = scalar_select %p26, 0, %s25
      %s28 = sadd.s32 1, %s17
      %s29 = scalar_select %p26, %s28, %s17
      %p30 = scmp.ge.s32.totalorder %s29, 1
      %s31 = scalar_select %p30, 0, %s29
      %s32 = sadd.s32 1, %s16
      %s33 = scalar_select %p30, %s32, %s16
      %p34 = scmp.ge.s32.totalorder %s33, 4
      %s35 = scalar_select %p34, 0, %s33
      %s36 = ssub.s32 %s16, %s35
      %s37 = ssub.s32 %s18, %s27
      %s38 = sor.u32 %s36, %s37
      %p39 = scmp.eq.s32.totalorder %s38, 0
      %s41 = sadd.s32 %s40, 1
      %s42 = scalar_select %p39, %s40, %s41
      %p45 = pneg %p39
      %p46 = scmp.eq.s32.totalorder %s9, 15
      %p47 = por %p45, %p46
      %p48 = scmp.ne.s32.totalorder %s40, %s43
      %p49 = scmp.eq.s32.totalorder %s9, 0
      %p50 = por %p48, %p49
      %p51 = scmp.ne.s32.totalorder %s40, %s43
      %p52 = scmp.eq.s32.totalorder %s14, 15
      %p53 = por %p51, %p52
      %p54 = scmp.ne.s32.totalorder %s43, %s44
      %p55 = scmp.eq.s32.totalorder %s14, 0
      %p56 = por %p54, %p55
      %p57 = scmp.ne.s32.totalorder %s43, %s44
      %p58 = scmp.eq.s32.totalorder %s15, 15
      %p59 = por %p57, %p58
      %p61 = scmp.ne.s32.totalorder %s44, %s60
      %p62 = scmp.eq.s32.totalorder %s15, 0
      %p63 = por %p61, %p62
      %s64 = ssub.s32 %s18, %s27
      %s65 = ssub.s32 %s17, %s31
      %s66 = sor.u32 %s64, %s65
      %p67 = scmp.eq.s32.totalorder %s66, 0
      %s69 = sadd.s32 %s68, 1
      %s70 = scalar_select %p67, %s68, %s69
      %p73 = pneg %p67
      %p74 = scmp.eq.s32.totalorder %s9, 15
      %p75 = por %p73, %p74
      %p76 = scmp.ne.s32.totalorder %s68, %s71
      %p77 = scmp.eq.s32.totalorder %s9, 0
      %p78 = por %p76, %p77
      %p79 = scmp.ne.s32.totalorder %s68, %s71
      %p80 = scmp.eq.s32.totalorder %s14, 15
      %p81 = por %p79, %p80
      %p82 = scmp.ne.s32.totalorder %s71, %s72
      %p83 = scmp.eq.s32.totalorder %s14, 0
      %p84 = por %p82, %p83
      %p85 = scmp.ne.s32.totalorder %s71, %s72
      %p86 = scmp.eq.s32.totalorder %s15, 15
      %p87 = por %p85, %p86
      %p89 = scmp.ne.s32.totalorder %s72, %s88
      %p90 = scmp.eq.s32.totalorder %s15, 0
      %p91 = por %p89, %p90
      %s92 = ssub.s32 %s17, %s31
      %p93 = scmp.eq.s32.totalorder %s92, 0
      %s95 = sadd.s32 %s94, 1
      %s96 = scalar_select %p93, %s94, %s95
      %p99 = pneg %p93
      %p100 = scmp.eq.s32.totalorder %s9, 15
      %p101 = por %p99, %p100
      %p102 = scmp.ne.s32.totalorder %s94, %s97
      %p103 = scmp.eq.s32.totalorder %s9, 0
      %p104 = por %p102, %p103
      %p105 = scmp.ne.s32.totalorder %s94, %s97
      %p106 = scmp.eq.s32.totalorder %s14, 15
      %p107 = por %p105, %p106
      %p108 = scmp.ne.s32.totalorder %s97, %s98
      %p109 = scmp.eq.s32.totalorder %s14, 0
      %p110 = por %p108, %p109
      %p111 = scmp.ne.s32.totalorder %s97, %s98
      %p112 = scmp.eq.s32.totalorder %s15, 15
      %p113 = por %p111, %p112
      %p115 = scmp.ne.s32.totalorder %s98, %s114
      %p116 = scmp.eq.s32.totalorder %s15, 0
      %p117 = por %p115, %p116
      %s118 = ssub.s32 %s16, %s35
      %s119 = ssub.s32 %s17, %s31
      %s120 = sor.u32 %s118, %s119
      %p121 = scmp.eq.s32.totalorder %s120, 0
      %s123 = sadd.s32 %s122, 1
      %s124 = scalar_select %p121, %s122, %s123
      %p127 = pneg %p121
      %p128 = scmp.eq.s32.totalorder %s9, 15
      %p129 = por %p127, %p128
      %p130 = scmp.ne.s32.totalorder %s122, %s125
      %p131 = scmp.eq.s32.totalorder %s9, 0
      %p132 = por %p130, %p131
      %p133 = scmp.ne.s32.totalorder %s122, %s125
      %p134 = scmp.eq.s32.totalorder %s14, 15
      %p135 = por %p133, %p134
      %p136 = scmp.ne.s32.totalorder %s125, %s126
      %p137 = scmp.eq.s32.totalorder %s14, 0
      %p138 = por %p136, %p137
      %p139 = scmp.ne.s32.totalorder %s125, %s126
      %p140 = scmp.eq.s32.totalorder %s15, 15
      %p141 = por %p139, %p140
      %p143 = scmp.ne.s32.totalorder %s126, %s142
      %p144 = scmp.eq.s32.totalorder %s15, 0
      %p145 = por %p143, %p144
      %p146 = scmp.le.s32.totalorder 1, %s9
      %p147 = scmp.lt.s32.totalorder %s9, 17
      %p148 = pnand %p146, %p147
      %p149 = pneg %p148
      // Predicated region
      $region9: #{resnet_generator_forward.19} parent=5 // pred_check
        _
      $region10: #{resnet_generator_forward.19} parent=5 // pred_check_branch
        %151 = sbr.rel (%p148) target = $region12
      $region11: #{resnet_generator_forward.19} parent=5 // pred_region
        %s152 = ssub.s32 %s9, 1
        // Predicated region
        $region13: #{resnet_generator_forward.19} parent=11 // pred_check
          %p153 = pneg %p110
        $region14: #{resnet_generator_forward.19} parent=11 // pred_check_branch
          %155 = sbr.rel (%p153) target = $region16
        $region15: #{resnet_generator_forward.19} parent=11 // pred_region
          %p156 = scmp.lt.s32.totalorder %s20, 0
          %s157 = scalar_select %p156, %s20, 0
          %s158 = scalar_lea.vmem %s2, %s157
        $region16: #{resnet_generator_forward.19} parent=11 // pred_fallthru
          _
      $region12: #{resnet_generator_forward.19} parent=5 // pred_fallthru
        _
      %p159 = scmp.lt.s32.totalorder %s9, 16
      // Predicated region
      $region17: #{resnet_generator_forward.19} parent=5 // pred_check
        %p160 = pneg %p159
      $region18: #{resnet_generator_forward.19} parent=5 // pred_check_branch
        %162 = sbr.rel (%p160) target = $region20
      $region19: #{resnet_generator_forward.19} parent=5 // pred_region
        // Predicated region
        $region21: #{resnet_generator_forward.19} parent=19 // pred_check
          %p163 = pneg %p50
        $region22: #{resnet_generator_forward.19} parent=19 // pred_check_branch
          %165 = sbr.rel (%p163) target = $region24
        $region23: #{resnet_generator_forward.19} parent=19 // pred_region
          %s166 = sand.u32 %s40, 1
          %s167 = sand.u32 %s40, 1
          %s168 = smul.addr %s167, 64
          %s169 = scalar_lea.vmem [#allocation3], %s168
          %s170 = smul.u32 16, %s16
          %s171 = smul.addr %s170, 4
          %s172 = sadd.s32 %s18, %s171
          %s173 = smul.addr %s172, 4
          %s174 = scalar_lea.vmem %s0, %s173
          // Predicated region
          $region25: #{resnet_generator_forward.19} parent=23 // pred_check
            _
          $region26: #{resnet_generator_forward.19} parent=23 // pred_check_branch
            %176 = sbr.rel (0) target = $region28
          $region27: #{resnet_generator_forward.19} parent=23 // pred_region
            // Predicated region
            $region29: #{resnet_generator_forward.19} parent=27 // pred_check
              _
            $region30: #{resnet_generator_forward.19} parent=27 // pred_check_branch
              %178 = sbr.rel target = $region32
            $region31: #{resnet_generator_forward.19} parent=27 // pred_region
              // Predicated region
              $region44: #{resnet_generator_forward.19} parent=31 // pred_check
                _
              $region45: #{resnet_generator_forward.19} parent=31 // pred_check_branch
                %223 = sbr.rel (0) target = $region47
              $region46: #{resnet_generator_forward.19} parent=31 // pred_region
                loop: start=0, step=1, limit=1
                $region48: #{resnet_generator_forward.19} parent=46 // loop_pre_header
                  _
                $region49: #{resnet_generator_forward.19} parent=46 // loop_header
                  %s225 = sphi 0, %s229
                  %p226 = scmp.ge.s32.totalorder %s225, 1
                  %s230 = sphi %s174, %s174
                  %s231 = sphi %s169, %s169
                $region50: #{resnet_generator_forward.19} parent=46 // loop_header_branch
                  %228 = sbr.rel (%p226) target = $region54
                $region51: #{resnet_generator_forward.19} parent=46 // loop_body
                  _
                $region52: #{resnet_generator_forward.19} parent=46 // loop_footer
                  %s229 = sadd.s32 1, %s225
                $region53: #{resnet_generator_forward.19} parent=46 // loop_footer_branch
                  %224 = sbr.rel target = $region49
                $region54: #{resnet_generator_forward.19} parent=46 // loop_exit
                  _
                loop: start=0, step=1, limit=1
                $region55: #{resnet_generator_forward.19} parent=46 // loop_pre_header
                  _
                $region56: #{resnet_generator_forward.19} parent=46 // loop_header
                  %s234 = sphi 0, %s238
                  %p235 = scmp.ge.s32.totalorder %s234, 1
                  %s239 = sphi %s174, %s174
                  %s240 = sphi %s169, %s169
                $region57: #{resnet_generator_forward.19} parent=46 // loop_header_branch
                  %237 = sbr.rel (%p235) target = $region61
                $region58: #{resnet_generator_forward.19} parent=46 // loop_body
                  %v241 = vld [vmem:[%s239] sm:$0xf]
                  %242 = vst [vmem:[%s240] sm:$0xf] %v241
                  %v243 = vld [vmem:[%s239 + $0x10] sm:$0xf]
                  %244 = vst [vmem:[%s240 + $0x4] sm:$0xf] %v243
                  %v245 = vld [vmem:[%s239 + $0x20] sm:$0xf]
                  %246 = vst [vmem:[%s240 + $0x8] sm:$0xf] %v245
                  %v247 = vld [vmem:[%s239 + $0x30] sm:$0xf]
                  %248 = vst [vmem:[%s240 + $0xc] sm:$0xf] %v247
                  %v249 = vld [vmem:[%s239 + $0x40] sm:$0xf]
                  %250 = vst [vmem:[%s240 + $0x10] sm:$0xf] %v249
                  %v251 = vld [vmem:[%s239 + $0x50] sm:$0xf]
                  %252 = vst [vmem:[%s240 + $0x14] sm:$0xf] %v251
                  %v253 = vld [vmem:[%s239 + $0x60] sm:$0xf]
                  %254 = vst [vmem:[%s240 + $0x18] sm:$0xf] %v253
                  %v255 = vld [vmem:[%s239 + $0x70] sm:$0xf]
                  %256 = vst [vmem:[%s240 + $0x1c] sm:$0xf] %v255
                  %v257 = vld [vmem:[%s239 + $0x80] sm:$0xf]
                  %258 = vst [vmem:[%s240 + $0x20] sm:$0xf] %v257
                  %v259 = vld [vmem:[%s239 + $0x90] sm:$0xf]
                  %260 = vst [vmem:[%s240 + $0x24] sm:$0xf] %v259
                  %v261 = vld [vmem:[%s239 + $0xa0] sm:$0xf]
                  %262 = vst [vmem:[%s240 + $0x28] sm:$0xf] %v261
                  %v263 = vld [vmem:[%s239 + $0xb0] sm:$0xf]
                  %264 = vst [vmem:[%s240 + $0x2c] sm:$0xf] %v263
                  %v265 = vld [vmem:[%s239 + $0xc0] sm:$0xf]
                  %266 = vst [vmem:[%s240 + $0x30] sm:$0xf] %v265
                  %v267 = vld [vmem:[%s239 + $0xd0] sm:$0xf]
                  %268 = vst [vmem:[%s240 + $0x34] sm:$0xf] %v267
                  %v269 = vld [vmem:[%s239 + $0xe0] sm:$0xf]
                  %270 = vst [vmem:[%s240 + $0x38] sm:$0xf] %v269
                  %v271 = vld [vmem:[%s239 + $0xf0] sm:$0xf]
                  %272 = vst [vmem:[%s240 + $0x3c] sm:$0xf] %v271
                $region59: #{resnet_generator_forward.19} parent=46 // loop_footer
                  %s238 = sadd.s32 1, %s234
                $region60: #{resnet_generator_forward.19} parent=46 // loop_footer_branch
                  %233 = sbr.rel target = $region56
                $region61: #{resnet_generator_forward.19} parent=46 // loop_exit
                  _
              $region47: #{resnet_generator_forward.19} parent=31 // pred_fallthru
                _
            $region32: #{resnet_generator_forward.19} parent=27 // pred_fallthru
              _
            // Predicated region
            $region33: #{resnet_generator_forward.19} parent=27 // pred_check
              _
            $region34: #{resnet_generator_forward.19} parent=27 // pred_check_branch
              %180 = sbr.rel (0) target = $region36
            $region35: #{resnet_generator_forward.19} parent=27 // pred_region
              loop: start=0, step=1, limit=1
              $region37: #{resnet_generator_forward.19} parent=35 // loop_pre_header
                _
              $region38: #{resnet_generator_forward.19} parent=35 // loop_header
                %s183 = sphi 0, %s187
                %p184 = scmp.ge.s32.totalorder %s183, 1
                %s188 = sphi %s174, %s174
                %s189 = sphi %s169, %s169
              $region39: #{resnet_generator_forward.19} parent=35 // loop_header_branch
                %186 = sbr.rel (%p184) target = $region43
              $region40: #{resnet_generator_forward.19} parent=35 // loop_body
                %v190 = vld [vmem:[%s188] sm:$0xf]
                %191 = vst [vmem:[%s189] sm:$0xf] %v190
                %v192 = vld [vmem:[%s188 + $0x10] sm:$0xf]
                %193 = vst [vmem:[%s189 + $0x4] sm:$0xf] %v192
                %v194 = vld [vmem:[%s188 + $0x20] sm:$0xf]
                %195 = vst [vmem:[%s189 + $0x8] sm:$0xf] %v194
                %v196 = vld [vmem:[%s188 + $0x30] sm:$0xf]
                %197 = vst [vmem:[%s189 + $0xc] sm:$0xf] %v196
                %v198 = vld [vmem:[%s188 + $0x40] sm:$0xf]
                %199 = vst [vmem:[%s189 + $0x10] sm:$0xf] %v198
                %v200 = vld [vmem:[%s188 + $0x50] sm:$0xf]
                %201 = vst [vmem:[%s189 + $0x14] sm:$0xf] %v200
                %v202 = vld [vmem:[%s188 + $0x60] sm:$0xf]
                %203 = vst [vmem:[%s189 + $0x18] sm:$0xf] %v202
                %v204 = vld [vmem:[%s188 + $0x70] sm:$0xf]
                %205 = vst [vmem:[%s189 + $0x1c] sm:$0xf] %v204
                %v206 = vld [vmem:[%s188 + $0x80] sm:$0xf]
                %207 = vst [vmem:[%s189 + $0x20] sm:$0xf] %v206
                %v208 = vld [vmem:[%s188 + $0x90] sm:$0xf]
                %209 = vst [vmem:[%s189 + $0x24] sm:$0xf] %v208
                %v210 = vld [vmem:[%s188 + $0xa0] sm:$0xf]
                %211 = vst [vmem:[%s189 + $0x28] sm:$0xf] %v210
                %v212 = vld [vmem:[%s188 + $0xb0] sm:$0xf]
                %213 = vst [vmem:[%s189 + $0x2c] sm:$0xf] %v212
                %v214 = vld [vmem:[%s188 + $0xc0] sm:$0xf]
                %215 = vst [vmem:[%s189 + $0x30] sm:$0xf] %v214
                %v216 = vld [vmem:[%s188 + $0xd0] sm:$0xf]
                %217 = vst [vmem:[%s189 + $0x34] sm:$0xf] %v216
                %v218 = vld [vmem:[%s188 + $0xe0] sm:$0xf]
                %219 = vst [vmem:[%s189 + $0x38] sm:$0xf] %v218
                %v220 = vld [vmem:[%s188 + $0xf0] sm:$0xf]
                %221 = vst [vmem:[%s189 + $0x3c] sm:$0xf] %v220
              $region41: #{resnet_generator_forward.19} parent=35 // loop_footer
                %s187 = sadd.s32 1, %s183
              $region42: #{resnet_generator_forward.19} parent=35 // loop_footer_branch
                %182 = sbr.rel target = $region38
              $region43: #{resnet_generator_forward.19} parent=35 // loop_exit
                _
            $region36: #{resnet_generator_forward.19} parent=27 // pred_fallthru
              _
          $region28: #{resnet_generator_forward.19} parent=23 // pred_fallthru
            _
          %273 = vnop
        $region24: #{resnet_generator_forward.19} parent=19 // pred_fallthru
          _
        // Predicated region
        $region62: #{resnet_generator_forward.19} parent=19 // pred_check
          %p274 = pneg %p78
        $region63: #{resnet_generator_forward.19} parent=19 // pred_check_branch
          %276 = sbr.rel (%p274) target = $region65
        $region64: #{resnet_generator_forward.19} parent=19 // pred_region
          %s277 = smul.u32 16, %s18
          %p278 = scmp.lt.s32.totalorder %s277, 63
          %s279 = scalar_select %p278, %s277, 63
          %p280 = scmp.lt.s32.totalorder %s17, 0
          %s281 = scalar_select %p280, %s17, 0
          %s282 = sadd.s32 %s281, %s279
          %s283 = smul.addr %s282, 4
          %s284 = scalar_lea.vmem %s1, %s283
          %s285 = smul.u32 16, %s18
        $region65: #{resnet_generator_forward.19} parent=19 // pred_fallthru
          _
      $region20: #{resnet_generator_forward.19} parent=5 // pred_fallthru
        _
      %p286 = scmp.le.s32.totalorder 1, %s9
      %p287 = scmp.lt.s32.totalorder %s9, 17
      %p288 = pnand %p286, %p287
      %p289 = pneg %p288
      // Predicated region
      $region66: #{resnet_generator_forward.19} parent=5 // pred_check
        _
      $region67: #{resnet_generator_forward.19} parent=5 // pred_check_branch
        %291 = sbr.rel (%p288) target = $region69
      $region68: #{resnet_generator_forward.19} parent=5 // pred_region
        %s292 = ssub.s32 %s9, 1
        %s293 = sand.u32 %s43, 1
        %s294 = sand.u32 %s43, 1
        %s295 = smul.addr %s294, 64
        %s296 = scalar_lea.vmem [#allocation3], %s295
        // Predicated region
        $region70: #{resnet_generator_forward.19} parent=68 // pred_check
          %p297 = pneg %p56
        $region71: #{resnet_generator_forward.19} parent=68 // pred_check_branch
          %299 = sbr.rel (%p297) target = $region73
        $region72: #{resnet_generator_forward.19} parent=68 // pred_region
          _
        $region73: #{resnet_generator_forward.19} parent=68 // pred_fallthru
          _
        %s300 = sand.u32 %s43, 1
        %s301 = sand.u32 %s43, 1
        %s302 = smul.addr %s301, 64
        %s303 = scalar_lea.vmem [#allocation3], %s302
        %p304 = pneg %p56
        %p305 = pneg %p53
        %s306 = smul.u32 16, %s21
        %p307 = scmp.lt.s32.totalorder %s306, 63
        %s308 = scalar_select %p307, %s306, 63
        %p309 = scmp.lt.s32.totalorder %s20, 0
        %s310 = scalar_select %p309, %s20, 0
        %s311 = sadd.s32 %s310, %s308
        %s312 = smul.addr %s311, 4
        %s313 = scalar_lea.vmem %s1, %s312
        %p314 = pneg %p84
        %p315 = pneg %p81
        %p316 = scmp.lt.s32.totalorder %s20, 0
        %s317 = scalar_select %p316, %s20, 0
        %s318 = scalar_lea.vmem %s2, %s317
        %p319 = pneg %p110
        %p320 = pneg %p107
        %p321 = pneg %p138
        %p322 = pneg %p135
        %s323 = smul.u32 16, %s19
        %p324 = scmp.lt.s32.totalorder %s323, 63
        %s325 = scalar_select %p324, %s323, 63
        %p326 = scmp.lt.s32.totalorder %s20, 0
        %s327 = scalar_select %p326, %s20, 0
        %s328 = sadd.s32 %s327, %s325
        %s329 = smul.addr %s328, 8
        %s330 = scalar_lea.vmem %s3, %s329
        %s331 = smul.u32 16, %s19
        %s332 = smul.u32 16, %s21
        %p333 = scmp.lt.s32.totalorder %s332, 63
        %s334 = scalar_select %p333, %s332, 63
        %p335 = scmp.lt.s32.totalorder %s20, 0
        %s336 = scalar_select %p335, %s20, 0
        %s337 = sadd.s32 %s336, %s334
        %s338 = smul.addr %s337, 4
        %s339 = scalar_lea.vmem %s1, %s338
        %s340 = smul.u32 16, %s21
        %p341 = scmp.lt.s32.totalorder %s20, 0
        %s342 = scalar_select %p341, %s20, 0
        %s343 = scalar_lea.vmem %s2, %s342
        %s344 = smul.u32 16, %s19
        %p345 = scmp.lt.s32.totalorder %s344, 63
        %s346 = scalar_select %p345, %s344, 63
        %p347 = scmp.lt.s32.totalorder %s20, 0
        %s348 = scalar_select %p347, %s20, 0
        %s349 = sadd.s32 %s348, %s346
        %s350 = smul.addr %s349, 8
        %s351 = scalar_lea.vmem %s3, %s350
        %s352 = smul.u32 16, %s19
        %p354 = scmp.eq.s32.totalorder %s21, 0
        // Predicated region
        $region74: #{resnet_generator_forward.19} parent=68 // pred_check
          %p355 = pneg %p354
        $region75: #{resnet_generator_forward.19} parent=68 // pred_check_branch
          %357 = sbr.rel (%p355) target = $region77
        $region76: #{resnet_generator_forward.19} parent=68 // pred_region
          %358 = vst [vmem:[#allocation2] sm:$0xff] 0.0
          %359 = vst [vmem:[#allocation2 + $0x8] sm:$0xff] 0.0
          %360 = vst [vmem:[#allocation2 + $0x10] sm:$0xff] 0.0
          %361 = vst [vmem:[#allocation2 + $0x18] sm:$0xff] 0.0
          %362 = vst [vmem:[#allocation2 + $0x20] sm:$0xff] 0.0
          %363 = vst [vmem:[#allocation2 + $0x28] sm:$0xff] 0.0
          %364 = vst [vmem:[#allocation2 + $0x30] sm:$0xff] 0.0
          %365 = vst [vmem:[#allocation2 + $0x38] sm:$0xff] 0.0
          %366 = vst [vmem:[#allocation2 + $0x40] sm:$0xff] 0.0
          %367 = vst [vmem:[#allocation2 + $0x48] sm:$0xff] 0.0
          %368 = vst [vmem:[#allocation2 + $0x50] sm:$0xff] 0.0
          %369 = vst [vmem:[#allocation2 + $0x58] sm:$0xff] 0.0
          %370 = vst [vmem:[#allocation2 + $0x60] sm:$0xff] 0.0
          %371 = vst [vmem:[#allocation2 + $0x68] sm:$0xff] 0.0
          %372 = vst [vmem:[#allocation2 + $0x70] sm:$0xff] 0.0
          %373 = vst [vmem:[#allocation2 + $0x78] sm:$0xff] 0.0
        $region77: #{resnet_generator_forward.19} parent=68 // pred_fallthru
          _
        %v374 = vld [vmem:[#allocation2] sm:$0xff]
        %v375 = vld [vmem:[#allocation2 + $0x8] sm:$0xff]
        %v376 = vld [vmem:[#allocation2 + $0x10] sm:$0xff]
        %v377 = vld [vmem:[#allocation2 + $0x18] sm:$0xff]
        %v378 = vld [vmem:[#allocation2 + $0x20] sm:$0xff]
        %v379 = vld [vmem:[#allocation2 + $0x28] sm:$0xff]
        %v380 = vld [vmem:[#allocation2 + $0x30] sm:$0xff]
        %v381 = vld [vmem:[#allocation2 + $0x38] sm:$0xff]
        %v382 = vld [vmem:[#allocation2 + $0x40] sm:$0xff]
        %v383 = vld [vmem:[#allocation2 + $0x48] sm:$0xff]
        %v384 = vld [vmem:[#allocation2 + $0x50] sm:$0xff]
        %v385 = vld [vmem:[#allocation2 + $0x58] sm:$0xff]
        %v386 = vld [vmem:[#allocation2 + $0x60] sm:$0xff]
        %v387 = vld [vmem:[#allocation2 + $0x68] sm:$0xff]
        %v388 = vld [vmem:[#allocation2 + $0x70] sm:$0xff]
        %v389 = vld [vmem:[#allocation2 + $0x78] sm:$0xff]
        %v390 = vld [vmem:[%s296] sm:$0xf]
        %v391 = vld [vmem:[%s296 + $0x4] sm:$0xf]
        %v392 = vld [vmem:[%s296 + $0x8] sm:$0xf]
        %v393 = vld [vmem:[%s296 + $0xc] sm:$0xf]
        %v394 = vld [vmem:[%s296 + $0x10] sm:$0xf]
        %v395 = vld [vmem:[%s296 + $0x14] sm:$0xf]
        %v396 = vld [vmem:[%s296 + $0x18] sm:$0xf]
        %v397 = vld [vmem:[%s296 + $0x1c] sm:$0xf]
        %v398 = vld [vmem:[%s296 + $0x20] sm:$0xf]
        %v399 = vld [vmem:[%s296 + $0x24] sm:$0xf]
        %v400 = vld [vmem:[%s296 + $0x28] sm:$0xf]
        %v401 = vld [vmem:[%s296 + $0x2c] sm:$0xf]
        %v402 = vld [vmem:[%s296 + $0x30] sm:$0xf]
        %v403 = vld [vmem:[%s296 + $0x34] sm:$0xf]
        %v404 = vld [vmem:[%s296 + $0x38] sm:$0xf]
        %v405 = vld [vmem:[%s296 + $0x3c] sm:$0xf]
        %v406 = vld [vmem:[%s339] sm:$0xf]
        %v407 = vld [vmem:[%s339 + $0x4] sm:$0xf]
        %v408 = vld [vmem:[%s339 + $0x8] sm:$0xf]
        %v409 = vld [vmem:[%s339 + $0xc] sm:$0xf]
        %v410 = vld [vmem:[%s339 + $0x10] sm:$0xf]
        %v411 = vld [vmem:[%s339 + $0x14] sm:$0xf]
        %v412 = vld [vmem:[%s339 + $0x18] sm:$0xf]
        %v413 = vld [vmem:[%s339 + $0x1c] sm:$0xf]
        %v414 = vld [vmem:[%s339 + $0x20] sm:$0xf]
        %v415 = vld [vmem:[%s339 + $0x24] sm:$0xf]
        %v416 = vld [vmem:[%s339 + $0x28] sm:$0xf]
        %v417 = vld [vmem:[%s339 + $0x2c] sm:$0xf]
        %v418 = vld [vmem:[%s339 + $0x30] sm:$0xf]
        %v419 = vld [vmem:[%s339 + $0x34] sm:$0xf]
        %v420 = vld [vmem:[%s339 + $0x38] sm:$0xf]
        %v421 = vld [vmem:[%s339 + $0x3c] sm:$0xf]
        %v438 = vunpack.c.l.b16 %v390
        %v439 = vunpack.c.l.b16 %v391
        %v440 = vunpack.c.l.b16 %v392
        %v441 = vunpack.c.l.b16 %v393
        %v442 = vunpack.c.l.b16 %v394
        %v443 = vunpack.c.l.b16 %v395
        %v444 = vunpack.c.l.b16 %v396
        %v445 = vunpack.c.l.b16 %v397
        %v446 = vunpack.c.l.b16 %v398
        %v447 = vunpack.c.l.b16 %v399
        %v448 = vunpack.c.l.b16 %v400
        %v449 = vunpack.c.l.b16 %v401
        %v450 = vunpack.c.l.b16 %v402
        %v451 = vunpack.c.l.b16 %v403
        %v452 = vunpack.c.l.b16 %v404
        %v453 = vunpack.c.l.b16 %v405
        %v454 = vpack.c.b16 %v439, %v438
        %v455 = vpack.c.b16 %v441, %v440
        %v456 = vpack.c.b16 %v443, %v442
        %v457 = vpack.c.b16 %v445, %v444
        %v458 = vpack.c.b16 %v447, %v446
        %v459 = vpack.c.b16 %v449, %v448
        %v460 = vpack.c.b16 %v451, %v450
        %v461 = vpack.c.b16 %v453, %v452
        %v486 = vunpack.c.l.b16 %v406
        %v487 = vunpack.c.l.b16 %v407
        %v488 = vunpack.c.l.b16 %v408
        %v489 = vunpack.c.l.b16 %v409
        %v490 = vunpack.c.l.b16 %v410
        %v491 = vunpack.c.l.b16 %v411
        %v492 = vunpack.c.l.b16 %v412
        %v493 = vunpack.c.l.b16 %v413
        %v494 = vunpack.c.l.b16 %v414
        %v495 = vunpack.c.l.b16 %v415
        %v496 = vunpack.c.l.b16 %v416
        %v497 = vunpack.c.l.b16 %v417
        %v498 = vunpack.c.l.b16 %v418
        %v499 = vunpack.c.l.b16 %v419
        %v500 = vunpack.c.l.b16 %v420
        %v501 = vunpack.c.l.b16 %v421
        %v502 = vpack.c.b16 %v487, %v486
        %v503 = vpack.c.b16 %v489, %v488
        %v504 = vpack.c.b16 %v491, %v490
        %v505 = vpack.c.b16 %v493, %v492
        %v506 = vpack.c.b16 %v495, %v494
        %v507 = vpack.c.b16 %v497, %v496
        %v508 = vpack.c.b16 %v499, %v498
        %v509 = vpack.c.b16 %v501, %v500
        %518 = vmatprep.subr.bf16.mxu0 0
        %519 = vmatpush1.bf16.msra.mxu0 %v502
        %520 = vmatprep.subr.bf16.mxu0 0
        %521 = vmatpush1.bf16.msra.mxu0 %v503
        %522 = vmatprep.subr.bf16.mxu0 0
        %523 = vmatpush1.bf16.msra.mxu0 %v504
        %524 = vmatprep.subr.bf16.mxu0 0
        %525 = vmatpush1.bf16.msra.mxu0 %v505
        %526 = vmatprep.subr.bf16.mxu0 0
        %527 = vmatpush1.bf16.msra.mxu0 %v506
        %528 = vmatprep.subr.bf16.mxu0 0
        %529 = vmatpush1.bf16.msra.mxu0 %v507
        %530 = vmatprep.subr.bf16.mxu0 0
        %531 = vmatpush1.bf16.msra.mxu0 %v508
        %532 = vmatprep.subr.bf16.mxu0 0
        %533 = vmatpush1.bf16.msra.mxu0 %v509
        %534 = vmatprep.subr.bf16.mxu0 0
        %535 = vmatpush1.bf16.msra.mxu0 0
        %536 = vmatprep.subr.bf16.mxu0 0
        %537 = vmatpush1.bf16.msra.mxu0 0
        %538 = vmatprep.subr.bf16.mxu0 0
        %539 = vmatpush1.bf16.msra.mxu0 0
        %540 = vmatprep.subr.bf16.mxu0 0
        %541 = vmatpush1.bf16.msra.mxu0 0
        %542 = vmatprep.subr.bf16.mxu0 0
        %543 = vmatpush1.bf16.msra.mxu0 0
        %544 = vmatprep.subr.bf16.mxu0 0
        %545 = vmatpush1.bf16.msra.mxu0 0
        %546 = vmatprep.subr.bf16.mxu0 0
        %547 = vmatpush1.bf16.msra.mxu0 0
        %548 = vmatprep.subr.bf16.mxu0 0
        %549 = vmatpush1.bf16.msra.mxu0 0
        %550 = vmatprep.mubr.bf16.mxu0 0
        %551 = vmatmul.mubr.bf16.gmra.mrb[0].mxu0 %v454
        %v552 = vpop.f32.mrb[0].mxu0
        %v553 = vadd.f32 0.0, %v552
        %v554 = vpop.f32.mrb[0].mxu0
        %v555 = vpop.f32.mrb[0].mxu0
        %v556 = vadd.f32 0.0, %v555
        %v557 = vpop.f32.mrb[0].mxu0
        %558 = vmatprep.mubr.bf16.mxu0 0
        %559 = vmatmul.mubr.bf16.gmra.mrb[0].mxu0 %v455
        %v560 = vpop.f32.mrb[0].mxu0
        %v561 = vadd.f32 0.0, %v560
        %v562 = vpop.f32.mrb[0].mxu0
        %v563 = vpop.f32.mrb[0].mxu0
        %v564 = vadd.f32 0.0, %v563
        %v565 = vpop.f32.mrb[0].mxu0
        %566 = vmatprep.mubr.bf16.mxu0 0
        %567 = vmatmul.mubr.bf16.gmra.mrb[0].mxu0 %v456
        %v568 = vpop.f32.mrb[0].mxu0
        %v569 = vadd.f32 0.0, %v568
        %v570 = vpop.f32.mrb[0].mxu0
        %v571 = vpop.f32.mrb[0].mxu0
        %v572 = vadd.f32 0.0, %v571
        %v573 = vpop.f32.mrb[0].mxu0
        %574 = vmatprep.mubr.bf16.mxu0 0
        %575 = vmatmul.mubr.bf16.gmra.mrb[0].mxu0 %v457
        %v576 = vpop.f32.mrb[0].mxu0
        %v577 = vadd.f32 0.0, %v576
        %v578 = vpop.f32.mrb[0].mxu0
        %v579 = vpop.f32.mrb[0].mxu0
        %v580 = vadd.f32 0.0, %v579
        %v581 = vpop.f32.mrb[0].mxu0
        %582 = vmatprep.mubr.bf16.mxu0 0
        %583 = vmatmul.mubr.bf16.gmra.mrb[0].mxu0 %v458
        %v584 = vpop.f32.mrb[0].mxu0
        %v585 = vadd.f32 0.0, %v584
        %v586 = vpop.f32.mrb[0].mxu0
        %v587 = vpop.f32.mrb[0].mxu0
        %v588 = vadd.f32 0.0, %v587
        %v589 = vpop.f32.mrb[0].mxu0
        %590 = vmatprep.mubr.bf16.mxu0 0
        %591 = vmatmul.mubr.bf16.gmra.mrb[0].mxu0 %v459
        %v592 = vpop.f32.mrb[0].mxu0
        %v593 = vadd.f32 0.0, %v592
        %v594 = vpop.f32.mrb[0].mxu0
        %v595 = vpop.f32.mrb[0].mxu0
        %v596 = vadd.f32 0.0, %v595
        %v597 = vpop.f32.mrb[0].mxu0
        %598 = vmatprep.mubr.bf16.mxu0 0
        %599 = vmatmul.mubr.bf16.gmra.mrb[0].mxu0 %v460
        %v600 = vpop.f32.mrb[0].mxu0
        %v601 = vadd.f32 0.0, %v600
        %v602 = vpop.f32.mrb[0].mxu0
        %v603 = vpop.f32.mrb[0].mxu0
        %v604 = vadd.f32 0.0, %v603
        %v605 = vpop.f32.mrb[0].mxu0
        %606 = vmatprep.mubr.bf16.mxu0 0
        %607 = vmatmul.mubr.bf16.gmra.mrb[0].mxu0 %v461
        %v608 = vpop.f32.mrb[0].mxu0
        %v609 = vadd.f32 0.0, %v608
        %v610 = vpop.f32.mrb[0].mxu0
        %v611 = vpop.f32.mrb[0].mxu0
        %v612 = vadd.f32 0.0, %v611
        %v613 = vpop.f32.mrb[0].mxu0
        %614 = vdwg.mxu0
        %v615 = vadd.f32 %v374, %v553
        %v616 = vadd.f32 %v375, %v556
        %v617 = vadd.f32 %v376, %v561
        %v618 = vadd.f32 %v377, %v564
        %v619 = vadd.f32 %v378, %v569
        %v620 = vadd.f32 %v379, %v572
        %v621 = vadd.f32 %v380, %v577
        %v622 = vadd.f32 %v381, %v580
        %v623 = vadd.f32 %v382, %v585
        %v624 = vadd.f32 %v383, %v588
        %v625 = vadd.f32 %v384, %v593
        %v626 = vadd.f32 %v385, %v596
        %v627 = vadd.f32 %v386, %v601
        %v628 = vadd.f32 %v387, %v604
        %v629 = vadd.f32 %v388, %v609
        %v630 = vadd.f32 %v389, %v612
        %631 = vst [vmem:[#allocation2] sm:$0xff] %v615
        %632 = vst [vmem:[#allocation2 + $0x8] sm:$0xff] %v616
        %633 = vst [vmem:[#allocation2 + $0x10] sm:$0xff] %v617
        %634 = vst [vmem:[#allocation2 + $0x18] sm:$0xff] %v618
        %635 = vst [vmem:[#allocation2 + $0x20] sm:$0xff] %v619
        %636 = vst [vmem:[#allocation2 + $0x28] sm:$0xff] %v620
        %637 = vst [vmem:[#allocation2 + $0x30] sm:$0xff] %v621
        %638 = vst [vmem:[#allocation2 + $0x38] sm:$0xff] %v622
        %639 = vst [vmem:[#allocation2 + $0x40] sm:$0xff] %v623
        %640 = vst [vmem:[#allocation2 + $0x48] sm:$0xff] %v624
        %641 = vst [vmem:[#allocation2 + $0x50] sm:$0xff] %v625
        %642 = vst [vmem:[#allocation2 + $0x58] sm:$0xff] %v626
        %643 = vst [vmem:[#allocation2 + $0x60] sm:$0xff] %v627
        %644 = vst [vmem:[#allocation2 + $0x68] sm:$0xff] %v628
        %645 = vst [vmem:[#allocation2 + $0x70] sm:$0xff] %v629
        %646 = vst [vmem:[#allocation2 + $0x78] sm:$0xff] %v630
        %p647 = scmp.eq.s32.totalorder %s21, 3
        // Predicated region
        $region78: #{resnet_generator_forward.19} parent=68 // pred_check
          %p648 = pneg %p647
        $region79: #{resnet_generator_forward.19} parent=68 // pred_check_branch
          %650 = sbr.rel (%p648) target = $region81
        $region80: #{resnet_generator_forward.19} parent=68 // pred_region
          %v651 = vld [vmem:[#allocation2] sm:$0xff]
          %v652 = vld [vmem:[#allocation2 + $0x8] sm:$0xff]
          %v653 = vld [vmem:[#allocation2 + $0x10] sm:$0xff]
          %v654 = vld [vmem:[#allocation2 + $0x18] sm:$0xff]
          %v655 = vld [vmem:[#allocation2 + $0x20] sm:$0xff]
          %v656 = vld [vmem:[#allocation2 + $0x28] sm:$0xff]
          %v657 = vld [vmem:[#allocation2 + $0x30] sm:$0xff]
          %v658 = vld [vmem:[#allocation2 + $0x38] sm:$0xff]
          %v659 = vld [vmem:[#allocation2 + $0x40] sm:$0xff]
          %v660 = vld [vmem:[#allocation2 + $0x48] sm:$0xff]
          %v661 = vld [vmem:[#allocation2 + $0x50] sm:$0xff]
          %v662 = vld [vmem:[#allocation2 + $0x58] sm:$0xff]
          %v663 = vld [vmem:[#allocation2 + $0x60] sm:$0xff]
          %v664 = vld [vmem:[#allocation2 + $0x68] sm:$0xff]
          %v665 = vld [vmem:[#allocation2 + $0x70] sm:$0xff]
          %v666 = vld [vmem:[#allocation2 + $0x78] sm:$0xff]
          %v667 = vld [vmem:[%s343] sm:$0x1]
          %v669 = vlaneseq
          %v670 = vshrl.u32 %v669, 7
          %v671 = vsub.s32 0, %v670
          %v672 = vrot.slane %v667, %v671
          %v674 = vadd.f32 %v651, %v672
          %v675 = vadd.f32 %v652, %v672
          %v676 = vadd.f32 %v653, %v672
          %v677 = vadd.f32 %v654, %v672
          %v678 = vadd.f32 %v655, %v672
          %v679 = vadd.f32 %v656, %v672
          %v680 = vadd.f32 %v657, %v672
          %v681 = vadd.f32 %v658, %v672
          %v682 = vadd.f32 %v659, %v672
          %v683 = vadd.f32 %v660, %v672
          %v684 = vadd.f32 %v661, %v672
          %v685 = vadd.f32 %v662, %v672
          %v686 = vadd.f32 %v663, %v672
          %v687 = vadd.f32 %v664, %v672
          %v688 = vadd.f32 %v665, %v672
          %v689 = vadd.f32 %v666, %v672
          %v690 = vtanh.pop %v674
          %v691 = vtanh.pop %v675
          %v692 = vtanh.pop %v676
          %v693 = vtanh.pop %v677
          %v694 = vtanh.pop %v678
          %v695 = vtanh.pop %v679
          %v696 = vtanh.pop %v680
          %v697 = vtanh.pop %v681
          %v698 = vtanh.pop %v682
          %v699 = vtanh.pop %v683
          %v700 = vtanh.pop %v684
          %v701 = vtanh.pop %v685
          %v702 = vtanh.pop %v686
          %v703 = vtanh.pop %v687
          %v704 = vtanh.pop %v688
          %v705 = vtanh.pop %v689
          %706 = vst [vmem:[%s351] sm:$0xff] %v690
          %707 = vst [vmem:[%s351 + $0x8] sm:$0xff] %v691
          %708 = vst [vmem:[%s351 + $0x10] sm:$0xff] %v692
          %709 = vst [vmem:[%s351 + $0x18] sm:$0xff] %v693
          %710 = vst [vmem:[%s351 + $0x20] sm:$0xff] %v694
          %711 = vst [vmem:[%s351 + $0x28] sm:$0xff] %v695
          %712 = vst [vmem:[%s351 + $0x30] sm:$0xff] %v696
          %713 = vst [vmem:[%s351 + $0x38] sm:$0xff] %v697
          %714 = vst [vmem:[%s351 + $0x40] sm:$0xff] %v698
          %715 = vst [vmem:[%s351 + $0x48] sm:$0xff] %v699
          %716 = vst [vmem:[%s351 + $0x50] sm:$0xff] %v700
          %717 = vst [vmem:[%s351 + $0x58] sm:$0xff] %v701
          %718 = vst [vmem:[%s351 + $0x60] sm:$0xff] %v702
          %719 = vst [vmem:[%s351 + $0x68] sm:$0xff] %v703
          %720 = vst [vmem:[%s351 + $0x70] sm:$0xff] %v704
          %721 = vst [vmem:[%s351 + $0x78] sm:$0xff] %v705
        $region81: #{resnet_generator_forward.19} parent=68 // pred_fallthru
          _
        %s722 = smul.u32 16, %s19
        %p723 = scmp.lt.s32.totalorder %s722, 63
        %s724 = scalar_select %p723, %s722, 63
        %p725 = scmp.lt.s32.totalorder %s20, 0
        %s726 = scalar_select %p725, %s20, 0
        %s727 = sadd.s32 %s726, %s724
        %s728 = smul.addr %s727, 8
        %s729 = scalar_lea.vmem %s3, %s728
        // Predicated region
        $region82: #{resnet_generator_forward.19} parent=68 // pred_check
          %p730 = pneg %p135
        $region83: #{resnet_generator_forward.19} parent=68 // pred_check_branch
          %732 = sbr.rel (%p730) target = $region85
        $region84: #{resnet_generator_forward.19} parent=68 // pred_region
          %s733 = smul.u32 16, %s19
        $region85: #{resnet_generator_forward.19} parent=68 // pred_fallthru
          _
      $region69: #{resnet_generator_forward.19} parent=5 // pred_fallthru
        _
      %p734 = scmp.le.s32.totalorder 2, %s9
      // Predicated region
      $region86: #{resnet_generator_forward.19} parent=5 // pred_check
        %p735 = pneg %p734
      $region87: #{resnet_generator_forward.19} parent=5 // pred_check_branch
        %737 = sbr.rel (%p735) target = $region89
      $region88: #{resnet_generator_forward.19} parent=5 // pred_region
        %s738 = ssub.s32 %s9, 2
        // Predicated region
        $region90: #{resnet_generator_forward.19} parent=88 // pred_check
          %p739 = pneg %p141
        $region91: #{resnet_generator_forward.19} parent=88 // pred_check_branch
          %741 = sbr.rel (%p739) target = $region93
        $region92: #{resnet_generator_forward.19} parent=88 // pred_region
          %s742 = smul.u32 16, %s22
          %p743 = scmp.lt.s32.totalorder %s742, 63
          %s744 = scalar_select %p743, %s742, 63
          %p745 = scmp.lt.s32.totalorder %s23, 0
          %s746 = scalar_select %p745, %s23, 0
          %s747 = sadd.s32 %s746, %s744
          %s748 = smul.addr %s747, 8
          %s749 = scalar_lea.vmem %s3, %s748
        $region93: #{resnet_generator_forward.19} parent=88 // pred_fallthru
          _
      $region89: #{resnet_generator_forward.19} parent=5 // pred_fallthru
        _
    $region6: #{resnet_generator_forward.19} parent=1 // loop_footer
      %s13 = sadd.s32 1, %s9
    $region7: #{resnet_generator_forward.19} parent=1 // loop_footer_branch
      %8 = sbr.rel target = $region3
    $region8: #{resnet_generator_forward.19} parent=1 // loop_exit
      _

</llo_original>
